<compile_context>
chip_gen: v7x
topology: tpu7x:2x2x1
jax: 0.10.0
libtpu: 0.0.40
codegen_flags: <defaults>
</compile_context>

<pallas_src>
import functools

import jax
import jax.numpy as jnp
from jax.experimental import pallas as pl
from jax.experimental.pallas import tpu as pltpu

NEG_SLOPE = 0.2   # nn.LeakyReLU(0.2)
BN_EPS = 0.8      # nn.BatchNorm1d(out_feat, 0.8): second positional arg is eps
LANE = 128

_COMPILER_PARAMS = pltpu.CompilerParams(
    dimension_semantics=("arbitrary",),
    vmem_limit_bytes=32 * 1024 * 1024,
)


def _pad_to(n, m):
    return ((n + m - 1) // m) * m


# ---------------------------------------------------------------------------
# In-kernel building blocks
# ---------------------------------------------------------------------------
def _dense(x, w_ref, b_ref):
    # bf16 MXU matmul with f32 accumulation; bias add in f32.
    y = jnp.dot(x.astype(w_ref.dtype), w_ref[...],
                preferred_element_type=jnp.float32)
    return y + b_ref[...]


def _lrelu(y):
    return jnp.where(y > 0, y, NEG_SLOPE * y)


def _batchnorm(y, g_ref, be_ref):
    # BatchNorm1d (train mode): per-feature batch stats, biased variance,
    # eps = 0.8 (faithful to nn.BatchNorm1d(out_feat, 0.8) - the 0.8 is eps).
    # No running-stats path, so eval-mode BN is not reproduced. Keep f32.
    mean = jnp.mean(y, axis=0, keepdims=True)
    var = jnp.mean(jnp.square(y - mean), axis=0, keepdims=True)
    return (y - mean) * jax.lax.rsqrt(var + BN_EPS) * g_ref[...] + be_ref[...]


# ---------------------------------------------------------------------------
# Fused whole-network kernels (single pallas_call each)
# ---------------------------------------------------------------------------
def _generator_kernel(z_ref,
                      w1_ref, b1_ref,
                      w2_ref, b2_ref, g2_ref, be2_ref,
                      w3_ref, b3_ref, g3_ref, be3_ref,
                      w4_ref, b4_ref, g4_ref, be4_ref,
                      w5_ref, b5_ref,
                      o_ref):
    x = _lrelu(_dense(z_ref[...], w1_ref, b1_ref))
    x = _lrelu(_batchnorm(_dense(x, w2_ref, b2_ref), g2_ref, be2_ref))
    x = _lrelu(_batchnorm(_dense(x, w3_ref, b3_ref), g3_ref, be3_ref))
    x = _lrelu(_batchnorm(_dense(x, w4_ref, b4_ref), g4_ref, be4_ref))
    x = jnp.tanh(_dense(x, w5_ref, b5_ref))
    o_ref[...] = x.astype(o_ref.dtype)


def _discriminator_kernel(x_ref,
                          w1_ref, b1_ref,
                          w2_ref, b2_ref,
                          w3_ref, b3_ref,
                          o_ref, *, sigmoid_use):
    x = _lrelu(_dense(x_ref[...], w1_ref, b1_ref))
    x = _lrelu(_dense(x, w2_ref, b2_ref))
    y = _dense(x, w3_ref, b3_ref)   # (B, 128) lane-padded head; col 0 is the score
    if sigmoid_use:
        y = jax.nn.sigmoid(y)
    o_ref[...] = y.astype(o_ref.dtype)


def _fused_call(kernel, args, out_shape):
    """Single-block fused call: every operand is one full-array VMEM block."""
    in_specs = [pl.BlockSpec(a.shape, lambda i: (0, 0)) for a in args]
    return pl.pallas_call(
        kernel,
        out_shape=jax.ShapeDtypeStruct(out_shape, jnp.float32),
        grid=(1,),
        in_specs=in_specs,
        out_specs=pl.BlockSpec(out_shape, lambda i: (0, 0)),
        compiler_params=_COMPILER_PARAMS,
    )(*args)


# ---------------------------------------------------------------------------
# Parameter construction (matches weights_init: Linear W,b ~ N(0, 0.02),
# BatchNorm weight ~ N(1, 0.02), bias = 0). Weights cast to bf16 for the MXU.
# ---------------------------------------------------------------------------
def _make_params(key, latent_length, image_size):
    img_flat = int(image_size[0] * image_size[1] * image_size[2])
    lat_pad = _pad_to(latent_length, LANE)

    def lin(key, fan_in, fan_out, pad_in=None, pad_out=None):
        kw, kb = jax.random.split(key)
        w = 0.02 * jax.random.normal(kw, (fan_in, fan_out), jnp.float32)
        b = 0.02 * jax.random.normal(kb, (fan_out,), jnp.float32)
        if pad_in is not None and pad_in > fan_in:
            w = jnp.zeros((pad_in, fan_out), jnp.float32).at[:fan_in].set(w)
        if pad_out is not None and pad_out > fan_out:
            w = jnp.zeros((w.shape[0], pad_out), jnp.float32).at[:, :fan_out].set(w)
            b = jnp.zeros((pad_out,), jnp.float32).at[:fan_out].set(b)
        # bf16 weights (halves HBM bytes); bias stays f32 and is added post-acc.
        return w.astype(jnp.bfloat16), b.reshape(1, -1)

    def bn(key, feat):
        g = 1.0 + 0.02 * jax.random.normal(key, (feat,), jnp.float32)
        beta = jnp.zeros((feat,), jnp.float32)
        return g.reshape(1, -1), beta.reshape(1, -1)

    keys = jax.random.split(key, 16)
    return {
        "lat_pad": lat_pad,
        # Generator
        "g1": lin(keys[0], latent_length, 128, pad_in=lat_pad),
        "g2": lin(keys[1], 128, 256), "g2_bn": bn(keys[2], 256),
        "g3": lin(keys[3], 256, 512), "g3_bn": bn(keys[4], 512),
        "g4": lin(keys[5], 512, 1024), "g4_bn": bn(keys[6], 1024),
        "g5": lin(keys[7], 1024, img_flat),
        # Discriminator (head padded 1 -> 128 output lanes for lane-dense stores)
        "d1": lin(keys[8], img_flat, 512),
        "d2": lin(keys[9], 512, 256),
        "d3": lin(keys[10], 256, 1, pad_out=LANE),
    }


# ---------------------------------------------------------------------------
# Forward passes (mirror originalGAN.forward)
# ---------------------------------------------------------------------------
def generator_forward(params, latent, image_size):
    B, L = latent.shape
    lat_pad = params["lat_pad"]
    z = jnp.zeros((B, lat_pad), jnp.float32).at[:, :L].set(latent)
    args = (z,
            *params["g1"],
            *params["g2"], *params["g2_bn"],
            *params["g3"], *params["g3_bn"],
            *params["g4"], *params["g4_bn"],
            *params["g5"])
    img_flat = params["g5"][0].shape[1]
    out = _fused_call(_generator_kernel, args, (B, img_flat))
    return out.reshape((B,) + tuple(image_size))  # (B, C, H, W)


def discriminator_forward(params, image, sigmoid_use=True):
    B = image.shape[0]
    x = image.reshape(B, -1).astype(jnp.float32)  # image.view(B, -1)
    args = (x, *params["d1"], *params["d2"], *params["d3"])
    kernel = functools.partial(_discriminator_kernel, sigmoid_use=sigmoid_use)
    out = _fused_call(kernel, args, (B, LANE))
    return out[:, :1]  # only lane 0 carries the real (256 -> 1) head output


def original_gan_forward(params, feed, mode, *, latent_length, image_size,
                         sigmoid_use=True, rng_key=None):
    if mode == "generate":
        # feed is the number of samples (batch size), distribution='normal'.
        # TODO(synk): original code draws the latent from host np.random; we use
        # jax.random.normal for a deterministic in-script equivalent.
        latent = jax.random.normal(rng_key, (feed, latent_length), jnp.float32)
        return generator_forward(params, latent, image_size)
    elif mode == "discriminate":
        return discriminator_forward(params, feed, sigmoid_use)
    else:
        raise ValueError("Please check the model mode, [generate or discriminate].")


# ---------------------------------------------------------------------------
if __name__ == "__main__":
    latent_length = 100
    image_size = (3, 16, 16)   # small stand-in for (3, 64, 64)
    batch = 8

    root = jax.random.PRNGKey(0)
    kp, kz, kx = jax.random.split(root, 3)
    params = _make_params(kp, latent_length, image_size)

    # mode='generate'
    gen_images = original_gan_forward(
        params, batch, "generate",
        latent_length=latent_length, image_size=image_size, rng_key=kz)
    gen_images = jax.block_until_ready(gen_images)
    assert gen_images.shape == (batch,) + image_size
    assert gen_images.dtype == jnp.float32
    assert bool(jnp.all(jnp.isfinite(gen_images)))
    assert bool(jnp.all((gen_images >= -1.0) & (gen_images <= 1.0)))  # tanh range

    # mode='discriminate'
    fake_input = jax.random.normal(kx, (batch,) + image_size, jnp.float32)
    scores = original_gan_forward(
        params, fake_input, "discriminate",
        latent_length=latent_length, image_size=image_size, sigmoid_use=True)
    scores = jax.block_until_ready(scores)
    assert scores.shape == (batch, 1)
    assert bool(jnp.all((scores >= 0.0) & (scores <= 1.0)))

    # sigmoid_use=False path (raw logits)
    logits = original_gan_forward(
        params, fake_input, "discriminate",
        latent_length=latent_length, image_size=image_size, sigmoid_use=False)
    logits = jax.block_until_ready(logits)
    assert logits.shape == (batch, 1)

    print("KERNEL_OK")
</pallas_src>

<mosaic_0001>
module attributes {stable_mosaic.version = 11 : i64} {
  func.func @_generator_kernel(%arg0: i32, %arg1: memref<8x128xf32, #tpu.memory_space<vmem>>, %arg2: memref<128x128xbf16, #tpu.memory_space<vmem>>, %arg3: memref<1x128xf32, #tpu.memory_space<vmem>>, %arg4: memref<128x256xbf16, #tpu.memory_space<vmem>>, %arg5: memref<1x256xf32, #tpu.memory_space<vmem>>, %arg6: memref<1x256xf32, #tpu.memory_space<vmem>>, %arg7: memref<1x256xf32, #tpu.memory_space<vmem>>, %arg8: memref<256x512xbf16, #tpu.memory_space<vmem>>, %arg9: memref<1x512xf32, #tpu.memory_space<vmem>>, %arg10: memref<1x512xf32, #tpu.memory_space<vmem>>, %arg11: memref<1x512xf32, #tpu.memory_space<vmem>>, %arg12: memref<512x1024xbf16, #tpu.memory_space<vmem>>, %arg13: memref<1x1024xf32, #tpu.memory_space<vmem>>, %arg14: memref<1x1024xf32, #tpu.memory_space<vmem>>, %arg15: memref<1x1024xf32, #tpu.memory_space<vmem>>, %arg16: memref<1024x768xbf16, #tpu.memory_space<vmem>>, %arg17: memref<1x768xf32, #tpu.memory_space<vmem>>, %arg18: memref<8x768xf32, #tpu.memory_space<vmem>>) attributes {dimension_semantics = [#tpu.dimension_semantics<arbitrary>], iteration_bounds = array<i64: 1>, scalar_prefetch = 0 : i64, scratch_operands = 0 : i64, tpu.core_type = #tpu.core_type<tc>, window_params = [{pipeline_mode = #tpu.pipeline_mode<synchronous>, transform_indices = @transform_0, window_bounds = array<i64: 8, 128>}, {pipeline_mode = #tpu.pipeline_mode<synchronous>, transform_indices = @transform_1, window_bounds = array<i64: 128, 128>}, {pipeline_mode = #tpu.pipeline_mode<synchronous>, transform_indices = @transform_2, window_bounds = array<i64: 1, 128>}, {pipeline_mode = #tpu.pipeline_mode<synchronous>, transform_indices = @transform_3, window_bounds = array<i64: 128, 256>}, {pipeline_mode = #tpu.pipeline_mode<synchronous>, transform_indices = @transform_4, window_bounds = array<i64: 1, 256>}, {pipeline_mode = #tpu.pipeline_mode<synchronous>, transform_indices = @transform_5, window_bounds = array<i64: 1, 256>}, {pipeline_mode = #tpu.pipeline_mode<synchronous>, transform_indices = @transform_6, window_bounds = array<i64: 1, 256>}, {pipeline_mode = #tpu.pipeline_mode<synchronous>, transform_indices = @transform_7, window_bounds = array<i64: 256, 512>}, {pipeline_mode = #tpu.pipeline_mode<synchronous>, transform_indices = @transform_8, window_bounds = array<i64: 1, 512>}, {pipeline_mode = #tpu.pipeline_mode<synchronous>, transform_indices = @transform_9, window_bounds = array<i64: 1, 512>}, {pipeline_mode = #tpu.pipeline_mode<synchronous>, transform_indices = @transform_10, window_bounds = array<i64: 1, 512>}, {pipeline_mode = #tpu.pipeline_mode<synchronous>, transform_indices = @transform_11, window_bounds = array<i64: 512, 1024>}, {pipeline_mode = #tpu.pipeline_mode<synchronous>, transform_indices = @transform_12, window_bounds = array<i64: 1, 1024>}, {pipeline_mode = #tpu.pipeline_mode<synchronous>, transform_indices = @transform_13, window_bounds = array<i64: 1, 1024>}, {pipeline_mode = #tpu.pipeline_mode<synchronous>, transform_indices = @transform_14, window_bounds = array<i64: 1, 1024>}, {pipeline_mode = #tpu.pipeline_mode<synchronous>, transform_indices = @transform_15, window_bounds = array<i64: 1024, 768>}, {pipeline_mode = #tpu.pipeline_mode<synchronous>, transform_indices = @transform_16, window_bounds = array<i64: 1, 768>}, {pipeline_mode = #tpu.pipeline_mode<synchronous>, transform_indices = @transform_17, window_bounds = array<i64: 8, 768>}]} {
    %c0 = arith.constant 0 : index
    %c0_0 = arith.constant 0 : index
    %0 = vector.load %arg1[%c0, %c0_0] : memref<8x128xf32, #tpu.memory_space<vmem>>, vector<8x128xf32>
    %1 = arith.truncf %0 : vector<8x128xf32> to vector<8x128xbf16>
    %c0_1 = arith.constant 0 : index
    %c0_2 = arith.constant 0 : index
    %2 = vector.load %arg2[%c0_1, %c0_2] : memref<128x128xbf16, #tpu.memory_space<vmem>>, vector<128x128xbf16>
    %cst = arith.constant dense<0.000000e+00> : vector<8x128xf32>
    %3 = tpu.matmul %1, %2, %cst {dimension_numbers = #tpu.dot_dimension_numbers<[1], [0], [0], [1], [0, 0, 1, 1], [], []>} : vector<8x128xbf16>, vector<128x128xbf16>, vector<8x128xf32> -> vector<8x128xf32>
    %c0_3 = arith.constant 0 : index
    %c0_4 = arith.constant 0 : index
    %4 = vector.load %arg3[%c0_3, %c0_4] : memref<1x128xf32, #tpu.memory_space<vmem>>, vector<1x128xf32>
    %5 = vector.broadcast %4 : vector<1x128xf32> to vector<8x128xf32>
    %6 = arith.addf %3, %5 : vector<8x128xf32>
    %cst_5 = arith.constant 0.000000e+00 : f32
    %7 = vector.broadcast %cst_5 : f32 to vector<8x128xf32>
    %8 = arith.cmpf ogt, %6, %7 : vector<8x128xf32>
    %cst_6 = arith.constant 2.000000e-01 : f32
    %9 = vector.broadcast %cst_6 : f32 to vector<8x128xf32>
    %10 = arith.mulf %9, %6 : vector<8x128xf32>
    %11 = arith.select %8, %6, %10 : vector<8x128xi1>, vector<8x128xf32>
    %12 = arith.truncf %11 : vector<8x128xf32> to vector<8x128xbf16>
    %c0_7 = arith.constant 0 : index
    %c0_8 = arith.constant 0 : index
    %13 = vector.load %arg4[%c0_7, %c0_8] : memref<128x256xbf16, #tpu.memory_space<vmem>>, vector<128x256xbf16>
    %cst_9 = arith.constant dense<0.000000e+00> : vector<8x256xf32>
    %14 = tpu.matmul %12, %13, %cst_9 {dimension_numbers = #tpu.dot_dimension_numbers<[1], [0], [0], [1], [0, 0, 1, 1], [], []>} : vector<8x128xbf16>, vector<128x256xbf16>, vector<8x256xf32> -> vector<8x256xf32>
    %c0_10 = arith.constant 0 : index
    %c0_11 = arith.constant 0 : index
    %15 = vector.load %arg5[%c0_10, %c0_11] : memref<1x256xf32, #tpu.memory_space<vmem>>, vector<1x256xf32>
    %16 = vector.broadcast %15 : vector<1x256xf32> to vector<8x256xf32>
    %17 = arith.addf %14, %16 : vector<8x256xf32>
    %cst_12 = arith.constant dense<0.000000e+00> : vector<256xf32>
    %18 = vector.multi_reduction <add>, %17, %cst_12 [0] : vector<8x256xf32> to vector<256xf32>
    %19 = vector.shape_cast %18 : vector<256xf32> to vector<1x256xf32>
    %cst_13 = arith.constant 8.000000e+00 : f32
    %20 = vector.broadcast %cst_13 : f32 to vector<1x256xf32>
    %21 = arith.divf %19, %20 : vector<1x256xf32>
    %22 = vector.broadcast %21 : vector<1x256xf32> to vector<8x256xf32>
    %23 = arith.subf %17, %22 : vector<8x256xf32>
    %24 = arith.mulf %23, %23 : vector<8x256xf32>
    %cst_14 = arith.constant dense<0.000000e+00> : vector<256xf32>
    %25 = vector.multi_reduction <add>, %24, %cst_14 [0] : vector<8x256xf32> to vector<256xf32>
    %26 = vector.shape_cast %25 : vector<256xf32> to vector<1x256xf32>
    %cst_15 = arith.constant 8.000000e+00 : f32
    %27 = vector.broadcast %cst_15 : f32 to vector<1x256xf32>
    %28 = arith.divf %26, %27 : vector<1x256xf32>
    %29 = vector.broadcast %21 : vector<1x256xf32> to vector<8x256xf32>
    %30 = arith.subf %17, %29 : vector<8x256xf32>
    %cst_16 = arith.constant 8.000000e-01 : f32
    %31 = vector.broadcast %cst_16 : f32 to vector<1x256xf32>
    %32 = arith.addf %28, %31 : vector<1x256xf32>
    %33 = math.rsqrt %32 : vector<1x256xf32>
    %34 = vector.broadcast %33 : vector<1x256xf32> to vector<8x256xf32>
    %35 = arith.mulf %30, %34 : vector<8x256xf32>
    %c0_17 = arith.constant 0 : index
    %c0_18 = arith.constant 0 : index
    %36 = vector.load %arg6[%c0_17, %c0_18] : memref<1x256xf32, #tpu.memory_space<vmem>>, vector<1x256xf32>
    %37 = vector.broadcast %36 : vector<1x256xf32> to vector<8x256xf32>
    %38 = arith.mulf %35, %37 : vector<8x256xf32>
    %c0_19 = arith.constant 0 : index
    %c0_20 = arith.constant 0 : index
    %39 = vector.load %arg7[%c0_19, %c0_20] : memref<1x256xf32, #tpu.memory_space<vmem>>, vector<1x256xf32>
    %40 = vector.broadcast %39 : vector<1x256xf32> to vector<8x256xf32>
    %41 = arith.addf %38, %40 : vector<8x256xf32>
    %cst_21 = arith.constant 0.000000e+00 : f32
    %42 = vector.broadcast %cst_21 : f32 to vector<8x256xf32>
    %43 = arith.cmpf ogt, %41, %42 : vector<8x256xf32>
    %cst_22 = arith.constant 2.000000e-01 : f32
    %44 = vector.broadcast %cst_22 : f32 to vector<8x256xf32>
    %45 = arith.mulf %44, %41 : vector<8x256xf32>
    %46 = arith.select %43, %41, %45 : vector<8x256xi1>, vector<8x256xf32>
    %47 = arith.truncf %46 : vector<8x256xf32> to vector<8x256xbf16>
    %c0_23 = arith.constant 0 : index
    %c0_24 = arith.constant 0 : index
    %48 = vector.load %arg8[%c0_23, %c0_24] : memref<256x512xbf16, #tpu.memory_space<vmem>>, vector<256x512xbf16>
    %cst_25 = arith.constant dense<0.000000e+00> : vector<8x512xf32>
    %49 = tpu.matmul %47, %48, %cst_25 {dimension_numbers = #tpu.dot_dimension_numbers<[1], [0], [0], [1], [0, 0, 1, 1], [], []>} : vector<8x256xbf16>, vector<256x512xbf16>, vector<8x512xf32> -> vector<8x512xf32>
    %c0_26 = arith.constant 0 : index
    %c0_27 = arith.constant 0 : index
    %50 = vector.load %arg9[%c0_26, %c0_27] : memref<1x512xf32, #tpu.memory_space<vmem>>, vector<1x512xf32>
    %51 = vector.broadcast %50 : vector<1x512xf32> to vector<8x512xf32>
    %52 = arith.addf %49, %51 : vector<8x512xf32>
    %cst_28 = arith.constant dense<0.000000e+00> : vector<512xf32>
    %53 = vector.multi_reduction <add>, %52, %cst_28 [0] : vector<8x512xf32> to vector<512xf32>
    %54 = vector.shape_cast %53 : vector<512xf32> to vector<1x512xf32>
    %cst_29 = arith.constant 8.000000e+00 : f32
    %55 = vector.broadcast %cst_29 : f32 to vector<1x512xf32>
    %56 = arith.divf %54, %55 : vector<1x512xf32>
    %57 = vector.broadcast %56 : vector<1x512xf32> to vector<8x512xf32>
    %58 = arith.subf %52, %57 : vector<8x512xf32>
    %59 = arith.mulf %58, %58 : vector<8x512xf32>
    %cst_30 = arith.constant dense<0.000000e+00> : vector<512xf32>
    %60 = vector.multi_reduction <add>, %59, %cst_30 [0] : vector<8x512xf32> to vector<512xf32>
    %61 = vector.shape_cast %60 : vector<512xf32> to vector<1x512xf32>
    %cst_31 = arith.constant 8.000000e+00 : f32
    %62 = vector.broadcast %cst_31 : f32 to vector<1x512xf32>
    %63 = arith.divf %61, %62 : vector<1x512xf32>
    %64 = vector.broadcast %56 : vector<1x512xf32> to vector<8x512xf32>
    %65 = arith.subf %52, %64 : vector<8x512xf32>
    %cst_32 = arith.constant 8.000000e-01 : f32
    %66 = vector.broadcast %cst_32 : f32 to vector<1x512xf32>
    %67 = arith.addf %63, %66 : vector<1x512xf32>
    %68 = math.rsqrt %67 : vector<1x512xf32>
    %69 = vector.broadcast %68 : vector<1x512xf32> to vector<8x512xf32>
    %70 = arith.mulf %65, %69 : vector<8x512xf32>
    %c0_33 = arith.constant 0 : index
    %c0_34 = arith.constant 0 : index
    %71 = vector.load %arg10[%c0_33, %c0_34] : memref<1x512xf32, #tpu.memory_space<vmem>>, vector<1x512xf32>
    %72 = vector.broadcast %71 : vector<1x512xf32> to vector<8x512xf32>
    %73 = arith.mulf %70, %72 : vector<8x512xf32>
    %c0_35 = arith.constant 0 : index
    %c0_36 = arith.constant 0 : index
    %74 = vector.load %arg11[%c0_35, %c0_36] : memref<1x512xf32, #tpu.memory_space<vmem>>, vector<1x512xf32>
    %75 = vector.broadcast %74 : vector<1x512xf32> to vector<8x512xf32>
    %76 = arith.addf %73, %75 : vector<8x512xf32>
    %cst_37 = arith.constant 0.000000e+00 : f32
    %77 = vector.broadcast %cst_37 : f32 to vector<8x512xf32>
    %78 = arith.cmpf ogt, %76, %77 : vector<8x512xf32>
    %cst_38 = arith.constant 2.000000e-01 : f32
    %79 = vector.broadcast %cst_38 : f32 to vector<8x512xf32>
    %80 = arith.mulf %79, %76 : vector<8x512xf32>
    %81 = arith.select %78, %76, %80 : vector<8x512xi1>, vector<8x512xf32>
    %82 = arith.truncf %81 : vector<8x512xf32> to vector<8x512xbf16>
    %c0_39 = arith.constant 0 : index
    %c0_40 = arith.constant 0 : index
    %83 = vector.load %arg12[%c0_39, %c0_40] : memref<512x1024xbf16, #tpu.memory_space<vmem>>, vector<512x1024xbf16>
    %cst_41 = arith.constant dense<0.000000e+00> : vector<8x1024xf32>
    %84 = tpu.matmul %82, %83, %cst_41 {dimension_numbers = #tpu.dot_dimension_numbers<[1], [0], [0], [1], [0, 0, 1, 1], [], []>} : vector<8x512xbf16>, vector<512x1024xbf16>, vector<8x1024xf32> -> vector<8x1024xf32>
    %c0_42 = arith.constant 0 : index
    %c0_43 = arith.constant 0 : index
    %85 = vector.load %arg13[%c0_42, %c0_43] : memref<1x1024xf32, #tpu.memory_space<vmem>>, vector<1x1024xf32>
    %86 = vector.broadcast %85 : vector<1x1024xf32> to vector<8x1024xf32>
    %87 = arith.addf %84, %86 : vector<8x1024xf32>
    %cst_44 = arith.constant dense<0.000000e+00> : vector<1024xf32>
    %88 = vector.multi_reduction <add>, %87, %cst_44 [0] : vector<8x1024xf32> to vector<1024xf32>
    %89 = vector.shape_cast %88 : vector<1024xf32> to vector<1x1024xf32>
    %cst_45 = arith.constant 8.000000e+00 : f32
    %90 = vector.broadcast %cst_45 : f32 to vector<1x1024xf32>
    %91 = arith.divf %89, %90 : vector<1x1024xf32>
    %92 = vector.broadcast %91 : vector<1x1024xf32> to vector<8x1024xf32>
    %93 = arith.subf %87, %92 : vector<8x1024xf32>
    %94 = arith.mulf %93, %93 : vector<8x1024xf32>
    %cst_46 = arith.constant dense<0.000000e+00> : vector<1024xf32>
    %95 = vector.multi_reduction <add>, %94, %cst_46 [0] : vector<8x1024xf32> to vector<1024xf32>
    %96 = vector.shape_cast %95 : vector<1024xf32> to vector<1x1024xf32>
    %cst_47 = arith.constant 8.000000e+00 : f32
    %97 = vector.broadcast %cst_47 : f32 to vector<1x1024xf32>
    %98 = arith.divf %96, %97 : vector<1x1024xf32>
    %99 = vector.broadcast %91 : vector<1x1024xf32> to vector<8x1024xf32>
    %100 = arith.subf %87, %99 : vector<8x1024xf32>
    %cst_48 = arith.constant 8.000000e-01 : f32
    %101 = vector.broadcast %cst_48 : f32 to vector<1x1024xf32>
    %102 = arith.addf %98, %101 : vector<1x1024xf32>
    %103 = math.rsqrt %102 : vector<1x1024xf32>
    %104 = vector.broadcast %103 : vector<1x1024xf32> to vector<8x1024xf32>
    %105 = arith.mulf %100, %104 : vector<8x1024xf32>
    %c0_49 = arith.constant 0 : index
    %c0_50 = arith.constant 0 : index
    %106 = vector.load %arg14[%c0_49, %c0_50] : memref<1x1024xf32, #tpu.memory_space<vmem>>, vector<1x1024xf32>
    %107 = vector.broadcast %106 : vector<1x1024xf32> to vector<8x1024xf32>
    %108 = arith.mulf %105, %107 : vector<8x1024xf32>
    %c0_51 = arith.constant 0 : index
    %c0_52 = arith.constant 0 : index
    %109 = vector.load %arg15[%c0_51, %c0_52] : memref<1x1024xf32, #tpu.memory_space<vmem>>, vector<1x1024xf32>
    %110 = vector.broadcast %109 : vector<1x1024xf32> to vector<8x1024xf32>
    %111 = arith.addf %108, %110 : vector<8x1024xf32>
    %cst_53 = arith.constant 0.000000e+00 : f32
    %112 = vector.broadcast %cst_53 : f32 to vector<8x1024xf32>
    %113 = arith.cmpf ogt, %111, %112 : vector<8x1024xf32>
    %cst_54 = arith.constant 2.000000e-01 : f32
    %114 = vector.broadcast %cst_54 : f32 to vector<8x1024xf32>
    %115 = arith.mulf %114, %111 : vector<8x1024xf32>
    %116 = arith.select %113, %111, %115 : vector<8x1024xi1>, vector<8x1024xf32>
    %117 = arith.truncf %116 : vector<8x1024xf32> to vector<8x1024xbf16>
    %c0_55 = arith.constant 0 : index
    %c0_56 = arith.constant 0 : index
    %118 = vector.load %arg16[%c0_55, %c0_56] : memref<1024x768xbf16, #tpu.memory_space<vmem>>, vector<1024x768xbf16>
    %cst_57 = arith.constant dense<0.000000e+00> : vector<8x768xf32>
    %119 = tpu.matmul %117, %118, %cst_57 {dimension_numbers = #tpu.dot_dimension_numbers<[1], [0], [0], [1], [0, 0, 1, 1], [], []>} : vector<8x1024xbf16>, vector<1024x768xbf16>, vector<8x768xf32> -> vector<8x768xf32>
    %c0_58 = arith.constant 0 : index
    %c0_59 = arith.constant 0 : index
    %120 = vector.load %arg17[%c0_58, %c0_59] : memref<1x768xf32, #tpu.memory_space<vmem>>, vector<1x768xf32>
    %121 = vector.broadcast %120 : vector<1x768xf32> to vector<8x768xf32>
    %122 = arith.addf %119, %121 : vector<8x768xf32>
    %123 = math.tanh %122 : vector<8x768xf32>
    %c0_60 = arith.constant 0 : index
    %c0_61 = arith.constant 0 : index
    %124 = vector.load %arg18[%c0_60, %c0_61] : memref<8x768xf32, #tpu.memory_space<vmem>>, vector<8x768xf32>
    tpu.vector_store %arg18[%c0_60, %c0_61], %123 {strides = array<i32>} : memref<8x768xf32, #tpu.memory_space<vmem>>, vector<8x768xf32>,
    return
  }
  func.func @transform_0(%arg0: i32) -> (i32, i32) {
    %c0_i32 = arith.constant 0 : i32
    %c0_i32_0 = arith.constant 0 : i32
    %c0_i32_1 = arith.constant 0 : i32
    return %c0_i32, %c0_i32_0 : i32, i32
  }
  func.func @transform_1(%arg0: i32) -> (i32, i32) {
    %c0_i32 = arith.constant 0 : i32
    %c0_i32_0 = arith.constant 0 : i32
    %c0_i32_1 = arith.constant 0 : i32
    return %c0_i32, %c0_i32_0 : i32, i32
  }
  func.func @transform_2(%arg0: i32) -> (i32, i32) {
    %c0_i32 = arith.constant 0 : i32
    %c0_i32_0 = arith.constant 0 : i32
    %c0_i32_1 = arith.constant 0 : i32
    return %c0_i32, %c0_i32_0 : i32, i32
  }
  func.func @transform_3(%arg0: i32) -> (i32, i32) {
    %c0_i32 = arith.constant 0 : i32
    %c0_i32_0 = arith.constant 0 : i32
    %c0_i32_1 = arith.constant 0 : i32
    return %c0_i32, %c0_i32_0 : i32, i32
  }
  func.func @transform_4(%arg0: i32) -> (i32, i32) {
    %c0_i32 = arith.constant 0 : i32
    %c0_i32_0 = arith.constant 0 : i32
    %c0_i32_1 = arith.constant 0 : i32
    return %c0_i32, %c0_i32_0 : i32, i32
  }
  func.func @transform_5(%arg0: i32) -> (i32, i32) {
    %c0_i32 = arith.constant 0 : i32
    %c0_i32_0 = arith.constant 0 : i32
    %c0_i32_1 = arith.constant 0 : i32
    return %c0_i32, %c0_i32_0 : i32, i32
  }
  func.func @transform_6(%arg0: i32) -> (i32, i32) {
    %c0_i32 = arith.constant 0 : i32
    %c0_i32_0 = arith.constant 0 : i32
    %c0_i32_1 = arith.constant 0 : i32
    return %c0_i32, %c0_i32_0 : i32, i32
  }
  func.func @transform_7(%arg0: i32) -> (i32, i32) {
    %c0_i32 = arith.constant 0 : i32
    %c0_i32_0 = arith.constant 0 : i32
    %c0_i32_1 = arith.constant 0 : i32
    return %c0_i32, %c0_i32_0 : i32, i32
  }
  func.func @transform_8(%arg0: i32) -> (i32, i32) {
    %c0_i32 = arith.constant 0 : i32
    %c0_i32_0 = arith.constant 0 : i32
    %c0_i32_1 = arith.constant 0 : i32
    return %c0_i32, %c0_i32_0 : i32, i32
  }
  func.func @transform_9(%arg0: i32) -> (i32, i32) {
    %c0_i32 = arith.constant 0 : i32
    %c0_i32_0 = arith.constant 0 : i32
    %c0_i32_1 = arith.constant 0 : i32
    return %c0_i32, %c0_i32_0 : i32, i32
  }
  func.func @transform_10(%arg0: i32) -> (i32, i32) {
    %c0_i32 = arith.constant 0 : i32
    %c0_i32_0 = arith.constant 0 : i32
    %c0_i32_1 = arith.constant 0 : i32
    return %c0_i32, %c0_i32_0 : i32, i32
  }
  func.func @transform_11(%arg0: i32) -> (i32, i32) {
    %c0_i32 = arith.constant 0 : i32
    %c0_i32_0 = arith.constant 0 : i32
    %c0_i32_1 = arith.constant 0 : i32
    return %c0_i32, %c0_i32_0 : i32, i32
  }
  func.func @transform_12(%arg0: i32) -> (i32, i32) {
    %c0_i32 = arith.constant 0 : i32
    %c0_i32_0 = arith.constant 0 : i32
    %c0_i32_1 = arith.constant 0 : i32
    return %c0_i32, %c0_i32_0 : i32, i32
  }
  func.func @transform_13(%arg0: i32) -> (i32, i32) {
    %c0_i32 = arith.constant 0 : i32
    %c0_i32_0 = arith.constant 0 : i32
    %c0_i32_1 = arith.constant 0 : i32
    return %c0_i32, %c0_i32_0 : i32, i32
  }
  func.func @transform_14(%arg0: i32) -> (i32, i32) {
    %c0_i32 = arith.constant 0 : i32
    %c0_i32_0 = arith.constant 0 : i32
    %c0_i32_1 = arith.constant 0 : i32
    return %c0_i32, %c0_i32_0 : i32, i32
  }
  func.func @transform_15(%arg0: i32) -> (i32, i32) {
    %c0_i32 = arith.constant 0 : i32
    %c0_i32_0 = arith.constant 0 : i32
    %c0_i32_1 = arith.constant 0 : i32
    return %c0_i32, %c0_i32_0 : i32, i32
  }
  func.func @transform_16(%arg0: i32) -> (i32, i32) {
    %c0_i32 = arith.constant 0 : i32
    %c0_i32_0 = arith.constant 0 : i32
    %c0_i32_1 = arith.constant 0 : i32
    return %c0_i32, %c0_i32_0 : i32, i32
  }
  func.func @transform_17(%arg0: i32) -> (i32, i32) {
    %c0_i32 = arith.constant 0 : i32
    %c0_i32_0 = arith.constant 0 : i32
    %c0_i32_1 = arith.constant 0 : i32
    return %c0_i32, %c0_i32_0 : i32, i32
  }
}

</mosaic_0001>

<llo_original>
// kernel: tpu_custom_call.1
$region0: #{tpu_custom_call.1}
  #allocation0 [shape = 'u32[]', space=smem, size = 0x4, offset = 0x4, fixed_abs, tag = 'smem constant byte address 0x4 - core index']
  #allocation1 [shape = 'u32[144,128]{1,0:T(1,128)}', space=vmem, size = 0x12000, scoped, tag = 'internal scratch']
  %s0 = inlined_call_operand.hbm [shape: f32[8,128], index: 0, kind: input, shape index: {}]
  %s1 = inlined_call_operand.hbm [shape: bf16[128,128], index: 1, kind: input, shape index: {}]
  %s2 = inlined_call_operand.hbm [shape: f32[1,128], index: 2, kind: input, shape index: {}]
  %s3 = inlined_call_operand.hbm [shape: bf16[128,256], index: 3, kind: input, shape index: {}]
  %s4 = inlined_call_operand.hbm [shape: f32[1,256], index: 4, kind: input, shape index: {}]
  %s5 = inlined_call_operand.hbm [shape: f32[1,256], index: 5, kind: input, shape index: {}]
  %s6 = inlined_call_operand.hbm [shape: f32[1,256], index: 6, kind: input, shape index: {}]
  %s7 = inlined_call_operand.hbm [shape: bf16[256,512], index: 7, kind: input, shape index: {}]
  %s8 = inlined_call_operand.hbm [shape: f32[1,512], index: 8, kind: input, shape index: {}]
  %s9 = inlined_call_operand.hbm [shape: f32[1,512], index: 9, kind: input, shape index: {}]
  %s10 = inlined_call_operand.hbm [shape: f32[1,512], index: 10, kind: input, shape index: {}]
  %s11 = inlined_call_operand.hbm [shape: bf16[512,1024], index: 11, kind: input, shape index: {}]
  %s12 = inlined_call_operand.hbm [shape: f32[1,1024], index: 12, kind: input, shape index: {}]
  %s13 = inlined_call_operand.hbm [shape: f32[1,1024], index: 13, kind: input, shape index: {}]
  %s14 = inlined_call_operand.hbm [shape: f32[1,1024], index: 14, kind: input, shape index: {}]
  %s15 = inlined_call_operand.hbm [shape: bf16[1024,768], index: 15, kind: input, shape index: {}]
  %s16 = inlined_call_operand.hbm [shape: f32[1,768], index: 16, kind: input, shape index: {}]
  %s17 = inlined_call_operand.hbm [shape: f32[8,768], index: 17, kind: output, shape index: {}]
  %s18 = sld [smem:[#allocation0]]
  $region146: #{tpu_custom_call.1} parent=0
    _
  %s20 = ssub.s32 1, %s18
  %s21 = scalar_select 0, %s20, %s18
  $region1: #{tpu_custom_call.1} parent=0
    #allocation2 [shape = 'u8[4096]{0}', space=vmem, size = 0x1000, scoped, tag = 'input window, operand 0, single buffered']
    #allocation3 [shape = 's32[1]{0}', space=sflag, size = 0x4, scoped, tag = 'scoped memory for tpu_custom_call.1']
    #allocation4 [shape = 's32[1]{0}', space=sflag, size = 0x4, scoped, tag = 'scoped memory for tpu_custom_call.1']
    #allocation5 [shape = 'u8[32768]{0}', space=vmem, size = 0x8000, scoped, tag = 'input window, operand 1, single buffered']
    #allocation6 [shape = 's32[1]{0}', space=sflag, size = 0x4, scoped, tag = 'scoped memory for tpu_custom_call.1']
    #allocation7 [shape = 'u8[512]{0}', space=vmem, size = 0x400, scoped, tag = 'input window, operand 2, single buffered']
    #allocation8 [shape = 'u8[65536]{0}', space=vmem, size = 0x10000, scoped, tag = 'input window, operand 3, single buffered']
    #allocation9 [shape = 's32[1]{0}', space=sflag, size = 0x4, scoped, tag = 'scoped memory for tpu_custom_call.1']
    #allocation10 [shape = 'u8[1024]{0}', space=vmem, size = 0x400, scoped, tag = 'input window, operand 4, single buffered']
    #allocation11 [shape = 'u8[1024]{0}', space=vmem, size = 0x400, scoped, tag = 'input window, operand 5, single buffered']
    #allocation12 [shape = 's32[1]{0}', space=sflag, size = 0x4, scoped, tag = 'scoped memory for tpu_custom_call.1']
    #allocation13 [shape = 'u8[1024]{0}', space=vmem, size = 0x400, scoped, tag = 'input window, operand 6, single buffered']
    #allocation14 [shape = 'u8[262144]{0}', space=vmem, size = 0x40000, scoped, tag = 'input window, operand 7, single buffered']
    #allocation15 [shape = 's32[1]{0}', space=sflag, size = 0x4, scoped, tag = 'scoped memory for tpu_custom_call.1']
    #allocation16 [shape = 'u8[2048]{0}', space=vmem, size = 0x800, scoped, tag = 'input window, operand 8, single buffered']
    #allocation17 [shape = 'u8[2048]{0}', space=vmem, size = 0x800, scoped, tag = 'input window, operand 9, single buffered']
    #allocation18 [shape = 's32[1]{0}', space=sflag, size = 0x4, scoped, tag = 'scoped memory for tpu_custom_call.1']
    #allocation19 [shape = 'u8[2048]{0}', space=vmem, size = 0x800, scoped, tag = 'input window, operand 10, single buffered']
    #allocation20 [shape = 'u8[1048576]{0}', space=vmem, size = 0x100000, scoped, tag = 'input window, operand 11, single buffered']
    #allocation21 [shape = 's32[1]{0}', space=sflag, size = 0x4, scoped, tag = 'scoped memory for tpu_custom_call.1']
    #allocation22 [shape = 'u8[4096]{0}', space=vmem, size = 0x1000, scoped, tag = 'input window, operand 12, single buffered']
    #allocation23 [shape = 'u8[4096]{0}', space=vmem, size = 0x1000, scoped, tag = 'input window, operand 13, single buffered']
    #allocation24 [shape = 's32[1]{0}', space=sflag, size = 0x4, scoped, tag = 'scoped memory for tpu_custom_call.1']
    #allocation25 [shape = 'u8[4096]{0}', space=vmem, size = 0x1000, scoped, tag = 'input window, operand 14, single buffered']
    #allocation26 [shape = 'u8[1572864]{0}', space=vmem, size = 0x180000, scoped, tag = 'input window, operand 15, single buffered']
    #allocation27 [shape = 's32[1]{0}', space=sflag, size = 0x4, scoped, tag = 'scoped memory for tpu_custom_call.1']
    #allocation28 [shape = 'u8[3072]{0}', space=vmem, size = 0xc00, scoped, tag = 'input window, operand 16, single buffered']
    #allocation29 [shape = 'u8[24576]{0}', space=vmem, size = 0x6000, scoped, tag = 'output window, operand 0, single buffered']
    %22 = vsyncpa [#allocation3], 0
    %23 = vsyncpa [#allocation6], 0
    %24 = vsyncpa [#allocation9], 0
    %25 = vsyncpa [#allocation12], 0
    %26 = vsyncpa [#allocation15], 0
    %27 = vsyncpa [#allocation18], 0
    %28 = vsyncpa [#allocation21], 0
    %29 = vsyncpa [#allocation24], 0
    %30 = vsyncpa [#allocation27], 0
    %31 = vsyncpa [#allocation4], 0
    // Predicated region
    $region2: #{tpu_custom_call.1} parent=1 // pred_check
      _
    $region3: #{tpu_custom_call.1} parent=1 // pred_check_branch
      %33 = sbr.rel (0) target = $region5
    $region4: #{tpu_custom_call.1} parent=1 // pred_region
      %s35 = ssub.s32 128, 128
      %36 = vsyncadd [#allocation3], %s35
      %s38 = sshll.u32 [#allocation2], 4
      %s39 = int_to_ptr.vmem [resolvable:$true] %s38
      %41 = dma.hbm_to_vmem [thread:$0]  %s0, 128, %s39, [#allocation3]
    $region5: #{tpu_custom_call.1} parent=1 // pred_fallthru
      _
    // Predicated region
    $region6: #{tpu_custom_call.1} parent=1 // pred_check
      _
    $region7: #{tpu_custom_call.1} parent=1 // pred_check_branch
      %43 = sbr.rel (0) target = $region9
    $region8: #{tpu_custom_call.1} parent=1 // pred_region
      %s45 = ssub.s32 1024, 1024
      %46 = vsyncadd [#allocation6], %s45
      %s47 = sshll.u32 [#allocation5], 4
      %s48 = int_to_ptr.vmem [resolvable:$true] %s47
      %53 = dma.hbm_to_vmem [thread:$0]  %s1, 1024, %s48, [#allocation6], 64, 64, 4
    $region9: #{tpu_custom_call.1} parent=1 // pred_fallthru
      _
    // Predicated region
    $region10: #{tpu_custom_call.1} parent=1 // pred_check
      _
    $region11: #{tpu_custom_call.1} parent=1 // pred_check_branch
      %55 = sbr.rel (0) target = $region13
    $region12: #{tpu_custom_call.1} parent=1 // pred_region
      %s57 = ssub.s32 16, 16
      %58 = vsyncadd [#allocation6], %s57
      %s60 = sshll.u32 [#allocation7], 4
      %s61 = int_to_ptr.vmem [resolvable:$true] %s60
      %63 = dma.hbm_to_vmem [thread:$0]  %s2, 16, %s61, [#allocation6]
    $region13: #{tpu_custom_call.1} parent=1 // pred_fallthru
      _
    // Predicated region
    $region14: #{tpu_custom_call.1} parent=1 // pred_check
      _
    $region15: #{tpu_custom_call.1} parent=1 // pred_check_branch
      %65 = sbr.rel (0) target = $region17
    $region16: #{tpu_custom_call.1} parent=1 // pred_region
      %s67 = ssub.s32 2048, 2048
      %68 = vsyncadd [#allocation9], %s67
      %s69 = sshll.u32 [#allocation8], 4
      %s70 = int_to_ptr.vmem [resolvable:$true] %s69
      %75 = dma.hbm_to_vmem [thread:$0]  %s3, 2048, %s70, [#allocation9], 128, 128, 8
    $region17: #{tpu_custom_call.1} parent=1 // pred_fallthru
      _
    // Predicated region
    $region18: #{tpu_custom_call.1} parent=1 // pred_check
      _
    $region19: #{tpu_custom_call.1} parent=1 // pred_check_branch
      %77 = sbr.rel (0) target = $region21
    $region20: #{tpu_custom_call.1} parent=1 // pred_region
      %s79 = ssub.s32 32, 32
      %80 = vsyncadd [#allocation9], %s79
      %s82 = sshll.u32 [#allocation10], 4
      %s83 = int_to_ptr.vmem [resolvable:$true] %s82
      %85 = dma.hbm_to_vmem [thread:$0]  %s4, 32, %s83, [#allocation9]
    $region21: #{tpu_custom_call.1} parent=1 // pred_fallthru
      _
    // Predicated region
    $region22: #{tpu_custom_call.1} parent=1 // pred_check
      _
    $region23: #{tpu_custom_call.1} parent=1 // pred_check_branch
      %87 = sbr.rel (0) target = $region25
    $region24: #{tpu_custom_call.1} parent=1 // pred_region
      %s89 = ssub.s32 32, 32
      %90 = vsyncadd [#allocation12], %s89
      %s92 = sshll.u32 [#allocation11], 4
      %s93 = int_to_ptr.vmem [resolvable:$true] %s92
      %95 = dma.hbm_to_vmem [thread:$0]  %s5, 32, %s93, [#allocation12]
    $region25: #{tpu_custom_call.1} parent=1 // pred_fallthru
      _
    // Predicated region
    $region26: #{tpu_custom_call.1} parent=1 // pred_check
      _
    $region27: #{tpu_custom_call.1} parent=1 // pred_check_branch
      %97 = sbr.rel (0) target = $region29
    $region28: #{tpu_custom_call.1} parent=1 // pred_region
      %s99 = ssub.s32 32, 32
      %100 = vsyncadd [#allocation12], %s99
      %s102 = sshll.u32 [#allocation13], 4
      %s103 = int_to_ptr.vmem [resolvable:$true] %s102
      %105 = dma.hbm_to_vmem [thread:$0]  %s6, 32, %s103, [#allocation12]
    $region29: #{tpu_custom_call.1} parent=1 // pred_fallthru
      _
    // Predicated region
    $region30: #{tpu_custom_call.1} parent=1 // pred_check
      _
    $region31: #{tpu_custom_call.1} parent=1 // pred_check_branch
      %107 = sbr.rel (0) target = $region33
    $region32: #{tpu_custom_call.1} parent=1 // pred_region
      %s109 = ssub.s32 8192, 8192
      %110 = vsyncadd [#allocation15], %s109
      %s111 = sshll.u32 [#allocation14], 4
      %s112 = int_to_ptr.vmem [resolvable:$true] %s111
      %117 = dma.hbm_to_vmem [thread:$0]  %s7, 8192, %s112, [#allocation15], 256, 256, 16
    $region33: #{tpu_custom_call.1} parent=1 // pred_fallthru
      _
    // Predicated region
    $region34: #{tpu_custom_call.1} parent=1 // pred_check
      _
    $region35: #{tpu_custom_call.1} parent=1 // pred_check_branch
      %119 = sbr.rel (0) target = $region37
    $region36: #{tpu_custom_call.1} parent=1 // pred_region
      %s121 = ssub.s32 64, 64
      %122 = vsyncadd [#allocation15], %s121
      %s124 = sshll.u32 [#allocation16], 4
      %s125 = int_to_ptr.vmem [resolvable:$true] %s124
      %127 = dma.hbm_to_vmem [thread:$0]  %s8, 64, %s125, [#allocation15]
    $region37: #{tpu_custom_call.1} parent=1 // pred_fallthru
      _
    // Predicated region
    $region38: #{tpu_custom_call.1} parent=1 // pred_check
      _
    $region39: #{tpu_custom_call.1} parent=1 // pred_check_branch
      %129 = sbr.rel (0) target = $region41
    $region40: #{tpu_custom_call.1} parent=1 // pred_region
      %s131 = ssub.s32 64, 64
      %132 = vsyncadd [#allocation18], %s131
      %s134 = sshll.u32 [#allocation17], 4
      %s135 = int_to_ptr.vmem [resolvable:$true] %s134
      %137 = dma.hbm_to_vmem [thread:$0]  %s9, 64, %s135, [#allocation18]
    $region41: #{tpu_custom_call.1} parent=1 // pred_fallthru
      _
    // Predicated region
    $region42: #{tpu_custom_call.1} parent=1 // pred_check
      _
    $region43: #{tpu_custom_call.1} parent=1 // pred_check_branch
      %139 = sbr.rel (0) target = $region45
    $region44: #{tpu_custom_call.1} parent=1 // pred_region
      %s141 = ssub.s32 64, 64
      %142 = vsyncadd [#allocation18], %s141
      %s144 = sshll.u32 [#allocation19], 4
      %s145 = int_to_ptr.vmem [resolvable:$true] %s144
      %147 = dma.hbm_to_vmem [thread:$0]  %s10, 64, %s145, [#allocation18]
    $region45: #{tpu_custom_call.1} parent=1 // pred_fallthru
      _
    // Predicated region
    $region46: #{tpu_custom_call.1} parent=1 // pred_check
      _
    $region47: #{tpu_custom_call.1} parent=1 // pred_check_branch
      %149 = sbr.rel (0) target = $region49
    $region48: #{tpu_custom_call.1} parent=1 // pred_region
      %s151 = ssub.s32 32768, 32768
      %152 = vsyncadd [#allocation21], %s151
      %s153 = sshll.u32 [#allocation20], 4
      %s154 = int_to_ptr.vmem [resolvable:$true] %s153
      %159 = dma.hbm_to_vmem [thread:$0]  %s11, 32768, %s154, [#allocation21], 512, 512, 32
    $region49: #{tpu_custom_call.1} parent=1 // pred_fallthru
      _
    // Predicated region
    $region50: #{tpu_custom_call.1} parent=1 // pred_check
      _
    $region51: #{tpu_custom_call.1} parent=1 // pred_check_branch
      %161 = sbr.rel (0) target = $region53
    $region52: #{tpu_custom_call.1} parent=1 // pred_region
      %s163 = ssub.s32 128, 128
      %164 = vsyncadd [#allocation21], %s163
      %s166 = sshll.u32 [#allocation22], 4
      %s167 = int_to_ptr.vmem [resolvable:$true] %s166
      %169 = dma.hbm_to_vmem [thread:$0]  %s12, 128, %s167, [#allocation21]
    $region53: #{tpu_custom_call.1} parent=1 // pred_fallthru
      _
    // Predicated region
    $region54: #{tpu_custom_call.1} parent=1 // pred_check
      _
    $region55: #{tpu_custom_call.1} parent=1 // pred_check_branch
      %171 = sbr.rel (0) target = $region57
    $region56: #{tpu_custom_call.1} parent=1 // pred_region
      %s173 = ssub.s32 128, 128
      %174 = vsyncadd [#allocation24], %s173
      %s176 = sshll.u32 [#allocation23], 4
      %s177 = int_to_ptr.vmem [resolvable:$true] %s176
      %179 = dma.hbm_to_vmem [thread:$0]  %s13, 128, %s177, [#allocation24]
    $region57: #{tpu_custom_call.1} parent=1 // pred_fallthru
      _
    // Predicated region
    $region58: #{tpu_custom_call.1} parent=1 // pred_check
      _
    $region59: #{tpu_custom_call.1} parent=1 // pred_check_branch
      %181 = sbr.rel (0) target = $region61
    $region60: #{tpu_custom_call.1} parent=1 // pred_region
      %s183 = ssub.s32 128, 128
      %184 = vsyncadd [#allocation24], %s183
      %s186 = sshll.u32 [#allocation25], 4
      %s187 = int_to_ptr.vmem [resolvable:$true] %s186
      %189 = dma.hbm_to_vmem [thread:$0]  %s14, 128, %s187, [#allocation24]
    $region61: #{tpu_custom_call.1} parent=1 // pred_fallthru
      _
    // Predicated region
    $region62: #{tpu_custom_call.1} parent=1 // pred_check
      _
    $region63: #{tpu_custom_call.1} parent=1 // pred_check_branch
      %191 = sbr.rel (0) target = $region65
    $region64: #{tpu_custom_call.1} parent=1 // pred_region
      %s193 = ssub.s32 49152, 49152
      %194 = vsyncadd [#allocation27], %s193
      %s195 = sshll.u32 [#allocation26], 4
      %s196 = int_to_ptr.vmem [resolvable:$true] %s195
      %201 = dma.hbm_to_vmem [thread:$0]  %s15, 49152, %s196, [#allocation27], 384, 384, 24
    $region65: #{tpu_custom_call.1} parent=1 // pred_fallthru
      _
    // Predicated region
    $region66: #{tpu_custom_call.1} parent=1 // pred_check
      _
    $region67: #{tpu_custom_call.1} parent=1 // pred_check_branch
      %203 = sbr.rel (0) target = $region69
    $region68: #{tpu_custom_call.1} parent=1 // pred_region
      %s205 = ssub.s32 96, 96
      %206 = vsyncadd [#allocation27], %s205
      %s208 = sshll.u32 [#allocation28], 4
      %s209 = int_to_ptr.vmem [resolvable:$true] %s208
      %211 = dma.hbm_to_vmem [thread:$0]  %s16, 96, %s209, [#allocation27]
    $region69: #{tpu_custom_call.1} parent=1 // pred_fallthru
      _
    // Predicated region
    $region70: #{tpu_custom_call.1} parent=1 // pred_check
      _
    $region71: #{tpu_custom_call.1} parent=1 // pred_check_branch
      %213 = sbr.rel (0) target = $region73
    $region72: #{tpu_custom_call.1} parent=1 // pred_region
      %214 = dma.done [#allocation3], 128
    $region73: #{tpu_custom_call.1} parent=1 // pred_fallthru
      _
    // Predicated region
    $region74: #{tpu_custom_call.1} parent=1 // pred_check
      _
    $region75: #{tpu_custom_call.1} parent=1 // pred_check_branch
      %216 = sbr.rel (0) target = $region77
    $region76: #{tpu_custom_call.1} parent=1 // pred_region
      %217 = dma.done [#allocation6], 1024
    $region77: #{tpu_custom_call.1} parent=1 // pred_fallthru
      _
    // Predicated region
    $region78: #{tpu_custom_call.1} parent=1 // pred_check
      _
    $region79: #{tpu_custom_call.1} parent=1 // pred_check_branch
      %219 = sbr.rel (0) target = $region81
    $region80: #{tpu_custom_call.1} parent=1 // pred_region
      %220 = dma.done [#allocation6], 16
    $region81: #{tpu_custom_call.1} parent=1 // pred_fallthru
      _
    // Predicated region
    $region82: #{tpu_custom_call.1} parent=1 // pred_check
      _
    $region83: #{tpu_custom_call.1} parent=1 // pred_check_branch
      %222 = sbr.rel (0) target = $region85
    $region84: #{tpu_custom_call.1} parent=1 // pred_region
      %223 = dma.done [#allocation9], 2048
    $region85: #{tpu_custom_call.1} parent=1 // pred_fallthru
      _
    // Predicated region
    $region86: #{tpu_custom_call.1} parent=1 // pred_check
      _
    $region87: #{tpu_custom_call.1} parent=1 // pred_check_branch
      %225 = sbr.rel (0) target = $region89
    $region88: #{tpu_custom_call.1} parent=1 // pred_region
      %226 = dma.done [#allocation9], 32
    $region89: #{tpu_custom_call.1} parent=1 // pred_fallthru
      _
    // Predicated region
    $region90: #{tpu_custom_call.1} parent=1 // pred_check
      _
    $region91: #{tpu_custom_call.1} parent=1 // pred_check_branch
      %228 = sbr.rel (0) target = $region93
    $region92: #{tpu_custom_call.1} parent=1 // pred_region
      %229 = dma.done [#allocation12], 32
    $region93: #{tpu_custom_call.1} parent=1 // pred_fallthru
      _
    // Predicated region
    $region94: #{tpu_custom_call.1} parent=1 // pred_check
      _
    $region95: #{tpu_custom_call.1} parent=1 // pred_check_branch
      %231 = sbr.rel (0) target = $region97
    $region96: #{tpu_custom_call.1} parent=1 // pred_region
      %232 = dma.done [#allocation12], 32
    $region97: #{tpu_custom_call.1} parent=1 // pred_fallthru
      _
    // Predicated region
    $region98: #{tpu_custom_call.1} parent=1 // pred_check
      _
    $region99: #{tpu_custom_call.1} parent=1 // pred_check_branch
      %234 = sbr.rel (0) target = $region101
    $region100: #{tpu_custom_call.1} parent=1 // pred_region
      %235 = dma.done [#allocation15], 8192
    $region101: #{tpu_custom_call.1} parent=1 // pred_fallthru
      _
    // Predicated region
    $region102: #{tpu_custom_call.1} parent=1 // pred_check
      _
    $region103: #{tpu_custom_call.1} parent=1 // pred_check_branch
      %237 = sbr.rel (0) target = $region105
    $region104: #{tpu_custom_call.1} parent=1 // pred_region
      %238 = dma.done [#allocation15], 64
    $region105: #{tpu_custom_call.1} parent=1 // pred_fallthru
      _
    // Predicated region
    $region106: #{tpu_custom_call.1} parent=1 // pred_check
      _
    $region107: #{tpu_custom_call.1} parent=1 // pred_check_branch
      %240 = sbr.rel (0) target = $region109
    $region108: #{tpu_custom_call.1} parent=1 // pred_region
      %241 = dma.done [#allocation18], 64
    $region109: #{tpu_custom_call.1} parent=1 // pred_fallthru
      _
    // Predicated region
    $region110: #{tpu_custom_call.1} parent=1 // pred_check
      _
    $region111: #{tpu_custom_call.1} parent=1 // pred_check_branch
      %243 = sbr.rel (0) target = $region113
    $region112: #{tpu_custom_call.1} parent=1 // pred_region
      %244 = dma.done [#allocation18], 64
    $region113: #{tpu_custom_call.1} parent=1 // pred_fallthru
      _
    // Predicated region
    $region114: #{tpu_custom_call.1} parent=1 // pred_check
      _
    $region115: #{tpu_custom_call.1} parent=1 // pred_check_branch
      %246 = sbr.rel (0) target = $region117
    $region116: #{tpu_custom_call.1} parent=1 // pred_region
      %247 = dma.done [#allocation21], 32768
    $region117: #{tpu_custom_call.1} parent=1 // pred_fallthru
      _
    // Predicated region
    $region118: #{tpu_custom_call.1} parent=1 // pred_check
      _
    $region119: #{tpu_custom_call.1} parent=1 // pred_check_branch
      %249 = sbr.rel (0) target = $region121
    $region120: #{tpu_custom_call.1} parent=1 // pred_region
      %250 = dma.done [#allocation21], 128
    $region121: #{tpu_custom_call.1} parent=1 // pred_fallthru
      _
    // Predicated region
    $region122: #{tpu_custom_call.1} parent=1 // pred_check
      _
    $region123: #{tpu_custom_call.1} parent=1 // pred_check_branch
      %252 = sbr.rel (0) target = $region125
    $region124: #{tpu_custom_call.1} parent=1 // pred_region
      %253 = dma.done [#allocation24], 128
    $region125: #{tpu_custom_call.1} parent=1 // pred_fallthru
      _
    // Predicated region
    $region126: #{tpu_custom_call.1} parent=1 // pred_check
      _
    $region127: #{tpu_custom_call.1} parent=1 // pred_check_branch
      %255 = sbr.rel (0) target = $region129
    $region128: #{tpu_custom_call.1} parent=1 // pred_region
      %256 = dma.done [#allocation24], 128
    $region129: #{tpu_custom_call.1} parent=1 // pred_fallthru
      _
    // Predicated region
    $region130: #{tpu_custom_call.1} parent=1 // pred_check
      _
    $region131: #{tpu_custom_call.1} parent=1 // pred_check_branch
      %258 = sbr.rel (0) target = $region133
    $region132: #{tpu_custom_call.1} parent=1 // pred_region
      %259 = dma.done [#allocation27], 49152
    $region133: #{tpu_custom_call.1} parent=1 // pred_fallthru
      _
    // Predicated region
    $region134: #{tpu_custom_call.1} parent=1 // pred_check
      _
    $region135: #{tpu_custom_call.1} parent=1 // pred_check_branch
      %261 = sbr.rel (0) target = $region137
    $region136: #{tpu_custom_call.1} parent=1 // pred_region
      %262 = dma.done [#allocation27], 96
    $region137: #{tpu_custom_call.1} parent=1 // pred_fallthru
      _
    %v264 = vld [vmem:[#allocation2] sm:$0xff]
    %v265 = vpack.c.bf16 %v264, %v264
    %v266 = vld [vmem:[#allocation5] sm:$0xf]
    %v267 = vld [vmem:[#allocation5 + $0x4] sm:$0xf]
    %v268 = vld [vmem:[#allocation5 + $0x8] sm:$0xf]
    %v269 = vld [vmem:[#allocation5 + $0xc] sm:$0xf]
    %v270 = vld [vmem:[#allocation5 + $0x10] sm:$0xf]
    %v271 = vld [vmem:[#allocation5 + $0x14] sm:$0xf]
    %v272 = vld [vmem:[#allocation5 + $0x18] sm:$0xf]
    %v273 = vld [vmem:[#allocation5 + $0x1c] sm:$0xf]
    %v274 = vld [vmem:[#allocation5 + $0x20] sm:$0xf]
    %v275 = vld [vmem:[#allocation5 + $0x24] sm:$0xf]
    %v276 = vld [vmem:[#allocation5 + $0x28] sm:$0xf]
    %v277 = vld [vmem:[#allocation5 + $0x2c] sm:$0xf]
    %v278 = vld [vmem:[#allocation5 + $0x30] sm:$0xf]
    %v279 = vld [vmem:[#allocation5 + $0x34] sm:$0xf]
    %v280 = vld [vmem:[#allocation5 + $0x38] sm:$0xf]
    %v281 = vld [vmem:[#allocation5 + $0x3c] sm:$0xf]
    %v282 = vld [vmem:[#allocation7] sm:$0x1]
    %v284 = vlaneseq
    %v285 = vshrl.u32 %v284, 7
    %v286 = vsub.s32 0, %v285
    %v287 = vrot.slane %v282, %v286
    %v305 = vunpack.c.l.b16 %v266
    %v306 = vunpack.c.l.b16 %v267
    %v307 = vunpack.c.l.b16 %v268
    %v308 = vunpack.c.l.b16 %v269
    %v309 = vunpack.c.l.b16 %v270
    %v310 = vunpack.c.l.b16 %v271
    %v311 = vunpack.c.l.b16 %v272
    %v312 = vunpack.c.l.b16 %v273
    %v313 = vunpack.c.l.b16 %v274
    %v314 = vunpack.c.l.b16 %v275
    %v315 = vunpack.c.l.b16 %v276
    %v316 = vunpack.c.l.b16 %v277
    %v317 = vunpack.c.l.b16 %v278
    %v318 = vunpack.c.l.b16 %v279
    %v319 = vunpack.c.l.b16 %v280
    %v320 = vunpack.c.l.b16 %v281
    %v321 = vpack.c.b16 %v306, %v305
    %v322 = vpack.c.b16 %v308, %v307
    %v323 = vpack.c.b16 %v310, %v309
    %v324 = vpack.c.b16 %v312, %v311
    %v325 = vpack.c.b16 %v314, %v313
    %v326 = vpack.c.b16 %v316, %v315
    %v327 = vpack.c.b16 %v318, %v317
    %v328 = vpack.c.b16 %v320, %v319
    %337 = vmatprep.subr.bf16.mxu0 0
    %338 = vmatpush1.bf16.msra.mxu0 %v321
    %339 = vmatprep.subr.bf16.mxu0 0
    %340 = vmatpush1.bf16.msra.mxu0 %v322
    %341 = vmatprep.subr.bf16.mxu0 0
    %342 = vmatpush1.bf16.msra.mxu0 %v323
    %343 = vmatprep.subr.bf16.mxu0 0
    %344 = vmatpush1.bf16.msra.mxu0 %v324
    %345 = vmatprep.subr.bf16.mxu0 0
    %346 = vmatpush1.bf16.msra.mxu0 %v325
    %347 = vmatprep.subr.bf16.mxu0 0
    %348 = vmatpush1.bf16.msra.mxu0 %v326
    %349 = vmatprep.subr.bf16.mxu0 0
    %350 = vmatpush1.bf16.msra.mxu0 %v327
    %351 = vmatprep.subr.bf16.mxu0 0
    %352 = vmatpush1.bf16.msra.mxu0 %v328
    %353 = vmatprep.subr.bf16.mxu0 0
    %354 = vmatpush1.bf16.msra.mxu0 0
    %355 = vmatprep.subr.bf16.mxu0 0
    %356 = vmatpush1.bf16.msra.mxu0 0
    %357 = vmatprep.subr.bf16.mxu0 0
    %358 = vmatpush1.bf16.msra.mxu0 0
    %359 = vmatprep.subr.bf16.mxu0 0
    %360 = vmatpush1.bf16.msra.mxu0 0
    %361 = vmatprep.subr.bf16.mxu0 0
    %362 = vmatpush1.bf16.msra.mxu0 0
    %363 = vmatprep.subr.bf16.mxu0 0
    %364 = vmatpush1.bf16.msra.mxu0 0
    %365 = vmatprep.subr.bf16.mxu0 0
    %366 = vmatpush1.bf16.msra.mxu0 0
    %367 = vmatprep.subr.bf16.mxu0 0
    %368 = vmatpush1.bf16.msra.mxu0 0
    %369 = vmatprep.mubr.bf16.mxu0 0
    %370 = vmatmul.mubr.bf16.gmra.mrb[0].mxu0 %v265
    %v371 = vpop.f32.mrb[0].mxu0
    %v372 = vadd.f32 %v287, %v371
    %v373 = vpop.f32.mrb[0].mxu0
    %v374 = vpop.f32.mrb[0].mxu0
    %v375 = vpop.f32.mrb[0].mxu0
    %376 = vdwg.mxu0
    %vm377 = vcmp.gt.f32.partialorder %v372, 0.0
    %v378 = vmul.f32 %v372, 0.2
    %v379 = vsel %vm377, %v372, %v378
    %v380 = vpack.c.bf16 %v379, %v379
    %v381 = vld [vmem:[#allocation8] sm:$0xff]
    %v382 = vld [vmem:[#allocation8 + $0x8] sm:$0xff]
    %v383 = vld [vmem:[#allocation8 + $0x10] sm:$0xff]
    %v384 = vld [vmem:[#allocation8 + $0x18] sm:$0xff]
    %v385 = vld [vmem:[#allocation8 + $0x20] sm:$0xff]
    %v386 = vld [vmem:[#allocation8 + $0x28] sm:$0xff]
    %v387 = vld [vmem:[#allocation8 + $0x30] sm:$0xff]
    %v388 = vld [vmem:[#allocation8 + $0x38] sm:$0xff]
    %v389 = vld [vmem:[#allocation8 + $0x40] sm:$0xff]
    %v390 = vld [vmem:[#allocation8 + $0x48] sm:$0xff]
    %v391 = vld [vmem:[#allocation8 + $0x50] sm:$0xff]
    %v392 = vld [vmem:[#allocation8 + $0x58] sm:$0xff]
    %v393 = vld [vmem:[#allocation8 + $0x60] sm:$0xff]
    %v394 = vld [vmem:[#allocation8 + $0x68] sm:$0xff]
    %v395 = vld [vmem:[#allocation8 + $0x70] sm:$0xff]
    %v396 = vld [vmem:[#allocation8 + $0x78] sm:$0xff]
    %v397 = vld [vmem:[#allocation10] sm:$0x3]
    %v399 = vlaneseq
    %v400 = vshrl.u32 %v399, 7
    %v401 = vsub.s32 0, %v400
    %v402 = vrot.slane %v397, %v401
    %v403 = vlaneseq
    %v404 = vshrl.u32 %v403, 7
    %v405 = vsub.s32 1, %v404
    %v406 = vrot.slane %v397, %v405
    %v425 = vunpack.c.l.b16 %v381
    %v426 = vunpack.c.h.b16 %v381
    %v427 = vunpack.c.l.b16 %v382
    %v428 = vunpack.c.h.b16 %v382
    %v429 = vunpack.c.l.b16 %v383
    %v430 = vunpack.c.h.b16 %v383
    %v431 = vunpack.c.l.b16 %v384
    %v432 = vunpack.c.h.b16 %v384
    %v433 = vunpack.c.l.b16 %v385
    %v434 = vunpack.c.h.b16 %v385
    %v435 = vunpack.c.l.b16 %v386
    %v436 = vunpack.c.h.b16 %v386
    %v437 = vunpack.c.l.b16 %v387
    %v438 = vunpack.c.h.b16 %v387
    %v439 = vunpack.c.l.b16 %v388
    %v440 = vunpack.c.h.b16 %v388
    %v441 = vunpack.c.l.b16 %v389
    %v442 = vunpack.c.h.b16 %v389
    %v443 = vunpack.c.l.b16 %v390
    %v444 = vunpack.c.h.b16 %v390
    %v445 = vunpack.c.l.b16 %v391
    %v446 = vunpack.c.h.b16 %v391
    %v447 = vunpack.c.l.b16 %v392
    %v448 = vunpack.c.h.b16 %v392
    %v449 = vunpack.c.l.b16 %v393
    %v450 = vunpack.c.h.b16 %v393
    %v451 = vunpack.c.l.b16 %v394
    %v452 = vunpack.c.h.b16 %v394
    %v453 = vunpack.c.l.b16 %v395
    %v454 = vunpack.c.h.b16 %v395
    %v455 = vunpack.c.l.b16 %v396
    %v456 = vunpack.c.h.b16 %v396
    %v457 = vpack.c.b16 %v427, %v425
    %v458 = vpack.c.b16 %v428, %v426
    %v459 = vpack.c.b16 %v431, %v429
    %v460 = vpack.c.b16 %v432, %v430
    %v461 = vpack.c.b16 %v435, %v433
    %v462 = vpack.c.b16 %v436, %v434
    %v463 = vpack.c.b16 %v439, %v437
    %v464 = vpack.c.b16 %v440, %v438
    %v465 = vpack.c.b16 %v443, %v441
    %v466 = vpack.c.b16 %v444, %v442
    %v467 = vpack.c.b16 %v447, %v445
    %v468 = vpack.c.b16 %v448, %v446
    %v469 = vpack.c.b16 %v451, %v449
    %v470 = vpack.c.b16 %v452, %v450
    %v471 = vpack.c.b16 %v455, %v453
    %v472 = vpack.c.b16 %v456, %v454
    %489 = vmatprep.subr.bf16.mxu0 %v458
    %490 = vmatpush1.bf16.msra.mxu0 %v457
    %491 = vmatprep.subr.bf16.mxu0 %v460
    %492 = vmatpush1.bf16.msra.mxu0 %v459
    %493 = vmatprep.subr.bf16.mxu0 %v462
    %494 = vmatpush1.bf16.msra.mxu0 %v461
    %495 = vmatprep.subr.bf16.mxu0 %v464
    %496 = vmatpush1.bf16.msra.mxu0 %v463
    %497 = vmatprep.subr.bf16.mxu0 %v466
    %498 = vmatpush1.bf16.msra.mxu0 %v465
    %499 = vmatprep.subr.bf16.mxu0 %v468
    %500 = vmatpush1.bf16.msra.mxu0 %v467
    %501 = vmatprep.subr.bf16.mxu0 %v470
    %502 = vmatpush1.bf16.msra.mxu0 %v469
    %503 = vmatprep.subr.bf16.mxu0 %v472
    %504 = vmatpush1.bf16.msra.mxu0 %v471
    %505 = vmatprep.subr.bf16.mxu0 0
    %506 = vmatpush1.bf16.msra.mxu0 0
    %507 = vmatprep.subr.bf16.mxu0 0
    %508 = vmatpush1.bf16.msra.mxu0 0
    %509 = vmatprep.subr.bf16.mxu0 0
    %510 = vmatpush1.bf16.msra.mxu0 0
    %511 = vmatprep.subr.bf16.mxu0 0
    %512 = vmatpush1.bf16.msra.mxu0 0
    %513 = vmatprep.subr.bf16.mxu0 0
    %514 = vmatpush1.bf16.msra.mxu0 0
    %515 = vmatprep.subr.bf16.mxu0 0
    %516 = vmatpush1.bf16.msra.mxu0 0
    %517 = vmatprep.subr.bf16.mxu0 0
    %518 = vmatpush1.bf16.msra.mxu0 0
    %519 = vmatprep.subr.bf16.mxu0 0
    %520 = vmatpush1.bf16.msra.mxu0 0
    %521 = vmatprep.mubr.bf16.mxu0 0
    %522 = vmatmul.mubr.bf16.gmra.mrb[0].mxu0 %v380
    %v523 = vpop.f32.mrb[0].mxu0
    %v524 = vadd.f32 %v402, %v523
    %v525 = vpop.f32.mrb[0].mxu0
    %v526 = vadd.f32 %v406, %v525
    %v527 = vpop.f32.mrb[0].mxu0
    %v528 = vpop.f32.mrb[0].mxu0
    %529 = vdwg.mxu0
    %v530 = vrot.slane %v524, 4
    %v531 = vadd.f32 %v524, %v530
    %v532 = vrot.slane %v531, 2
    %v533 = vadd.f32 %v531, %v532
    %v534 = vrot.slane %v533, 1
    %v535 = vadd.f32 %v533, %v534
    %v536 = vrot.slane %v526, 4
    %v537 = vadd.f32 %v526, %v536
    %v538 = vrot.slane %v537, 2
    %v539 = vadd.f32 %v537, %v538
    %v540 = vrot.slane %v539, 1
    %v541 = vadd.f32 %v539, %v540
    %v542 = vrcp.pop 8.0
    %v543 = vmul.f32 %v535, %v542
    %v544 = vmul.f32 %v541, %v542
    %v545 = vsub.f32 %v524, %v543
    %v546 = vsub.f32 %v526, %v544
    %v547 = vmul.f32 %v545, %v545
    %v548 = vmul.f32 %v546, %v546
    %v549 = vrot.slane %v547, 4
    %v550 = vadd.f32 %v547, %v549
    %v551 = vrot.slane %v550, 2
    %v552 = vadd.f32 %v550, %v551
    %v553 = vrot.slane %v552, 1
    %v554 = vadd.f32 %v552, %v553
    %v555 = vrot.slane %v548, 4
    %v556 = vadd.f32 %v548, %v555
    %v557 = vrot.slane %v556, 2
    %v558 = vadd.f32 %v556, %v557
    %v559 = vrot.slane %v558, 1
    %v560 = vadd.f32 %v558, %v559
    %v561 = vmul.f32 %v554, %v542
    %v562 = vmul.f32 %v560, %v542
    %v563 = vadd.f32 %v561, 0.8
    %v564 = vadd.f32 %v562, 0.8
    %v565 = vrsqrt.pop %v563
    %v566 = vrsqrt.pop %v564
    %v567 = vmul.f32 %v545, %v565
    %v568 = vmul.f32 %v546, %v566
    %v569 = vld [vmem:[#allocation11] sm:$0x3]
    %v571 = vlaneseq
    %v572 = vshrl.u32 %v571, 7
    %v573 = vsub.s32 0, %v572
    %v574 = vrot.slane %v569, %v573
    %v575 = vlaneseq
    %v576 = vshrl.u32 %v575, 7
    %v577 = vsub.s32 1, %v576
    %v578 = vrot.slane %v569, %v577
    %v581 = vmul.f32 %v567, %v574
    %v582 = vmul.f32 %v568, %v578
    %v583 = vld [vmem:[#allocation13] sm:$0x3]
    %v585 = vlaneseq
    %v586 = vshrl.u32 %v585, 7
    %v587 = vsub.s32 0, %v586
    %v588 = vrot.slane %v583, %v587
    %v589 = vlaneseq
    %v590 = vshrl.u32 %v589, 7
    %v591 = vsub.s32 1, %v590
    %v592 = vrot.slane %v583, %v591
    %v595 = vadd.f32 %v581, %v588
    %v596 = vadd.f32 %v582, %v592
    %vm597 = vcmp.gt.f32.partialorder %v595, 0.0
    %vm598 = vcmp.gt.f32.partialorder %v596, 0.0
    %v599 = vmul.f32 %v595, 0.2
    %v600 = vmul.f32 %v596, 0.2
    %v601 = vsel %vm597, %v595, %v599
    %v602 = vsel %vm598, %v596, %v600
    %v603 = vpack.c.bf16 %v601, %v601
    %v604 = vpack.c.bf16 %v602, %v602
    %v605 = vld [vmem:[#allocation14] sm:$0xff]
    %v606 = vld [vmem:[#allocation14 + $0x8] sm:$0xff]
    %v607 = vld [vmem:[#allocation14 + $0x10] sm:$0xff]
    %v608 = vld [vmem:[#allocation14 + $0x18] sm:$0xff]
    %v609 = vld [vmem:[#allocation14 + $0x20] sm:$0xff]
    %v610 = vld [vmem:[#allocation14 + $0x28] sm:$0xff]
    %v611 = vld [vmem:[#allocation14 + $0x30] sm:$0xff]
    %v612 = vld [vmem:[#allocation14 + $0x38] sm:$0xff]
    %v613 = vld [vmem:[#allocation14 + $0x40] sm:$0xff]
    %v614 = vld [vmem:[#allocation14 + $0x48] sm:$0xff]
    %v615 = vld [vmem:[#allocation14 + $0x50] sm:$0xff]
    %v616 = vld [vmem:[#allocation14 + $0x58] sm:$0xff]
    %v617 = vld [vmem:[#allocation14 + $0x60] sm:$0xff]
    %v618 = vld [vmem:[#allocation14 + $0x68] sm:$0xff]
    %v619 = vld [vmem:[#allocation14 + $0x70] sm:$0xff]
    %v620 = vld [vmem:[#allocation14 + $0x78] sm:$0xff]
    %v621 = vld [vmem:[#allocation14 + $0x80] sm:$0xff]
    %v622 = vld [vmem:[#allocation14 + $0x88] sm:$0xff]
    %v623 = vld [vmem:[#allocation14 + $0x90] sm:$0xff]
    %v624 = vld [vmem:[#allocation14 + $0x98] sm:$0xff]
    %v625 = vld [vmem:[#allocation14 + $0xa0] sm:$0xff]
    %v626 = vld [vmem:[#allocation14 + $0xa8] sm:$0xff]
    %v627 = vld [vmem:[#allocation14 + $0xb0] sm:$0xff]
    %v628 = vld [vmem:[#allocation14 + $0xb8] sm:$0xff]
    %v629 = vld [vmem:[#allocation14 + $0xc0] sm:$0xff]
    %v630 = vld [vmem:[#allocation14 + $0xc8] sm:$0xff]
    %v631 = vld [vmem:[#allocation14 + $0xd0] sm:$0xff]
    %v632 = vld [vmem:[#allocation14 + $0xd8] sm:$0xff]
    %v633 = vld [vmem:[#allocation14 + $0xe0] sm:$0xff]
    %v634 = vld [vmem:[#allocation14 + $0xe8] sm:$0xff]
    %v635 = vld [vmem:[#allocation14 + $0xf0] sm:$0xff]
    %v636 = vld [vmem:[#allocation14 + $0xf8] sm:$0xff]
    %v637 = vld [vmem:[#allocation14 + $0x100] sm:$0xff]
    %v638 = vld [vmem:[#allocation14 + $0x108] sm:$0xff]
    %v639 = vld [vmem:[#allocation14 + $0x110] sm:$0xff]
    %v640 = vld [vmem:[#allocation14 + $0x118] sm:$0xff]
    %v641 = vld [vmem:[#allocation14 + $0x120] sm:$0xff]
    %v642 = vld [vmem:[#allocation14 + $0x128] sm:$0xff]
    %v643 = vld [vmem:[#allocation14 + $0x130] sm:$0xff]
    %v644 = vld [vmem:[#allocation14 + $0x138] sm:$0xff]
    %v645 = vld [vmem:[#allocation14 + $0x140] sm:$0xff]
    %v646 = vld [vmem:[#allocation14 + $0x148] sm:$0xff]
    %v647 = vld [vmem:[#allocation14 + $0x150] sm:$0xff]
    %v648 = vld [vmem:[#allocation14 + $0x158] sm:$0xff]
    %v649 = vld [vmem:[#allocation14 + $0x160] sm:$0xff]
    %v650 = vld [vmem:[#allocation14 + $0x168] sm:$0xff]
    %v651 = vld [vmem:[#allocation14 + $0x170] sm:$0xff]
    %v652 = vld [vmem:[#allocation14 + $0x178] sm:$0xff]
    %v653 = vld [vmem:[#allocation14 + $0x180] sm:$0xff]
    %v654 = vld [vmem:[#allocation14 + $0x188] sm:$0xff]
    %v655 = vld [vmem:[#allocation14 + $0x190] sm:$0xff]
    %v656 = vld [vmem:[#allocation14 + $0x198] sm:$0xff]
    %v657 = vld [vmem:[#allocation14 + $0x1a0] sm:$0xff]
    %v658 = vld [vmem:[#allocation14 + $0x1a8] sm:$0xff]
    %v659 = vld [vmem:[#allocation14 + $0x1b0] sm:$0xff]
    %v660 = vld [vmem:[#allocation14 + $0x1b8] sm:$0xff]
    %v661 = vld [vmem:[#allocation14 + $0x1c0] sm:$0xff]
    %v662 = vld [vmem:[#allocation14 + $0x1c8] sm:$0xff]
    %v663 = vld [vmem:[#allocation14 + $0x1d0] sm:$0xff]
    %v664 = vld [vmem:[#allocation14 + $0x1d8] sm:$0xff]
    %v665 = vld [vmem:[#allocation14 + $0x1e0] sm:$0xff]
    %v666 = vld [vmem:[#allocation14 + $0x1e8] sm:$0xff]
    %v667 = vld [vmem:[#allocation14 + $0x1f0] sm:$0xff]
    %v668 = vld [vmem:[#allocation14 + $0x1f8] sm:$0xff]
    %v669 = vld [vmem:[#allocation16] sm:$0xf]
    %v671 = vlaneseq
    %v672 = vshrl.u32 %v671, 7
    %v673 = vsub.s32 0, %v672
    %v674 = vrot.slane %v669, %v673
    %v675 = vlaneseq
    %v676 = vshrl.u32 %v675, 7
    %v677 = vsub.s32 1, %v676
    %v678 = vrot.slane %v669, %v677
    %v679 = vlaneseq
    %v680 = vshrl.u32 %v679, 7
    %v681 = vsub.s32 2, %v680
    %v682 = vrot.slane %v669, %v681
    %v683 = vlaneseq
    %v684 = vshrl.u32 %v683, 7
    %v685 = vsub.s32 3, %v684
    %v686 = vrot.slane %v669, %v685
    %v755 = vunpack.c.l.b16 %v605
    %v756 = vunpack.c.h.b16 %v605
    %v757 = vunpack.c.l.b16 %v606
    %v758 = vunpack.c.h.b16 %v606
    %v759 = vunpack.c.l.b16 %v607
    %v760 = vunpack.c.h.b16 %v607
    %v761 = vunpack.c.l.b16 %v608
    %v762 = vunpack.c.h.b16 %v608
    %v763 = vunpack.c.l.b16 %v609
    %v764 = vunpack.c.h.b16 %v609
    %v765 = vunpack.c.l.b16 %v610
    %v766 = vunpack.c.h.b16 %v610
    %v767 = vunpack.c.l.b16 %v611
    %v768 = vunpack.c.h.b16 %v611
    %v769 = vunpack.c.l.b16 %v612
    %v770 = vunpack.c.h.b16 %v612
    %v771 = vunpack.c.l.b16 %v613
    %v772 = vunpack.c.h.b16 %v613
    %v773 = vunpack.c.l.b16 %v614
    %v774 = vunpack.c.h.b16 %v614
    %v775 = vunpack.c.l.b16 %v615
    %v776 = vunpack.c.h.b16 %v615
    %v777 = vunpack.c.l.b16 %v616
    %v778 = vunpack.c.h.b16 %v616
    %v779 = vunpack.c.l.b16 %v617
    %v780 = vunpack.c.h.b16 %v617
    %v781 = vunpack.c.l.b16 %v618
    %v782 = vunpack.c.h.b16 %v618
    %v783 = vunpack.c.l.b16 %v619
    %v784 = vunpack.c.h.b16 %v619
    %v785 = vunpack.c.l.b16 %v620
    %v786 = vunpack.c.h.b16 %v620
    %v787 = vunpack.c.l.b16 %v621
    %v788 = vunpack.c.h.b16 %v621
    %v789 = vunpack.c.l.b16 %v622
    %v790 = vunpack.c.h.b16 %v622
    %v791 = vunpack.c.l.b16 %v623
    %v792 = vunpack.c.h.b16 %v623
    %v793 = vunpack.c.l.b16 %v624
    %v794 = vunpack.c.h.b16 %v624
    %v795 = vunpack.c.l.b16 %v625
    %v796 = vunpack.c.h.b16 %v625
    %v797 = vunpack.c.l.b16 %v626
    %v798 = vunpack.c.h.b16 %v626
    %v799 = vunpack.c.l.b16 %v627
    %v800 = vunpack.c.h.b16 %v627
    %v801 = vunpack.c.l.b16 %v628
    %v802 = vunpack.c.h.b16 %v628
    %v803 = vunpack.c.l.b16 %v629
    %v804 = vunpack.c.h.b16 %v629
    %v805 = vunpack.c.l.b16 %v630
    %v806 = vunpack.c.h.b16 %v630
    %v807 = vunpack.c.l.b16 %v631
    %v808 = vunpack.c.h.b16 %v631
    %v809 = vunpack.c.l.b16 %v632
    %v810 = vunpack.c.h.b16 %v632
    %v811 = vunpack.c.l.b16 %v633
    %v812 = vunpack.c.h.b16 %v633
    %v813 = vunpack.c.l.b16 %v634
    %v814 = vunpack.c.h.b16 %v634
    %v815 = vunpack.c.l.b16 %v635
    %v816 = vunpack.c.h.b16 %v635
    %v817 = vunpack.c.l.b16 %v636
    %v818 = vunpack.c.h.b16 %v636
    %v819 = vunpack.c.l.b16 %v637
    %v820 = vunpack.c.h.b16 %v637
    %v821 = vunpack.c.l.b16 %v638
    %v822 = vunpack.c.h.b16 %v638
    %v823 = vunpack.c.l.b16 %v639
    %v824 = vunpack.c.h.b16 %v639
    %v825 = vunpack.c.l.b16 %v640
    %v826 = vunpack.c.h.b16 %v640
    %v827 = vunpack.c.l.b16 %v641
    %v828 = vunpack.c.h.b16 %v641
    %v829 = vunpack.c.l.b16 %v642
    %v830 = vunpack.c.h.b16 %v642
    %v831 = vunpack.c.l.b16 %v643
    %v832 = vunpack.c.h.b16 %v643
    %v833 = vunpack.c.l.b16 %v644
    %v834 = vunpack.c.h.b16 %v644
    %v835 = vunpack.c.l.b16 %v645
    %v836 = vunpack.c.h.b16 %v645
    %v837 = vunpack.c.l.b16 %v646
    %v838 = vunpack.c.h.b16 %v646
    %v839 = vunpack.c.l.b16 %v647
    %v840 = vunpack.c.h.b16 %v647
    %v841 = vunpack.c.l.b16 %v648
    %v842 = vunpack.c.h.b16 %v648
    %v843 = vunpack.c.l.b16 %v649
    %v844 = vunpack.c.h.b16 %v649
    %v845 = vunpack.c.l.b16 %v650
    %v846 = vunpack.c.h.b16 %v650
    %v847 = vunpack.c.l.b16 %v651
    %v848 = vunpack.c.h.b16 %v651
    %v849 = vunpack.c.l.b16 %v652
    %v850 = vunpack.c.h.b16 %v652
    %v851 = vunpack.c.l.b16 %v653
    %v852 = vunpack.c.h.b16 %v653
    %v853 = vunpack.c.l.b16 %v654
    %v854 = vunpack.c.h.b16 %v654
    %v855 = vunpack.c.l.b16 %v655
    %v856 = vunpack.c.h.b16 %v655
    %v857 = vunpack.c.l.b16 %v656
    %v858 = vunpack.c.h.b16 %v656
    %v859 = vunpack.c.l.b16 %v657
    %v860 = vunpack.c.h.b16 %v657
    %v861 = vunpack.c.l.b16 %v658
    %v862 = vunpack.c.h.b16 %v658
    %v863 = vunpack.c.l.b16 %v659
    %v864 = vunpack.c.h.b16 %v659
    %v865 = vunpack.c.l.b16 %v660
    %v866 = vunpack.c.h.b16 %v660
    %v867 = vunpack.c.l.b16 %v661
    %v868 = vunpack.c.h.b16 %v661
    %v869 = vunpack.c.l.b16 %v662
    %v870 = vunpack.c.h.b16 %v662
    %v871 = vunpack.c.l.b16 %v663
    %v872 = vunpack.c.h.b16 %v663
    %v873 = vunpack.c.l.b16 %v664
    %v874 = vunpack.c.h.b16 %v664
    %v875 = vunpack.c.l.b16 %v665
    %v876 = vunpack.c.h.b16 %v665
    %v877 = vunpack.c.l.b16 %v666
    %v878 = vunpack.c.h.b16 %v666
    %v879 = vunpack.c.l.b16 %v667
    %v880 = vunpack.c.h.b16 %v667
    %v881 = vunpack.c.l.b16 %v668
    %v882 = vunpack.c.h.b16 %v668
    %v883 = vpack.c.b16 %v759, %v755
    %v884 = vpack.c.b16 %v760, %v756
    %v885 = vpack.c.b16 %v761, %v757
    %v886 = vpack.c.b16 %v762, %v758
    %v887 = vpack.c.b16 %v767, %v763
    %v888 = vpack.c.b16 %v768, %v764
    %v889 = vpack.c.b16 %v769, %v765
    %v890 = vpack.c.b16 %v770, %v766
    %v891 = vpack.c.b16 %v775, %v771
    %v892 = vpack.c.b16 %v776, %v772
    %v893 = vpack.c.b16 %v777, %v773
    %v894 = vpack.c.b16 %v778, %v774
    %v895 = vpack.c.b16 %v783, %v779
    %v896 = vpack.c.b16 %v784, %v780
    %v897 = vpack.c.b16 %v785, %v781
    %v898 = vpack.c.b16 %v786, %v782
    %v899 = vpack.c.b16 %v791, %v787
    %v900 = vpack.c.b16 %v792, %v788
    %v901 = vpack.c.b16 %v793, %v789
    %v902 = vpack.c.b16 %v794, %v790
    %v903 = vpack.c.b16 %v799, %v795
    %v904 = vpack.c.b16 %v800, %v796
    %v905 = vpack.c.b16 %v801, %v797
    %v906 = vpack.c.b16 %v802, %v798
    %v907 = vpack.c.b16 %v807, %v803
    %v908 = vpack.c.b16 %v808, %v804
    %v909 = vpack.c.b16 %v809, %v805
    %v910 = vpack.c.b16 %v810, %v806
    %v911 = vpack.c.b16 %v815, %v811
    %v912 = vpack.c.b16 %v816, %v812
    %v913 = vpack.c.b16 %v817, %v813
    %v914 = vpack.c.b16 %v818, %v814
    %v915 = vpack.c.b16 %v823, %v819
    %v916 = vpack.c.b16 %v824, %v820
    %v917 = vpack.c.b16 %v825, %v821
    %v918 = vpack.c.b16 %v826, %v822
    %v919 = vpack.c.b16 %v831, %v827
    %v920 = vpack.c.b16 %v832, %v828
    %v921 = vpack.c.b16 %v833, %v829
    %v922 = vpack.c.b16 %v834, %v830
    %v923 = vpack.c.b16 %v839, %v835
    %v924 = vpack.c.b16 %v840, %v836
    %v925 = vpack.c.b16 %v841, %v837
    %v926 = vpack.c.b16 %v842, %v838
    %v927 = vpack.c.b16 %v847, %v843
    %v928 = vpack.c.b16 %v848, %v844
    %v929 = vpack.c.b16 %v849, %v845
    %v930 = vpack.c.b16 %v850, %v846
    %v931 = vpack.c.b16 %v855, %v851
    %v932 = vpack.c.b16 %v856, %v852
    %v933 = vpack.c.b16 %v857, %v853
    %v934 = vpack.c.b16 %v858, %v854
    %v935 = vpack.c.b16 %v863, %v859
    %v936 = vpack.c.b16 %v864, %v860
    %v937 = vpack.c.b16 %v865, %v861
    %v938 = vpack.c.b16 %v866, %v862
    %v939 = vpack.c.b16 %v871, %v867
    %v940 = vpack.c.b16 %v872, %v868
    %v941 = vpack.c.b16 %v873, %v869
    %v942 = vpack.c.b16 %v874, %v870
    %v943 = vpack.c.b16 %v879, %v875
    %v944 = vpack.c.b16 %v880, %v876
    %v945 = vpack.c.b16 %v881, %v877
    %v946 = vpack.c.b16 %v882, %v878
    %1011 = vmatprep.subr.bf16.mxu0 %v884
    %1012 = vmatpush1.bf16.msra.mxu0 %v883
    %1013 = vmatprep.subr.bf16.mxu0 %v888
    %1014 = vmatpush1.bf16.msra.mxu0 %v887
    %1015 = vmatprep.subr.bf16.mxu0 %v892
    %1016 = vmatpush1.bf16.msra.mxu0 %v891
    %1017 = vmatprep.subr.bf16.mxu0 %v896
    %1018 = vmatpush1.bf16.msra.mxu0 %v895
    %1019 = vmatprep.subr.bf16.mxu0 %v900
    %1020 = vmatpush1.bf16.msra.mxu0 %v899
    %1021 = vmatprep.subr.bf16.mxu0 %v904
    %1022 = vmatpush1.bf16.msra.mxu0 %v903
    %1023 = vmatprep.subr.bf16.mxu0 %v908
    %1024 = vmatpush1.bf16.msra.mxu0 %v907
    %1025 = vmatprep.subr.bf16.mxu0 %v912
    %1026 = vmatpush1.bf16.msra.mxu0 %v911
    %1027 = vmatprep.subr.bf16.mxu0 %v916
    %1028 = vmatpush1.bf16.msra.mxu0 %v915
    %1029 = vmatprep.subr.bf16.mxu0 %v920
    %1030 = vmatpush1.bf16.msra.mxu0 %v919
    %1031 = vmatprep.subr.bf16.mxu0 %v924
    %1032 = vmatpush1.bf16.msra.mxu0 %v923
    %1033 = vmatprep.subr.bf16.mxu0 %v928
    %1034 = vmatpush1.bf16.msra.mxu0 %v927
    %1035 = vmatprep.subr.bf16.mxu0 %v932
    %1036 = vmatpush1.bf16.msra.mxu0 %v931
    %1037 = vmatprep.subr.bf16.mxu0 %v936
    %1038 = vmatpush1.bf16.msra.mxu0 %v935
    %1039 = vmatprep.subr.bf16.mxu0 %v940
    %1040 = vmatpush1.bf16.msra.mxu0 %v939
    %1041 = vmatprep.subr.bf16.mxu0 %v944
    %1042 = vmatpush1.bf16.msra.mxu0 %v943
    %1043 = vmatprep.mubr.bf16.mxu0 %v604
    %1044 = vmatmul.mubr.bf16.gmra.mrb[0].mxu0 %v603
    %v1045 = vpop.f32.mrb[0].mxu0
    %v1046 = vadd.f32 %v674, %v1045
    %v1047 = vpop.f32.mrb[0].mxu0
    %v1048 = vadd.f32 %v678, %v1047
    %v1049 = vpop.f32.mrb[0].mxu0
    %v1050 = vpop.f32.mrb[0].mxu0
    %1051 = vdwg.mxu0
    %1052 = vmatprep.subr.bf16.mxu0 %v886
    %1053 = vmatpush1.bf16.msra.mxu0 %v885
    %1054 = vmatprep.subr.bf16.mxu0 %v890
    %1055 = vmatpush1.bf16.msra.mxu0 %v889
    %1056 = vmatprep.subr.bf16.mxu0 %v894
    %1057 = vmatpush1.bf16.msra.mxu0 %v893
    %1058 = vmatprep.subr.bf16.mxu0 %v898
    %1059 = vmatpush1.bf16.msra.mxu0 %v897
    %1060 = vmatprep.subr.bf16.mxu0 %v902
    %1061 = vmatpush1.bf16.msra.mxu0 %v901
    %1062 = vmatprep.subr.bf16.mxu0 %v906
    %1063 = vmatpush1.bf16.msra.mxu0 %v905
    %1064 = vmatprep.subr.bf16.mxu0 %v910
    %1065 = vmatpush1.bf16.msra.mxu0 %v909
    %1066 = vmatprep.subr.bf16.mxu0 %v914
    %1067 = vmatpush1.bf16.msra.mxu0 %v913
    %1068 = vmatprep.subr.bf16.mxu0 %v918
    %1069 = vmatpush1.bf16.msra.mxu0 %v917
    %1070 = vmatprep.subr.bf16.mxu0 %v922
    %1071 = vmatpush1.bf16.msra.mxu0 %v921
    %1072 = vmatprep.subr.bf16.mxu0 %v926
    %1073 = vmatpush1.bf16.msra.mxu0 %v925
    %1074 = vmatprep.subr.bf16.mxu0 %v930
    %1075 = vmatpush1.bf16.msra.mxu0 %v929
    %1076 = vmatprep.subr.bf16.mxu0 %v934
    %1077 = vmatpush1.bf16.msra.mxu0 %v933
    %1078 = vmatprep.subr.bf16.mxu0 %v938
    %1079 = vmatpush1.bf16.msra.mxu0 %v937
    %1080 = vmatprep.subr.bf16.mxu0 %v942
    %1081 = vmatpush1.bf16.msra.mxu0 %v941
    %1082 = vmatprep.subr.bf16.mxu0 %v946
    %1083 = vmatpush1.bf16.msra.mxu0 %v945
    %1084 = vmatprep.mubr.bf16.mxu0 %v604
    %1085 = vmatmul.mubr.bf16.gmra.mrb[0].mxu0 %v603
    %v1086 = vpop.f32.mrb[0].mxu0
    %v1087 = vadd.f32 %v682, %v1086
    %v1088 = vpop.f32.mrb[0].mxu0
    %v1089 = vadd.f32 %v686, %v1088
    %v1090 = vpop.f32.mrb[0].mxu0
    %v1091 = vpop.f32.mrb[0].mxu0
    %1092 = vdwg.mxu0
    %v1093 = vrot.slane %v1046, 4
    %v1094 = vadd.f32 %v1046, %v1093
    %v1095 = vrot.slane %v1094, 2
    %v1096 = vadd.f32 %v1094, %v1095
    %v1097 = vrot.slane %v1096, 1
    %v1098 = vadd.f32 %v1096, %v1097
    %v1099 = vrot.slane %v1048, 4
    %v1100 = vadd.f32 %v1048, %v1099
    %v1101 = vrot.slane %v1100, 2
    %v1102 = vadd.f32 %v1100, %v1101
    %v1103 = vrot.slane %v1102, 1
    %v1104 = vadd.f32 %v1102, %v1103
    %v1105 = vrot.slane %v1087, 4
    %v1106 = vadd.f32 %v1087, %v1105
    %v1107 = vrot.slane %v1106, 2
    %v1108 = vadd.f32 %v1106, %v1107
    %v1109 = vrot.slane %v1108, 1
    %v1110 = vadd.f32 %v1108, %v1109
    %v1111 = vrot.slane %v1089, 4
    %v1112 = vadd.f32 %v1089, %v1111
    %v1113 = vrot.slane %v1112, 2
    %v1114 = vadd.f32 %v1112, %v1113
    %v1115 = vrot.slane %v1114, 1
    %v1116 = vadd.f32 %v1114, %v1115
    %v1117 = vmul.f32 %v1098, %v542
    %v1118 = vmul.f32 %v1104, %v542
    %v1119 = vmul.f32 %v1110, %v542
    %v1120 = vmul.f32 %v1116, %v542
    %v1121 = vsub.f32 %v1046, %v1117
    %v1122 = vsub.f32 %v1048, %v1118
    %v1123 = vsub.f32 %v1087, %v1119
    %v1124 = vsub.f32 %v1089, %v1120
    %v1125 = vmul.f32 %v1121, %v1121
    %v1126 = vmul.f32 %v1122, %v1122
    %v1127 = vmul.f32 %v1123, %v1123
    %v1128 = vmul.f32 %v1124, %v1124
    %v1129 = vrot.slane %v1125, 4
    %v1130 = vadd.f32 %v1125, %v1129
    %v1131 = vrot.slane %v1130, 2
    %v1132 = vadd.f32 %v1130, %v1131
    %v1133 = vrot.slane %v1132, 1
    %v1134 = vadd.f32 %v1132, %v1133
    %v1135 = vrot.slane %v1126, 4
    %v1136 = vadd.f32 %v1126, %v1135
    %v1137 = vrot.slane %v1136, 2
    %v1138 = vadd.f32 %v1136, %v1137
    %v1139 = vrot.slane %v1138, 1
    %v1140 = vadd.f32 %v1138, %v1139
    %v1141 = vrot.slane %v1127, 4
    %v1142 = vadd.f32 %v1127, %v1141
    %v1143 = vrot.slane %v1142, 2
    %v1144 = vadd.f32 %v1142, %v1143
    %v1145 = vrot.slane %v1144, 1
    %v1146 = vadd.f32 %v1144, %v1145
    %v1147 = vrot.slane %v1128, 4
    %v1148 = vadd.f32 %v1128, %v1147
    %v1149 = vrot.slane %v1148, 2
    %v1150 = vadd.f32 %v1148, %v1149
    %v1151 = vrot.slane %v1150, 1
    %v1152 = vadd.f32 %v1150, %v1151
    %v1153 = vmul.f32 %v1134, %v542
    %v1154 = vmul.f32 %v1140, %v542
    %v1155 = vmul.f32 %v1146, %v542
    %v1156 = vmul.f32 %v1152, %v542
    %v1157 = vadd.f32 %v1153, 0.8
    %v1158 = vadd.f32 %v1154, 0.8
    %v1159 = vadd.f32 %v1155, 0.8
    %v1160 = vadd.f32 %v1156, 0.8
    %v1161 = vrsqrt.pop %v1157
    %v1162 = vrsqrt.pop %v1158
    %v1163 = vrsqrt.pop %v1159
    %v1164 = vrsqrt.pop %v1160
    %v1165 = vmul.f32 %v1121, %v1161
    %v1166 = vmul.f32 %v1122, %v1162
    %v1167 = vmul.f32 %v1123, %v1163
    %v1168 = vmul.f32 %v1124, %v1164
    %v1169 = vld [vmem:[#allocation17] sm:$0xf]
    %v1171 = vlaneseq
    %v1172 = vshrl.u32 %v1171, 7
    %v1173 = vsub.s32 0, %v1172
    %v1174 = vrot.slane %v1169, %v1173
    %v1175 = vlaneseq
    %v1176 = vshrl.u32 %v1175, 7
    %v1177 = vsub.s32 1, %v1176
    %v1178 = vrot.slane %v1169, %v1177
    %v1179 = vlaneseq
    %v1180 = vshrl.u32 %v1179, 7
    %v1181 = vsub.s32 2, %v1180
    %v1182 = vrot.slane %v1169, %v1181
    %v1183 = vlaneseq
    %v1184 = vshrl.u32 %v1183, 7
    %v1185 = vsub.s32 3, %v1184
    %v1186 = vrot.slane %v1169, %v1185
    %v1191 = vmul.f32 %v1165, %v1174
    %v1192 = vmul.f32 %v1166, %v1178
    %v1193 = vmul.f32 %v1167, %v1182
    %v1194 = vmul.f32 %v1168, %v1186
    %v1195 = vld [vmem:[#allocation19] sm:$0xf]
    %v1197 = vlaneseq
    %v1198 = vshrl.u32 %v1197, 7
    %v1199 = vsub.s32 0, %v1198
    %v1200 = vrot.slane %v1195, %v1199
    %v1201 = vlaneseq
    %v1202 = vshrl.u32 %v1201, 7
    %v1203 = vsub.s32 1, %v1202
    %v1204 = vrot.slane %v1195, %v1203
    %v1205 = vlaneseq
    %v1206 = vshrl.u32 %v1205, 7
    %v1207 = vsub.s32 2, %v1206
    %v1208 = vrot.slane %v1195, %v1207
    %v1209 = vlaneseq
    %v1210 = vshrl.u32 %v1209, 7
    %v1211 = vsub.s32 3, %v1210
    %v1212 = vrot.slane %v1195, %v1211
    %v1217 = vadd.f32 %v1191, %v1200
    %v1218 = vadd.f32 %v1192, %v1204
    %v1219 = vadd.f32 %v1193, %v1208
    %v1220 = vadd.f32 %v1194, %v1212
    %vm1221 = vcmp.gt.f32.partialorder %v1217, 0.0
    %vm1222 = vcmp.gt.f32.partialorder %v1218, 0.0
    %vm1223 = vcmp.gt.f32.partialorder %v1219, 0.0
    %vm1224 = vcmp.gt.f32.partialorder %v1220, 0.0
    %v1225 = vmul.f32 %v1217, 0.2
    %v1226 = vmul.f32 %v1218, 0.2
    %v1227 = vmul.f32 %v1219, 0.2
    %v1228 = vmul.f32 %v1220, 0.2
    %v1229 = vsel %vm1221, %v1217, %v1225
    %v1230 = vsel %vm1222, %v1218, %v1226
    %v1231 = vsel %vm1223, %v1219, %v1227
    %v1232 = vsel %vm1224, %v1220, %v1228
    %v1233 = vpack.c.bf16 %v1229, %v1229
    %v1234 = vpack.c.bf16 %v1230, %v1230
    %v1235 = vpack.c.bf16 %v1231, %v1231
    %v1236 = vpack.c.bf16 %v1232, %v1232
    %v1237 = vld [vmem:[#allocation20] sm:$0xff]
    %v1238 = vld [vmem:[#allocation20 + $0x8] sm:$0xff]
    %v1239 = vld [vmem:[#allocation20 + $0x10] sm:$0xff]
    %v1240 = vld [vmem:[#allocation20 + $0x18] sm:$0xff]
    %v1241 = vld [vmem:[#allocation20 + $0x20] sm:$0xff]
    %v1242 = vld [vmem:[#allocation20 + $0x28] sm:$0xff]
    %v1243 = vld [vmem:[#allocation20 + $0x30] sm:$0xff]
    %v1244 = vld [vmem:[#allocation20 + $0x38] sm:$0xff]
    %v1245 = vld [vmem:[#allocation20 + $0x40] sm:$0xff]
    %v1246 = vld [vmem:[#allocation20 + $0x48] sm:$0xff]
    %v1247 = vld [vmem:[#allocation20 + $0x50] sm:$0xff]
    %v1248 = vld [vmem:[#allocation20 + $0x58] sm:$0xff]
    %v1249 = vld [vmem:[#allocation20 + $0x60] sm:$0xff]
    %v1250 = vld [vmem:[#allocation20 + $0x68] sm:$0xff]
    %v1251 = vld [vmem:[#allocation20 + $0x70] sm:$0xff]
    %v1252 = vld [vmem:[#allocation20 + $0x78] sm:$0xff]
    %v1253 = vld [vmem:[#allocation20 + $0x80] sm:$0xff]
    %v1254 = vld [vmem:[#allocation20 + $0x88] sm:$0xff]
    %v1255 = vld [vmem:[#allocation20 + $0x90] sm:$0xff]
    %v1256 = vld [vmem:[#allocation20 + $0x98] sm:$0xff]
    %v1257 = vld [vmem:[#allocation20 + $0xa0] sm:$0xff]
    %v1258 = vld [vmem:[#allocation20 + $0xa8] sm:$0xff]
    %v1259 = vld [vmem:[#allocation20 + $0xb0] sm:$0xff]
    %v1260 = vld [vmem:[#allocation20 + $0xb8] sm:$0xff]
    %v1261 = vld [vmem:[#allocation20 + $0xc0] sm:$0xff]
    %v1262 = vld [vmem:[#allocation20 + $0xc8] sm:$0xff]
    %v1263 = vld [vmem:[#allocation20 + $0xd0] sm:$0xff]
    %v1264 = vld [vmem:[#allocation20 + $0xd8] sm:$0xff]
    %v1265 = vld [vmem:[#allocation20 + $0xe0] sm:$0xff]
    %v1266 = vld [vmem:[#allocation20 + $0xe8] sm:$0xff]
    %v1267 = vld [vmem:[#allocation20 + $0xf0] sm:$0xff]
    %v1268 = vld [vmem:[#allocation20 + $0xf8] sm:$0xff]
    %v1269 = vld [vmem:[#allocation20 + $0x100] sm:$0xff]
    %v1270 = vld [vmem:[#allocation20 + $0x108] sm:$0xff]
    %v1271 = vld [vmem:[#allocation20 + $0x110] sm:$0xff]
    %v1272 = vld [vmem:[#allocation20 + $0x118] sm:$0xff]
    %v1273 = vld [vmem:[#allocation20 + $0x120] sm:$0xff]
    %v1274 = vld [vmem:[#allocation20 + $0x128] sm:$0xff]
    %v1275 = vld [vmem:[#allocation20 + $0x130] sm:$0xff]
    %v1276 = vld [vmem:[#allocation20 + $0x138] sm:$0xff]
    %v1277 = vld [vmem:[#allocation20 + $0x140] sm:$0xff]
    %v1278 = vld [vmem:[#allocation20 + $0x148] sm:$0xff]
    %v1279 = vld [vmem:[#allocation20 + $0x150] sm:$0xff]
    %v1280 = vld [vmem:[#allocation20 + $0x158] sm:$0xff]
    %v1281 = vld [vmem:[#allocation20 + $0x160] sm:$0xff]
    %v1282 = vld [vmem:[#allocation20 + $0x168] sm:$0xff]
    %v1283 = vld [vmem:[#allocation20 + $0x170] sm:$0xff]
    %v1284 = vld [vmem:[#allocation20 + $0x178] sm:$0xff]
    %v1285 = vld [vmem:[#allocation20 + $0x180] sm:$0xff]
    %v1286 = vld [vmem:[#allocation20 + $0x188] sm:$0xff]
    %v1287 = vld [vmem:[#allocation20 + $0x190] sm:$0xff]
    %v1288 = vld [vmem:[#allocation20 + $0x198] sm:$0xff]
    %v1289 = vld [vmem:[#allocation20 + $0x1a0] sm:$0xff]
    %v1290 = vld [vmem:[#allocation20 + $0x1a8] sm:$0xff]
    %v1291 = vld [vmem:[#allocation20 + $0x1b0] sm:$0xff]
    %v1292 = vld [vmem:[#allocation20 + $0x1b8] sm:$0xff]
    %v1293 = vld [vmem:[#allocation20 + $0x1c0] sm:$0xff]
    %v1294 = vld [vmem:[#allocation20 + $0x1c8] sm:$0xff]
    %v1295 = vld [vmem:[#allocation20 + $0x1d0] sm:$0xff]
    %v1296 = vld [vmem:[#allocation20 + $0x1d8] sm:$0xff]
    %v1297 = vld [vmem:[#allocation20 + $0x1e0] sm:$0xff]
    %v1298 = vld [vmem:[#allocation20 + $0x1e8] sm:$0xff]
    %v1299 = vld [vmem:[#allocation20 + $0x1f0] sm:$0xff]
    %v1300 = vld [vmem:[#allocation20 + $0x1f8] sm:$0xff]
    %v1301 = vld [vmem:[#allocation20 + $0x200] sm:$0xff]
    %v1302 = vld [vmem:[#allocation20 + $0x208] sm:$0xff]
    %v1303 = vld [vmem:[#allocation20 + $0x210] sm:$0xff]
    %v1304 = vld [vmem:[#allocation20 + $0x218] sm:$0xff]
    %v1305 = vld [vmem:[#allocation20 + $0x220] sm:$0xff]
    %v1306 = vld [vmem:[#allocation20 + $0x228] sm:$0xff]
    %v1307 = vld [vmem:[#allocation20 + $0x230] sm:$0xff]
    %v1308 = vld [vmem:[#allocation20 + $0x238] sm:$0xff]
    %v1309 = vld [vmem:[#allocation20 + $0x240] sm:$0xff]
    %v1310 = vld [vmem:[#allocation20 + $0x248] sm:$0xff]
    %v1311 = vld [vmem:[#allocation20 + $0x250] sm:$0xff]
    %v1312 = vld [vmem:[#allocation20 + $0x258] sm:$0xff]
    %v1313 = vld [vmem:[#allocation20 + $0x260] sm:$0xff]
    %v1314 = vld [vmem:[#allocation20 + $0x268] sm:$0xff]
    %v1315 = vld [vmem:[#allocation20 + $0x270] sm:$0xff]
    %v1316 = vld [vmem:[#allocation20 + $0x278] sm:$0xff]
    %v1317 = vld [vmem:[#allocation20 + $0x280] sm:$0xff]
    %v1318 = vld [vmem:[#allocation20 + $0x288] sm:$0xff]
    %v1319 = vld [vmem:[#allocation20 + $0x290] sm:$0xff]
    %v1320 = vld [vmem:[#allocation20 + $0x298] sm:$0xff]
    %v1321 = vld [vmem:[#allocation20 + $0x2a0] sm:$0xff]
    %v1322 = vld [vmem:[#allocation20 + $0x2a8] sm:$0xff]
    %v1323 = vld [vmem:[#allocation20 + $0x2b0] sm:$0xff]
    %v1324 = vld [vmem:[#allocation20 + $0x2b8] sm:$0xff]
    %v1325 = vld [vmem:[#allocation20 + $0x2c0] sm:$0xff]
    %v1326 = vld [vmem:[#allocation20 + $0x2c8] sm:$0xff]
    %v1327 = vld [vmem:[#allocation20 + $0x2d0] sm:$0xff]
    %v1328 = vld [vmem:[#allocation20 + $0x2d8] sm:$0xff]
    %v1329 = vld [vmem:[#allocation20 + $0x2e0] sm:$0xff]
    %v1330 = vld [vmem:[#allocation20 + $0x2e8] sm:$0xff]
    %v1331 = vld [vmem:[#allocation20 + $0x2f0] sm:$0xff]
    %v1332 = vld [vmem:[#allocation20 + $0x2f8] sm:$0xff]
    %v1333 = vld [vmem:[#allocation20 + $0x300] sm:$0xff]
    %v1334 = vld [vmem:[#allocation20 + $0x308] sm:$0xff]
    %v1335 = vld [vmem:[#allocation20 + $0x310] sm:$0xff]
    %v1336 = vld [vmem:[#allocation20 + $0x318] sm:$0xff]
    %v1337 = vld [vmem:[#allocation20 + $0x320] sm:$0xff]
    %v1338 = vld [vmem:[#allocation20 + $0x328] sm:$0xff]
    %v1339 = vld [vmem:[#allocation20 + $0x330] sm:$0xff]
    %v1340 = vld [vmem:[#allocation20 + $0x338] sm:$0xff]
    %v1341 = vld [vmem:[#allocation20 + $0x340] sm:$0xff]
    %v1342 = vld [vmem:[#allocation20 + $0x348] sm:$0xff]
    %v1343 = vld [vmem:[#allocation20 + $0x350] sm:$0xff]
    %v1344 = vld [vmem:[#allocation20 + $0x358] sm:$0xff]
    %v1345 = vld [vmem:[#allocation20 + $0x360] sm:$0xff]
    %v1346 = vld [vmem:[#allocation20 + $0x368] sm:$0xff]
    %v1347 = vld [vmem:[#allocation20 + $0x370] sm:$0xff]
    %v1348 = vld [vmem:[#allocation20 + $0x378] sm:$0xff]
    %v1349 = vld [vmem:[#allocation20 + $0x380] sm:$0xff]
    %v1350 = vld [vmem:[#allocation20 + $0x388] sm:$0xff]
    %v1351 = vld [vmem:[#allocation20 + $0x390] sm:$0xff]
    %v1352 = vld [vmem:[#allocation20 + $0x398] sm:$0xff]
    %v1353 = vld [vmem:[#allocation20 + $0x3a0] sm:$0xff]
    %v1354 = vld [vmem:[#allocation20 + $0x3a8] sm:$0xff]
    %v1355 = vld [vmem:[#allocation20 + $0x3b0] sm:$0xff]
    %v1356 = vld [vmem:[#allocation20 + $0x3b8] sm:$0xff]
    %v1357 = vld [vmem:[#allocation20 + $0x3c0] sm:$0xff]
    %v1358 = vld [vmem:[#allocation20 + $0x3c8] sm:$0xff]
    %v1359 = vld [vmem:[#allocation20 + $0x3d0] sm:$0xff]
    %v1360 = vld [vmem:[#allocation20 + $0x3d8] sm:$0xff]
    %v1361 = vld [vmem:[#allocation20 + $0x3e0] sm:$0xff]
    %v1362 = vld [vmem:[#allocation20 + $0x3e8] sm:$0xff]
    %v1363 = vld [vmem:[#allocation20 + $0x3f0] sm:$0xff]
    %v1364 = vld [vmem:[#allocation20 + $0x3f8] sm:$0xff]
    %v1365 = vld [vmem:[#allocation20 + $0x400] sm:$0xff]
    %v1366 = vld [vmem:[#allocation20 + $0x408] sm:$0xff]
    %v1367 = vld [vmem:[#allocation20 + $0x410] sm:$0xff]
    %v1368 = vld [vmem:[#allocation20 + $0x418] sm:$0xff]
    %v1369 = vld [vmem:[#allocation20 + $0x420] sm:$0xff]
    %v1370 = vld [vmem:[#allocation20 + $0x428] sm:$0xff]
    %v1371 = vld [vmem:[#allocation20 + $0x430] sm:$0xff]
    %v1372 = vld [vmem:[#allocation20 + $0x438] sm:$0xff]
    %v1373 = vld [vmem:[#allocation20 + $0x440] sm:$0xff]
    %v1374 = vld [vmem:[#allocation20 + $0x448] sm:$0xff]
    %v1375 = vld [vmem:[#allocation20 + $0x450] sm:$0xff]
    %v1376 = vld [vmem:[#allocation20 + $0x458] sm:$0xff]
    %v1377 = vld [vmem:[#allocation20 + $0x460] sm:$0xff]
    %v1378 = vld [vmem:[#allocation20 + $0x468] sm:$0xff]
    %v1379 = vld [vmem:[#allocation20 + $0x470] sm:$0xff]
    %v1380 = vld [vmem:[#allocation20 + $0x478] sm:$0xff]
    %v1381 = vld [vmem:[#allocation20 + $0x480] sm:$0xff]
    %v1382 = vld [vmem:[#allocation20 + $0x488] sm:$0xff]
    %v1383 = vld [vmem:[#allocation20 + $0x490] sm:$0xff]
    %v1384 = vld [vmem:[#allocation20 + $0x498] sm:$0xff]
    %v1385 = vld [vmem:[#allocation20 + $0x4a0] sm:$0xff]
    %v1386 = vld [vmem:[#allocation20 + $0x4a8] sm:$0xff]
    %v1387 = vld [vmem:[#allocation20 + $0x4b0] sm:$0xff]
    %v1388 = vld [vmem:[#allocation20 + $0x4b8] sm:$0xff]
    %v1389 = vld [vmem:[#allocation20 + $0x4c0] sm:$0xff]
    %v1390 = vld [vmem:[#allocation20 + $0x4c8] sm:$0xff]
    %v1391 = vld [vmem:[#allocation20 + $0x4d0] sm:$0xff]
    %v1392 = vld [vmem:[#allocation20 + $0x4d8] sm:$0xff]
    %v1393 = vld [vmem:[#allocation20 + $0x4e0] sm:$0xff]
    %v1394 = vld [vmem:[#allocation20 + $0x4e8] sm:$0xff]
    %v1395 = vld [vmem:[#allocation20 + $0x4f0] sm:$0xff]
    %v1396 = vld [vmem:[#allocation20 + $0x4f8] sm:$0xff]
    %v1397 = vld [vmem:[#allocation20 + $0x500] sm:$0xff]
    %v1398 = vld [vmem:[#allocation20 + $0x508] sm:$0xff]
    %v1399 = vld [vmem:[#allocation20 + $0x510] sm:$0xff]
    %v1400 = vld [vmem:[#allocation20 + $0x518] sm:$0xff]
    %v1401 = vld [vmem:[#allocation20 + $0x520] sm:$0xff]
    %v1402 = vld [vmem:[#allocation20 + $0x528] sm:$0xff]
    %v1403 = vld [vmem:[#allocation20 + $0x530] sm:$0xff]
    %v1404 = vld [vmem:[#allocation20 + $0x538] sm:$0xff]
    %v1405 = vld [vmem:[#allocation20 + $0x540] sm:$0xff]
    %v1406 = vld [vmem:[#allocation20 + $0x548] sm:$0xff]
    %v1407 = vld [vmem:[#allocation20 + $0x550] sm:$0xff]
    %v1408 = vld [vmem:[#allocation20 + $0x558] sm:$0xff]
    %v1409 = vld [vmem:[#allocation20 + $0x560] sm:$0xff]
    %v1410 = vld [vmem:[#allocation20 + $0x568] sm:$0xff]
    %v1411 = vld [vmem:[#allocation20 + $0x570] sm:$0xff]
    %v1412 = vld [vmem:[#allocation20 + $0x578] sm:$0xff]
    %v1413 = vld [vmem:[#allocation20 + $0x580] sm:$0xff]
    %v1414 = vld [vmem:[#allocation20 + $0x588] sm:$0xff]
    %v1415 = vld [vmem:[#allocation20 + $0x590] sm:$0xff]
    %v1416 = vld [vmem:[#allocation20 + $0x598] sm:$0xff]
    %v1417 = vld [vmem:[#allocation20 + $0x5a0] sm:$0xff]
    %v1418 = vld [vmem:[#allocation20 + $0x5a8] sm:$0xff]
    %v1419 = vld [vmem:[#allocation20 + $0x5b0] sm:$0xff]
    %v1420 = vld [vmem:[#allocation20 + $0x5b8] sm:$0xff]
    %v1421 = vld [vmem:[#allocation20 + $0x5c0] sm:$0xff]
    %v1422 = vld [vmem:[#allocation20 + $0x5c8] sm:$0xff]
    %v1423 = vld [vmem:[#allocation20 + $0x5d0] sm:$0xff]
    %v1424 = vld [vmem:[#allocation20 + $0x5d8] sm:$0xff]
    %v1425 = vld [vmem:[#allocation20 + $0x5e0] sm:$0xff]
    %v1426 = vld [vmem:[#allocation20 + $0x5e8] sm:$0xff]
    %v1427 = vld [vmem:[#allocation20 + $0x5f0] sm:$0xff]
    %v1428 = vld [vmem:[#allocation20 + $0x5f8] sm:$0xff]
    %v1429 = vld [vmem:[#allocation20 + $0x600] sm:$0xff]
    %v1430 = vld [vmem:[#allocation20 + $0x608] sm:$0xff]
    %v1431 = vld [vmem:[#allocation20 + $0x610] sm:$0xff]
    %v1432 = vld [vmem:[#allocation20 + $0x618] sm:$0xff]
    %v1433 = vld [vmem:[#allocation20 + $0x620] sm:$0xff]
    %v1434 = vld [vmem:[#allocation20 + $0x628] sm:$0xff]
    %v1435 = vld [vmem:[#allocation20 + $0x630] sm:$0xff]
    %v1436 = vld [vmem:[#allocation20 + $0x638] sm:$0xff]
    %v1437 = vld [vmem:[#allocation20 + $0x640] sm:$0xff]
    %v1438 = vld [vmem:[#allocation20 + $0x648] sm:$0xff]
    %v1439 = vld [vmem:[#allocation20 + $0x650] sm:$0xff]
    %v1440 = vld [vmem:[#allocation20 + $0x658] sm:$0xff]
    %v1441 = vld [vmem:[#allocation20 + $0x660] sm:$0xff]
    %v1442 = vld [vmem:[#allocation20 + $0x668] sm:$0xff]
    %v1443 = vld [vmem:[#allocation20 + $0x670] sm:$0xff]
    %v1444 = vld [vmem:[#allocation20 + $0x678] sm:$0xff]
    %v1445 = vld [vmem:[#allocation20 + $0x680] sm:$0xff]
    %v1446 = vld [vmem:[#allocation20 + $0x688] sm:$0xff]
    %v1447 = vld [vmem:[#allocation20 + $0x690] sm:$0xff]
    %v1448 = vld [vmem:[#allocation20 + $0x698] sm:$0xff]
    %v1449 = vld [vmem:[#allocation20 + $0x6a0] sm:$0xff]
    %v1450 = vld [vmem:[#allocation20 + $0x6a8] sm:$0xff]
    %v1451 = vld [vmem:[#allocation20 + $0x6b0] sm:$0xff]
    %v1452 = vld [vmem:[#allocation20 + $0x6b8] sm:$0xff]
    %v1453 = vld [vmem:[#allocation20 + $0x6c0] sm:$0xff]
    %v1454 = vld [vmem:[#allocation20 + $0x6c8] sm:$0xff]
    %v1455 = vld [vmem:[#allocation20 + $0x6d0] sm:$0xff]
    %v1456 = vld [vmem:[#allocation20 + $0x6d8] sm:$0xff]
    %v1457 = vld [vmem:[#allocation20 + $0x6e0] sm:$0xff]
    %v1458 = vld [vmem:[#allocation20 + $0x6e8] sm:$0xff]
    %v1459 = vld [vmem:[#allocation20 + $0x6f0] sm:$0xff]
    %v1460 = vld [vmem:[#allocation20 + $0x6f8] sm:$0xff]
    %v1461 = vld [vmem:[#allocation20 + $0x700] sm:$0xff]
    %v1462 = vld [vmem:[#allocation20 + $0x708] sm:$0xff]
    %v1463 = vld [vmem:[#allocation20 + $0x710] sm:$0xff]
    %v1464 = vld [vmem:[#allocation20 + $0x718] sm:$0xff]
    %v1465 = vld [vmem:[#allocation20 + $0x720] sm:$0xff]
    %v1466 = vld [vmem:[#allocation20 + $0x728] sm:$0xff]
    %v1467 = vld [vmem:[#allocation20 + $0x730] sm:$0xff]
    %v1468 = vld [vmem:[#allocation20 + $0x738] sm:$0xff]
    %v1469 = vld [vmem:[#allocation20 + $0x740] sm:$0xff]
    %v1470 = vld [vmem:[#allocation20 + $0x748] sm:$0xff]
    %v1471 = vld [vmem:[#allocation20 + $0x750] sm:$0xff]
    %v1472 = vld [vmem:[#allocation20 + $0x758] sm:$0xff]
    %v1473 = vld [vmem:[#allocation20 + $0x760] sm:$0xff]
    %v1474 = vld [vmem:[#allocation20 + $0x768] sm:$0xff]
    %v1475 = vld [vmem:[#allocation20 + $0x770] sm:$0xff]
    %v1476 = vld [vmem:[#allocation20 + $0x778] sm:$0xff]
    %v1477 = vld [vmem:[#allocation20 + $0x780] sm:$0xff]
    %v1478 = vld [vmem:[#allocation20 + $0x788] sm:$0xff]
    %v1479 = vld [vmem:[#allocation20 + $0x790] sm:$0xff]
    %v1480 = vld [vmem:[#allocation20 + $0x798] sm:$0xff]
    %v1481 = vld [vmem:[#allocation20 + $0x7a0] sm:$0xff]
    %v1482 = vld [vmem:[#allocation20 + $0x7a8] sm:$0xff]
    %v1483 = vld [vmem:[#allocation20 + $0x7b0] sm:$0xff]
    %v1484 = vld [vmem:[#allocation20 + $0x7b8] sm:$0xff]
    %v1485 = vld [vmem:[#allocation20 + $0x7c0] sm:$0xff]
    %v1486 = vld [vmem:[#allocation20 + $0x7c8] sm:$0xff]
    %v1487 = vld [vmem:[#allocation20 + $0x7d0] sm:$0xff]
    %v1488 = vld [vmem:[#allocation20 + $0x7d8] sm:$0xff]
    %v1489 = vld [vmem:[#allocation20 + $0x7e0] sm:$0xff]
    %v1490 = vld [vmem:[#allocation20 + $0x7e8] sm:$0xff]
    %v1491 = vld [vmem:[#allocation20 + $0x7f0] sm:$0xff]
    %v1492 = vld [vmem:[#allocation20 + $0x7f8] sm:$0xff]
    %v1493 = vld [vmem:[#allocation22] sm:$0xff]
    %v1495 = vlaneseq
    %v1496 = vshrl.u32 %v1495, 7
    %v1497 = vsub.s32 0, %v1496
    %v1498 = vrot.slane %v1493, %v1497
    %v1499 = vlaneseq
    %v1500 = vshrl.u32 %v1499, 7
    %v1501 = vsub.s32 1, %v1500
    %v1502 = vrot.slane %v1493, %v1501
    %v1503 = vlaneseq
    %v1504 = vshrl.u32 %v1503, 7
    %v1505 = vsub.s32 2, %v1504
    %v1506 = vrot.slane %v1493, %v1505
    %v1507 = vlaneseq
    %v1508 = vshrl.u32 %v1507, 7
    %v1509 = vsub.s32 3, %v1508
    %v1510 = vrot.slane %v1493, %v1509
    %v1511 = vlaneseq
    %v1512 = vshrl.u32 %v1511, 7
    %v1513 = vsub.s32 4, %v1512
    %v1514 = vrot.slane %v1493, %v1513
    %v1515 = vlaneseq
    %v1516 = vshrl.u32 %v1515, 7
    %v1517 = vsub.s32 5, %v1516
    %v1518 = vrot.slane %v1493, %v1517
    %v1519 = vlaneseq
    %v1520 = vshrl.u32 %v1519, 7
    %v1521 = vsub.s32 6, %v1520
    %v1522 = vrot.slane %v1493, %v1521
    %v1523 = vlaneseq
    %v1524 = vshrl.u32 %v1523, 7
    %v1525 = vsub.s32 7, %v1524
    %v1526 = vrot.slane %v1493, %v1525
    %v1791 = vunpack.c.l.b16 %v1237
    %v1792 = vunpack.c.h.b16 %v1237
    %v1793 = vunpack.c.l.b16 %v1238
    %v1794 = vunpack.c.h.b16 %v1238
    %v1795 = vunpack.c.l.b16 %v1239
    %v1796 = vunpack.c.h.b16 %v1239
    %v1797 = vunpack.c.l.b16 %v1240
    %v1798 = vunpack.c.h.b16 %v1240
    %v1799 = vunpack.c.l.b16 %v1241
    %v1800 = vunpack.c.h.b16 %v1241
    %v1801 = vunpack.c.l.b16 %v1242
    %v1802 = vunpack.c.h.b16 %v1242
    %v1803 = vunpack.c.l.b16 %v1243
    %v1804 = vunpack.c.h.b16 %v1243
    %v1805 = vunpack.c.l.b16 %v1244
    %v1806 = vunpack.c.h.b16 %v1244
    %v1807 = vunpack.c.l.b16 %v1245
    %v1808 = vunpack.c.h.b16 %v1245
    %v1809 = vunpack.c.l.b16 %v1246
    %v1810 = vunpack.c.h.b16 %v1246
    %v1811 = vunpack.c.l.b16 %v1247
    %v1812 = vunpack.c.h.b16 %v1247
    %v1813 = vunpack.c.l.b16 %v1248
    %v1814 = vunpack.c.h.b16 %v1248
    %v1815 = vunpack.c.l.b16 %v1249
    %v1816 = vunpack.c.h.b16 %v1249
    %v1817 = vunpack.c.l.b16 %v1250
    %v1818 = vunpack.c.h.b16 %v1250
    %v1819 = vunpack.c.l.b16 %v1251
    %v1820 = vunpack.c.h.b16 %v1251
    %v1821 = vunpack.c.l.b16 %v1252
    %v1822 = vunpack.c.h.b16 %v1252
    %v1823 = vunpack.c.l.b16 %v1253
    %v1824 = vunpack.c.h.b16 %v1253
    %v1825 = vunpack.c.l.b16 %v1254
    %v1826 = vunpack.c.h.b16 %v1254
    %v1827 = vunpack.c.l.b16 %v1255
    %v1828 = vunpack.c.h.b16 %v1255
    %v1829 = vunpack.c.l.b16 %v1256
    %v1830 = vunpack.c.h.b16 %v1256
    %v1831 = vunpack.c.l.b16 %v1257
    %v1832 = vunpack.c.h.b16 %v1257
    %v1833 = vunpack.c.l.b16 %v1258
    %v1834 = vunpack.c.h.b16 %v1258
    %v1835 = vunpack.c.l.b16 %v1259
    %v1836 = vunpack.c.h.b16 %v1259
    %v1837 = vunpack.c.l.b16 %v1260
    %v1838 = vunpack.c.h.b16 %v1260
    %v1839 = vunpack.c.l.b16 %v1261
    %v1840 = vunpack.c.h.b16 %v1261
    %v1841 = vunpack.c.l.b16 %v1262
    %v1842 = vunpack.c.h.b16 %v1262
    %v1843 = vunpack.c.l.b16 %v1263
    %v1844 = vunpack.c.h.b16 %v1263
    %v1845 = vunpack.c.l.b16 %v1264
    %v1846 = vunpack.c.h.b16 %v1264
    %v1847 = vunpack.c.l.b16 %v1265
    %v1848 = vunpack.c.h.b16 %v1265
    %v1849 = vunpack.c.l.b16 %v1266
    %v1850 = vunpack.c.h.b16 %v1266
    %v1851 = vunpack.c.l.b16 %v1267
    %v1852 = vunpack.c.h.b16 %v1267
    %v1853 = vunpack.c.l.b16 %v1268
    %v1854 = vunpack.c.h.b16 %v1268
    %v1855 = vunpack.c.l.b16 %v1269
    %v1856 = vunpack.c.h.b16 %v1269
    %v1857 = vunpack.c.l.b16 %v1270
    %v1858 = vunpack.c.h.b16 %v1270
    %v1859 = vunpack.c.l.b16 %v1271
    %v1860 = vunpack.c.h.b16 %v1271
    %v1861 = vunpack.c.l.b16 %v1272
    %v1862 = vunpack.c.h.b16 %v1272
    %v1863 = vunpack.c.l.b16 %v1273
    %v1864 = vunpack.c.h.b16 %v1273
    %v1865 = vunpack.c.l.b16 %v1274
    %v1866 = vunpack.c.h.b16 %v1274
    %v1867 = vunpack.c.l.b16 %v1275
    %v1868 = vunpack.c.h.b16 %v1275
    %v1869 = vunpack.c.l.b16 %v1276
    %v1870 = vunpack.c.h.b16 %v1276
    %v1871 = vunpack.c.l.b16 %v1277
    %v1872 = vunpack.c.h.b16 %v1277
    %v1873 = vunpack.c.l.b16 %v1278
    %v1874 = vunpack.c.h.b16 %v1278
    %v1875 = vunpack.c.l.b16 %v1279
    %v1876 = vunpack.c.h.b16 %v1279
    %v1877 = vunpack.c.l.b16 %v1280
    %v1878 = vunpack.c.h.b16 %v1280
    %v1879 = vunpack.c.l.b16 %v1281
    %v1880 = vunpack.c.h.b16 %v1281
    %v1881 = vunpack.c.l.b16 %v1282
    %v1882 = vunpack.c.h.b16 %v1282
    %v1883 = vunpack.c.l.b16 %v1283
    %v1884 = vunpack.c.h.b16 %v1283
    %v1885 = vunpack.c.l.b16 %v1284
    %v1886 = vunpack.c.h.b16 %v1284
    %v1887 = vunpack.c.l.b16 %v1285
    %v1888 = vunpack.c.h.b16 %v1285
    %v1889 = vunpack.c.l.b16 %v1286
    %v1890 = vunpack.c.h.b16 %v1286
    %v1891 = vunpack.c.l.b16 %v1287
    %v1892 = vunpack.c.h.b16 %v1287
    %v1893 = vunpack.c.l.b16 %v1288
    %v1894 = vunpack.c.h.b16 %v1288
    %v1895 = vunpack.c.l.b16 %v1289
    %v1896 = vunpack.c.h.b16 %v1289
    %v1897 = vunpack.c.l.b16 %v1290
    %v1898 = vunpack.c.h.b16 %v1290
    %v1899 = vunpack.c.l.b16 %v1291
    %v1900 = vunpack.c.h.b16 %v1291
    %v1901 = vunpack.c.l.b16 %v1292
    %v1902 = vunpack.c.h.b16 %v1292
    %v1903 = vunpack.c.l.b16 %v1293
    %v1904 = vunpack.c.h.b16 %v1293
    %v1905 = vunpack.c.l.b16 %v1294
    %v1906 = vunpack.c.h.b16 %v1294
    %v1907 = vunpack.c.l.b16 %v1295
    %v1908 = vunpack.c.h.b16 %v1295
    %v1909 = vunpack.c.l.b16 %v1296
    %v1910 = vunpack.c.h.b16 %v1296
    %v1911 = vunpack.c.l.b16 %v1297
    %v1912 = vunpack.c.h.b16 %v1297
    %v1913 = vunpack.c.l.b16 %v1298
    %v1914 = vunpack.c.h.b16 %v1298
    %v1915 = vunpack.c.l.b16 %v1299
    %v1916 = vunpack.c.h.b16 %v1299
    %v1917 = vunpack.c.l.b16 %v1300
    %v1918 = vunpack.c.h.b16 %v1300
    %v1919 = vunpack.c.l.b16 %v1301
    %v1920 = vunpack.c.h.b16 %v1301
    %v1921 = vunpack.c.l.b16 %v1302
    %v1922 = vunpack.c.h.b16 %v1302
    %v1923 = vunpack.c.l.b16 %v1303
    %v1924 = vunpack.c.h.b16 %v1303
    %v1925 = vunpack.c.l.b16 %v1304
    %v1926 = vunpack.c.h.b16 %v1304
    %v1927 = vunpack.c.l.b16 %v1305
    %v1928 = vunpack.c.h.b16 %v1305
    %v1929 = vunpack.c.l.b16 %v1306
    %v1930 = vunpack.c.h.b16 %v1306
    %v1931 = vunpack.c.l.b16 %v1307
    %v1932 = vunpack.c.h.b16 %v1307
    %v1933 = vunpack.c.l.b16 %v1308
    %v1934 = vunpack.c.h.b16 %v1308
    %v1935 = vunpack.c.l.b16 %v1309
    %v1936 = vunpack.c.h.b16 %v1309
    %v1937 = vunpack.c.l.b16 %v1310
    %v1938 = vunpack.c.h.b16 %v1310
    %v1939 = vunpack.c.l.b16 %v1311
    %v1940 = vunpack.c.h.b16 %v1311
    %v1941 = vunpack.c.l.b16 %v1312
    %v1942 = vunpack.c.h.b16 %v1312
    %v1943 = vunpack.c.l.b16 %v1313
    %v1944 = vunpack.c.h.b16 %v1313
    %v1945 = vunpack.c.l.b16 %v1314
    %v1946 = vunpack.c.h.b16 %v1314
    %v1947 = vunpack.c.l.b16 %v1315
    %v1948 = vunpack.c.h.b16 %v1315
    %v1949 = vunpack.c.l.b16 %v1316
    %v1950 = vunpack.c.h.b16 %v1316
    %v1951 = vunpack.c.l.b16 %v1317
    %v1952 = vunpack.c.h.b16 %v1317
    %v1953 = vunpack.c.l.b16 %v1318
    %v1954 = vunpack.c.h.b16 %v1318
    %v1955 = vunpack.c.l.b16 %v1319
    %v1956 = vunpack.c.h.b16 %v1319
    %v1957 = vunpack.c.l.b16 %v1320
    %v1958 = vunpack.c.h.b16 %v1320
    %v1959 = vunpack.c.l.b16 %v1321
    %v1960 = vunpack.c.h.b16 %v1321
    %v1961 = vunpack.c.l.b16 %v1322
    %v1962 = vunpack.c.h.b16 %v1322
    %v1963 = vunpack.c.l.b16 %v1323
    %v1964 = vunpack.c.h.b16 %v1323
    %v1965 = vunpack.c.l.b16 %v1324
    %v1966 = vunpack.c.h.b16 %v1324
    %v1967 = vunpack.c.l.b16 %v1325
    %v1968 = vunpack.c.h.b16 %v1325
    %v1969 = vunpack.c.l.b16 %v1326
    %v1970 = vunpack.c.h.b16 %v1326
    %v1971 = vunpack.c.l.b16 %v1327
    %v1972 = vunpack.c.h.b16 %v1327
    %v1973 = vunpack.c.l.b16 %v1328
    %v1974 = vunpack.c.h.b16 %v1328
    %v1975 = vunpack.c.l.b16 %v1329
    %v1976 = vunpack.c.h.b16 %v1329
    %v1977 = vunpack.c.l.b16 %v1330
    %v1978 = vunpack.c.h.b16 %v1330
    %v1979 = vunpack.c.l.b16 %v1331
    %v1980 = vunpack.c.h.b16 %v1331
    %v1981 = vunpack.c.l.b16 %v1332
    %v1982 = vunpack.c.h.b16 %v1332
    %v1983 = vunpack.c.l.b16 %v1333
    %v1984 = vunpack.c.h.b16 %v1333
    %v1985 = vunpack.c.l.b16 %v1334
    %v1986 = vunpack.c.h.b16 %v1334
    %v1987 = vunpack.c.l.b16 %v1335
    %v1988 = vunpack.c.h.b16 %v1335
    %v1989 = vunpack.c.l.b16 %v1336
    %v1990 = vunpack.c.h.b16 %v1336
    %v1991 = vunpack.c.l.b16 %v1337
    %v1992 = vunpack.c.h.b16 %v1337
    %v1993 = vunpack.c.l.b16 %v1338
    %v1994 = vunpack.c.h.b16 %v1338
    %v1995 = vunpack.c.l.b16 %v1339
    %v1996 = vunpack.c.h.b16 %v1339
    %v1997 = vunpack.c.l.b16 %v1340
    %v1998 = vunpack.c.h.b16 %v1340
    %v1999 = vunpack.c.l.b16 %v1341
    %v2000 = vunpack.c.h.b16 %v1341
    %v2001 = vunpack.c.l.b16 %v1342
    %v2002 = vunpack.c.h.b16 %v1342
    %v2003 = vunpack.c.l.b16 %v1343
    %v2004 = vunpack.c.h.b16 %v1343
    %v2005 = vunpack.c.l.b16 %v1344
    %v2006 = vunpack.c.h.b16 %v1344
    %v2007 = vunpack.c.l.b16 %v1345
    %v2008 = vunpack.c.h.b16 %v1345
    %v2009 = vunpack.c.l.b16 %v1346
    %v2010 = vunpack.c.h.b16 %v1346
    %v2011 = vunpack.c.l.b16 %v1347
    %v2012 = vunpack.c.h.b16 %v1347
    %v2013 = vunpack.c.l.b16 %v1348
    %v2014 = vunpack.c.h.b16 %v1348
    %v2015 = vunpack.c.l.b16 %v1349
    %v2016 = vunpack.c.h.b16 %v1349
    %v2017 = vunpack.c.l.b16 %v1350
    %v2018 = vunpack.c.h.b16 %v1350
    %v2019 = vunpack.c.l.b16 %v1351
    %v2020 = vunpack.c.h.b16 %v1351
    %v2021 = vunpack.c.l.b16 %v1352
    %v2022 = vunpack.c.h.b16 %v1352
    %v2023 = vunpack.c.l.b16 %v1353
    %v2024 = vunpack.c.h.b16 %v1353
    %v2025 = vunpack.c.l.b16 %v1354
    %v2026 = vunpack.c.h.b16 %v1354
    %v2027 = vunpack.c.l.b16 %v1355
    %v2028 = vunpack.c.h.b16 %v1355
    %v2029 = vunpack.c.l.b16 %v1356
    %v2030 = vunpack.c.h.b16 %v1356
    %v2031 = vunpack.c.l.b16 %v1357
    %v2032 = vunpack.c.h.b16 %v1357
    %v2033 = vunpack.c.l.b16 %v1358
    %v2034 = vunpack.c.h.b16 %v1358
    %v2035 = vunpack.c.l.b16 %v1359
    %v2036 = vunpack.c.h.b16 %v1359
    %v2037 = vunpack.c.l.b16 %v1360
    %v2038 = vunpack.c.h.b16 %v1360
    %v2039 = vunpack.c.l.b16 %v1361
    %v2040 = vunpack.c.h.b16 %v1361
    %v2041 = vunpack.c.l.b16 %v1362
    %v2042 = vunpack.c.h.b16 %v1362
    %v2043 = vunpack.c.l.b16 %v1363
    %v2044 = vunpack.c.h.b16 %v1363
    %v2045 = vunpack.c.l.b16 %v1364
    %v2046 = vunpack.c.h.b16 %v1364
    %v2047 = vunpack.c.l.b16 %v1365
    %v2048 = vunpack.c.h.b16 %v1365
    %v2049 = vunpack.c.l.b16 %v1366
    %v2050 = vunpack.c.h.b16 %v1366
    %v2051 = vunpack.c.l.b16 %v1367
    %v2052 = vunpack.c.h.b16 %v1367
    %v2053 = vunpack.c.l.b16 %v1368
    %v2054 = vunpack.c.h.b16 %v1368
    %v2055 = vunpack.c.l.b16 %v1369
    %v2056 = vunpack.c.h.b16 %v1369
    %v2057 = vunpack.c.l.b16 %v1370
    %v2058 = vunpack.c.h.b16 %v1370
    %v2059 = vunpack.c.l.b16 %v1371
    %v2060 = vunpack.c.h.b16 %v1371
    %v2061 = vunpack.c.l.b16 %v1372
    %v2062 = vunpack.c.h.b16 %v1372
    %v2063 = vunpack.c.l.b16 %v1373
    %v2064 = vunpack.c.h.b16 %v1373
    %v2065 = vunpack.c.l.b16 %v1374
    %v2066 = vunpack.c.h.b16 %v1374
    %v2067 = vunpack.c.l.b16 %v1375
    %v2068 = vunpack.c.h.b16 %v1375
    %v2069 = vunpack.c.l.b16 %v1376
    %v2070 = vunpack.c.h.b16 %v1376
    %v2071 = vunpack.c.l.b16 %v1377
    %v2072 = vunpack.c.h.b16 %v1377
    %v2073 = vunpack.c.l.b16 %v1378
    %v2074 = vunpack.c.h.b16 %v1378
    %v2075 = vunpack.c.l.b16 %v1379
    %v2076 = vunpack.c.h.b16 %v1379
    %v2077 = vunpack.c.l.b16 %v1380
    %v2078 = vunpack.c.h.b16 %v1380
    %v2079 = vunpack.c.l.b16 %v1381
    %v2080 = vunpack.c.h.b16 %v1381
    %v2081 = vunpack.c.l.b16 %v1382
    %v2082 = vunpack.c.h.b16 %v1382
    %v2083 = vunpack.c.l.b16 %v1383
    %v2084 = vunpack.c.h.b16 %v1383
    %v2085 = vunpack.c.l.b16 %v1384
    %v2086 = vunpack.c.h.b16 %v1384
    %v2087 = vunpack.c.l.b16 %v1385
    %v2088 = vunpack.c.h.b16 %v1385
    %v2089 = vunpack.c.l.b16 %v1386
    %v2090 = vunpack.c.h.b16 %v1386
    %v2091 = vunpack.c.l.b16 %v1387
    %v2092 = vunpack.c.h.b16 %v1387
    %v2093 = vunpack.c.l.b16 %v1388
    %v2094 = vunpack.c.h.b16 %v1388
    %v2095 = vunpack.c.l.b16 %v1389
    %v2096 = vunpack.c.h.b16 %v1389
    %v2097 = vunpack.c.l.b16 %v1390
    %v2098 = vunpack.c.h.b16 %v1390
    %v2099 = vunpack.c.l.b16 %v1391
    %v2100 = vunpack.c.h.b16 %v1391
    %v2101 = vunpack.c.l.b16 %v1392
    %v2102 = vunpack.c.h.b16 %v1392
    %v2103 = vunpack.c.l.b16 %v1393
    %v2104 = vunpack.c.h.b16 %v1393
    %v2105 = vunpack.c.l.b16 %v1394
    %v2106 = vunpack.c.h.b16 %v1394
    %v2107 = vunpack.c.l.b16 %v1395
    %v2108 = vunpack.c.h.b16 %v1395
    %v2109 = vunpack.c.l.b16 %v1396
    %v2110 = vunpack.c.h.b16 %v1396
    %v2111 = vunpack.c.l.b16 %v1397
    %v2112 = vunpack.c.h.b16 %v1397
    %v2113 = vunpack.c.l.b16 %v1398
    %v2114 = vunpack.c.h.b16 %v1398
    %v2115 = vunpack.c.l.b16 %v1399
    %v2116 = vunpack.c.h.b16 %v1399
    %v2117 = vunpack.c.l.b16 %v1400
    %v2118 = vunpack.c.h.b16 %v1400
    %v2119 = vunpack.c.l.b16 %v1401
    %v2120 = vunpack.c.h.b16 %v1401
    %v2121 = vunpack.c.l.b16 %v1402
    %v2122 = vunpack.c.h.b16 %v1402
    %v2123 = vunpack.c.l.b16 %v1403
    %v2124 = vunpack.c.h.b16 %v1403
    %v2125 = vunpack.c.l.b16 %v1404
    %v2126 = vunpack.c.h.b16 %v1404
    %v2127 = vunpack.c.l.b16 %v1405
    %v2128 = vunpack.c.h.b16 %v1405
    %v2129 = vunpack.c.l.b16 %v1406
    %v2130 = vunpack.c.h.b16 %v1406
    %v2131 = vunpack.c.l.b16 %v1407
    %v2132 = vunpack.c.h.b16 %v1407
    %v2133 = vunpack.c.l.b16 %v1408
    %v2134 = vunpack.c.h.b16 %v1408
    %v2135 = vunpack.c.l.b16 %v1409
    %v2136 = vunpack.c.h.b16 %v1409
    %v2137 = vunpack.c.l.b16 %v1410
    %v2138 = vunpack.c.h.b16 %v1410
    %v2139 = vunpack.c.l.b16 %v1411
    %v2140 = vunpack.c.h.b16 %v1411
    %v2141 = vunpack.c.l.b16 %v1412
    %v2142 = vunpack.c.h.b16 %v1412
    %v2143 = vunpack.c.l.b16 %v1413
    %v2144 = vunpack.c.h.b16 %v1413
    %v2145 = vunpack.c.l.b16 %v1414
    %v2146 = vunpack.c.h.b16 %v1414
    %v2147 = vunpack.c.l.b16 %v1415
    %v2148 = vunpack.c.h.b16 %v1415
    %v2149 = vunpack.c.l.b16 %v1416
    %v2150 = vunpack.c.h.b16 %v1416
    %v2151 = vunpack.c.l.b16 %v1417
    %v2152 = vunpack.c.h.b16 %v1417
    %v2153 = vunpack.c.l.b16 %v1418
    %v2154 = vunpack.c.h.b16 %v1418
    %v2155 = vunpack.c.l.b16 %v1419
    %v2156 = vunpack.c.h.b16 %v1419
    %v2157 = vunpack.c.l.b16 %v1420
    %v2158 = vunpack.c.h.b16 %v1420
    %v2159 = vunpack.c.l.b16 %v1421
    %v2160 = vunpack.c.h.b16 %v1421
    %v2161 = vunpack.c.l.b16 %v1422
    %v2162 = vunpack.c.h.b16 %v1422
    %v2163 = vunpack.c.l.b16 %v1423
    %v2164 = vunpack.c.h.b16 %v1423
    %v2165 = vunpack.c.l.b16 %v1424
    %v2166 = vunpack.c.h.b16 %v1424
    %v2167 = vunpack.c.l.b16 %v1425
    %v2168 = vunpack.c.h.b16 %v1425
    %v2169 = vunpack.c.l.b16 %v1426
    %v2170 = vunpack.c.h.b16 %v1426
    %v2171 = vunpack.c.l.b16 %v1427
    %v2172 = vunpack.c.h.b16 %v1427
    %v2173 = vunpack.c.l.b16 %v1428
    %v2174 = vunpack.c.h.b16 %v1428
    %v2175 = vunpack.c.l.b16 %v1429
    %v2176 = vunpack.c.h.b16 %v1429
    %v2177 = vunpack.c.l.b16 %v1430
    %v2178 = vunpack.c.h.b16 %v1430
    %v2179 = vunpack.c.l.b16 %v1431
    %v2180 = vunpack.c.h.b16 %v1431
    %v2181 = vunpack.c.l.b16 %v1432
    %v2182 = vunpack.c.h.b16 %v1432
    %v2183 = vunpack.c.l.b16 %v1433
    %v2184 = vunpack.c.h.b16 %v1433
    %v2185 = vunpack.c.l.b16 %v1434
    %v2186 = vunpack.c.h.b16 %v1434
    %v2187 = vunpack.c.l.b16 %v1435
    %v2188 = vunpack.c.h.b16 %v1435
    %v2189 = vunpack.c.l.b16 %v1436
    %v2190 = vunpack.c.h.b16 %v1436
    %v2191 = vunpack.c.l.b16 %v1437
    %v2192 = vunpack.c.h.b16 %v1437
    %v2193 = vunpack.c.l.b16 %v1438
    %v2194 = vunpack.c.h.b16 %v1438
    %v2195 = vunpack.c.l.b16 %v1439
    %v2196 = vunpack.c.h.b16 %v1439
    %v2197 = vunpack.c.l.b16 %v1440
    %v2198 = vunpack.c.h.b16 %v1440
    %v2199 = vunpack.c.l.b16 %v1441
    %v2200 = vunpack.c.h.b16 %v1441
    %v2201 = vunpack.c.l.b16 %v1442
    %v2202 = vunpack.c.h.b16 %v1442
    %v2203 = vunpack.c.l.b16 %v1443
    %v2204 = vunpack.c.h.b16 %v1443
    %v2205 = vunpack.c.l.b16 %v1444
    %v2206 = vunpack.c.h.b16 %v1444
    %v2207 = vunpack.c.l.b16 %v1445
    %v2208 = vunpack.c.h.b16 %v1445
    %v2209 = vunpack.c.l.b16 %v1446
    %v2210 = vunpack.c.h.b16 %v1446
    %v2211 = vunpack.c.l.b16 %v1447
    %v2212 = vunpack.c.h.b16 %v1447
    %v2213 = vunpack.c.l.b16 %v1448
    %v2214 = vunpack.c.h.b16 %v1448
    %v2215 = vunpack.c.l.b16 %v1449
    %v2216 = vunpack.c.h.b16 %v1449
    %v2217 = vunpack.c.l.b16 %v1450
    %v2218 = vunpack.c.h.b16 %v1450
    %v2219 = vunpack.c.l.b16 %v1451
    %v2220 = vunpack.c.h.b16 %v1451
    %v2221 = vunpack.c.l.b16 %v1452
    %v2222 = vunpack.c.h.b16 %v1452
    %v2223 = vunpack.c.l.b16 %v1453
    %v2224 = vunpack.c.h.b16 %v1453
    %v2225 = vunpack.c.l.b16 %v1454
    %v2226 = vunpack.c.h.b16 %v1454
    %v2227 = vunpack.c.l.b16 %v1455
    %v2228 = vunpack.c.h.b16 %v1455
    %v2229 = vunpack.c.l.b16 %v1456
    %v2230 = vunpack.c.h.b16 %v1456
    %v2231 = vunpack.c.l.b16 %v1457
    %v2232 = vunpack.c.h.b16 %v1457
    %v2233 = vunpack.c.l.b16 %v1458
    %v2234 = vunpack.c.h.b16 %v1458
    %v2235 = vunpack.c.l.b16 %v1459
    %v2236 = vunpack.c.h.b16 %v1459
    %v2237 = vunpack.c.l.b16 %v1460
    %v2238 = vunpack.c.h.b16 %v1460
    %v2239 = vunpack.c.l.b16 %v1461
    %v2240 = vunpack.c.h.b16 %v1461
    %v2241 = vunpack.c.l.b16 %v1462
    %v2242 = vunpack.c.h.b16 %v1462
    %v2243 = vunpack.c.l.b16 %v1463
    %v2244 = vunpack.c.h.b16 %v1463
    %v2245 = vunpack.c.l.b16 %v1464
    %v2246 = vunpack.c.h.b16 %v1464
    %v2247 = vunpack.c.l.b16 %v1465
    %v2248 = vunpack.c.h.b16 %v1465
    %v2249 = vunpack.c.l.b16 %v1466
    %v2250 = vunpack.c.h.b16 %v1466
    %v2251 = vunpack.c.l.b16 %v1467
    %v2252 = vunpack.c.h.b16 %v1467
    %v2253 = vunpack.c.l.b16 %v1468
    %v2254 = vunpack.c.h.b16 %v1468
    %v2255 = vunpack.c.l.b16 %v1469
    %v2256 = vunpack.c.h.b16 %v1469
    %v2257 = vunpack.c.l.b16 %v1470
    %v2258 = vunpack.c.h.b16 %v1470
    %v2259 = vunpack.c.l.b16 %v1471
    %v2260 = vunpack.c.h.b16 %v1471
    %v2261 = vunpack.c.l.b16 %v1472
    %v2262 = vunpack.c.h.b16 %v1472
    %v2263 = vunpack.c.l.b16 %v1473
    %v2264 = vunpack.c.h.b16 %v1473
    %v2265 = vunpack.c.l.b16 %v1474
    %v2266 = vunpack.c.h.b16 %v1474
    %v2267 = vunpack.c.l.b16 %v1475
    %v2268 = vunpack.c.h.b16 %v1475
    %v2269 = vunpack.c.l.b16 %v1476
    %v2270 = vunpack.c.h.b16 %v1476
    %v2271 = vunpack.c.l.b16 %v1477
    %v2272 = vunpack.c.h.b16 %v1477
    %v2273 = vunpack.c.l.b16 %v1478
    %v2274 = vunpack.c.h.b16 %v1478
    %v2275 = vunpack.c.l.b16 %v1479
    %v2276 = vunpack.c.h.b16 %v1479
    %v2277 = vunpack.c.l.b16 %v1480
    %v2278 = vunpack.c.h.b16 %v1480
    %v2279 = vunpack.c.l.b16 %v1481
    %v2280 = vunpack.c.h.b16 %v1481
    %v2281 = vunpack.c.l.b16 %v1482
    %v2282 = vunpack.c.h.b16 %v1482
    %v2283 = vunpack.c.l.b16 %v1483
    %v2284 = vunpack.c.h.b16 %v1483
    %v2285 = vunpack.c.l.b16 %v1484
    %v2286 = vunpack.c.h.b16 %v1484
    %v2287 = vunpack.c.l.b16 %v1485
    %v2288 = vunpack.c.h.b16 %v1485
    %v2289 = vunpack.c.l.b16 %v1486
    %v2290 = vunpack.c.h.b16 %v1486
    %v2291 = vunpack.c.l.b16 %v1487
    %v2292 = vunpack.c.h.b16 %v1487
    %v2293 = vunpack.c.l.b16 %v1488
    %v2294 = vunpack.c.h.b16 %v1488
    %v2295 = vunpack.c.l.b16 %v1489
    %v2296 = vunpack.c.h.b16 %v1489
    %v2297 = vunpack.c.l.b16 %v1490
    %v2298 = vunpack.c.h.b16 %v1490
    %v2299 = vunpack.c.l.b16 %v1491
    %v2300 = vunpack.c.h.b16 %v1491
    %v2301 = vunpack.c.l.b16 %v1492
    %v2302 = vunpack.c.h.b16 %v1492
    %v2303 = vpack.c.b16 %v1799, %v1791
    %v2304 = vpack.c.b16 %v1800, %v1792
    %v2305 = vpack.c.b16 %v1801, %v1793
    %v2306 = vpack.c.b16 %v1802, %v1794
    %v2307 = vpack.c.b16 %v1803, %v1795
    %v2308 = vpack.c.b16 %v1804, %v1796
    %v2309 = vpack.c.b16 %v1805, %v1797
    %v2310 = vpack.c.b16 %v1806, %v1798
    %v2311 = vpack.c.b16 %v1815, %v1807
    %v2312 = vpack.c.b16 %v1816, %v1808
    %v2313 = vpack.c.b16 %v1817, %v1809
    %v2314 = vpack.c.b16 %v1818, %v1810
    %v2315 = vpack.c.b16 %v1819, %v1811
    %v2316 = vpack.c.b16 %v1820, %v1812
    %v2317 = vpack.c.b16 %v1821, %v1813
    %v2318 = vpack.c.b16 %v1822, %v1814
    %v2319 = vpack.c.b16 %v1831, %v1823
    %v2320 = vpack.c.b16 %v1832, %v1824
    %v2321 = vpack.c.b16 %v1833, %v1825
    %v2322 = vpack.c.b16 %v1834, %v1826
    %v2323 = vpack.c.b16 %v1835, %v1827
    %v2324 = vpack.c.b16 %v1836, %v1828
    %v2325 = vpack.c.b16 %v1837, %v1829
    %v2326 = vpack.c.b16 %v1838, %v1830
    %v2327 = vpack.c.b16 %v1847, %v1839
    %v2328 = vpack.c.b16 %v1848, %v1840
    %v2329 = vpack.c.b16 %v1849, %v1841
    %v2330 = vpack.c.b16 %v1850, %v1842
    %v2331 = vpack.c.b16 %v1851, %v1843
    %v2332 = vpack.c.b16 %v1852, %v1844
    %v2333 = vpack.c.b16 %v1853, %v1845
    %v2334 = vpack.c.b16 %v1854, %v1846
    %v2335 = vpack.c.b16 %v1863, %v1855
    %v2336 = vpack.c.b16 %v1864, %v1856
    %v2337 = vpack.c.b16 %v1865, %v1857
    %v2338 = vpack.c.b16 %v1866, %v1858
    %v2339 = vpack.c.b16 %v1867, %v1859
    %v2340 = vpack.c.b16 %v1868, %v1860
    %v2341 = vpack.c.b16 %v1869, %v1861
    %v2342 = vpack.c.b16 %v1870, %v1862
    %v2343 = vpack.c.b16 %v1879, %v1871
    %v2344 = vpack.c.b16 %v1880, %v1872
    %v2345 = vpack.c.b16 %v1881, %v1873
    %v2346 = vpack.c.b16 %v1882, %v1874
    %v2347 = vpack.c.b16 %v1883, %v1875
    %v2348 = vpack.c.b16 %v1884, %v1876
    %v2349 = vpack.c.b16 %v1885, %v1877
    %v2350 = vpack.c.b16 %v1886, %v1878
    %v2351 = vpack.c.b16 %v1895, %v1887
    %v2352 = vpack.c.b16 %v1896, %v1888
    %v2353 = vpack.c.b16 %v1897, %v1889
    %v2354 = vpack.c.b16 %v1898, %v1890
    %v2355 = vpack.c.b16 %v1899, %v1891
    %v2356 = vpack.c.b16 %v1900, %v1892
    %v2357 = vpack.c.b16 %v1901, %v1893
    %v2358 = vpack.c.b16 %v1902, %v1894
    %v2359 = vpack.c.b16 %v1911, %v1903
    %v2360 = vpack.c.b16 %v1912, %v1904
    %v2361 = vpack.c.b16 %v1913, %v1905
    %v2362 = vpack.c.b16 %v1914, %v1906
    %v2363 = vpack.c.b16 %v1915, %v1907
    %v2364 = vpack.c.b16 %v1916, %v1908
    %v2365 = vpack.c.b16 %v1917, %v1909
    %v2366 = vpack.c.b16 %v1918, %v1910
    %v2367 = vpack.c.b16 %v1927, %v1919
    %v2368 = vpack.c.b16 %v1928, %v1920
    %v2369 = vpack.c.b16 %v1929, %v1921
    %v2370 = vpack.c.b16 %v1930, %v1922
    %v2371 = vpack.c.b16 %v1931, %v1923
    %v2372 = vpack.c.b16 %v1932, %v1924
    %v2373 = vpack.c.b16 %v1933, %v1925
    %v2374 = vpack.c.b16 %v1934, %v1926
    %v2375 = vpack.c.b16 %v1943, %v1935
    %v2376 = vpack.c.b16 %v1944, %v1936
    %v2377 = vpack.c.b16 %v1945, %v1937
    %v2378 = vpack.c.b16 %v1946, %v1938
    %v2379 = vpack.c.b16 %v1947, %v1939
    %v2380 = vpack.c.b16 %v1948, %v1940
    %v2381 = vpack.c.b16 %v1949, %v1941
    %v2382 = vpack.c.b16 %v1950, %v1942
    %v2383 = vpack.c.b16 %v1959, %v1951
    %v2384 = vpack.c.b16 %v1960, %v1952
    %v2385 = vpack.c.b16 %v1961, %v1953
    %v2386 = vpack.c.b16 %v1962, %v1954
    %v2387 = vpack.c.b16 %v1963, %v1955
    %v2388 = vpack.c.b16 %v1964, %v1956
    %v2389 = vpack.c.b16 %v1965, %v1957
    %v2390 = vpack.c.b16 %v1966, %v1958
    %v2391 = vpack.c.b16 %v1975, %v1967
    %v2392 = vpack.c.b16 %v1976, %v1968
    %v2393 = vpack.c.b16 %v1977, %v1969
    %v2394 = vpack.c.b16 %v1978, %v1970
    %v2395 = vpack.c.b16 %v1979, %v1971
    %v2396 = vpack.c.b16 %v1980, %v1972
    %v2397 = vpack.c.b16 %v1981, %v1973
    %v2398 = vpack.c.b16 %v1982, %v1974
    %v2399 = vpack.c.b16 %v1991, %v1983
    %v2400 = vpack.c.b16 %v1992, %v1984
    %v2401 = vpack.c.b16 %v1993, %v1985
    %v2402 = vpack.c.b16 %v1994, %v1986
    %v2403 = vpack.c.b16 %v1995, %v1987
    %v2404 = vpack.c.b16 %v1996, %v1988
    %v2405 = vpack.c.b16 %v1997, %v1989
    %v2406 = vpack.c.b16 %v1998, %v1990
    %v2407 = vpack.c.b16 %v2007, %v1999
    %v2408 = vpack.c.b16 %v2008, %v2000
    %v2409 = vpack.c.b16 %v2009, %v2001
    %v2410 = vpack.c.b16 %v2010, %v2002
    %v2411 = vpack.c.b16 %v2011, %v2003
    %v2412 = vpack.c.b16 %v2012, %v2004
    %v2413 = vpack.c.b16 %v2013, %v2005
    %v2414 = vpack.c.b16 %v2014, %v2006
    %v2415 = vpack.c.b16 %v2023, %v2015
    %v2416 = vpack.c.b16 %v2024, %v2016
    %v2417 = vpack.c.b16 %v2025, %v2017
    %v2418 = vpack.c.b16 %v2026, %v2018
    %v2419 = vpack.c.b16 %v2027, %v2019
    %v2420 = vpack.c.b16 %v2028, %v2020
    %v2421 = vpack.c.b16 %v2029, %v2021
    %v2422 = vpack.c.b16 %v2030, %v2022
    %v2423 = vpack.c.b16 %v2039, %v2031
    %v2424 = vpack.c.b16 %v2040, %v2032
    %v2425 = vpack.c.b16 %v2041, %v2033
    %v2426 = vpack.c.b16 %v2042, %v2034
    %v2427 = vpack.c.b16 %v2043, %v2035
    %v2428 = vpack.c.b16 %v2044, %v2036
    %v2429 = vpack.c.b16 %v2045, %v2037
    %v2430 = vpack.c.b16 %v2046, %v2038
    %v2431 = vpack.c.b16 %v2055, %v2047
    %v2432 = vpack.c.b16 %v2056, %v2048
    %v2433 = vpack.c.b16 %v2057, %v2049
    %v2434 = vpack.c.b16 %v2058, %v2050
    %v2435 = vpack.c.b16 %v2059, %v2051
    %v2436 = vpack.c.b16 %v2060, %v2052
    %v2437 = vpack.c.b16 %v2061, %v2053
    %v2438 = vpack.c.b16 %v2062, %v2054
    %v2439 = vpack.c.b16 %v2071, %v2063
    %v2440 = vpack.c.b16 %v2072, %v2064
    %v2441 = vpack.c.b16 %v2073, %v2065
    %v2442 = vpack.c.b16 %v2074, %v2066
    %v2443 = vpack.c.b16 %v2075, %v2067
    %v2444 = vpack.c.b16 %v2076, %v2068
    %v2445 = vpack.c.b16 %v2077, %v2069
    %v2446 = vpack.c.b16 %v2078, %v2070
    %v2447 = vpack.c.b16 %v2087, %v2079
    %v2448 = vpack.c.b16 %v2088, %v2080
    %v2449 = vpack.c.b16 %v2089, %v2081
    %v2450 = vpack.c.b16 %v2090, %v2082
    %v2451 = vpack.c.b16 %v2091, %v2083
    %v2452 = vpack.c.b16 %v2092, %v2084
    %v2453 = vpack.c.b16 %v2093, %v2085
    %v2454 = vpack.c.b16 %v2094, %v2086
    %v2455 = vpack.c.b16 %v2103, %v2095
    %v2456 = vpack.c.b16 %v2104, %v2096
    %v2457 = vpack.c.b16 %v2105, %v2097
    %v2458 = vpack.c.b16 %v2106, %v2098
    %v2459 = vpack.c.b16 %v2107, %v2099
    %v2460 = vpack.c.b16 %v2108, %v2100
    %v2461 = vpack.c.b16 %v2109, %v2101
    %v2462 = vpack.c.b16 %v2110, %v2102
    %v2463 = vpack.c.b16 %v2119, %v2111
    %v2464 = vpack.c.b16 %v2120, %v2112
    %v2465 = vpack.c.b16 %v2121, %v2113
    %v2466 = vpack.c.b16 %v2122, %v2114
    %v2467 = vpack.c.b16 %v2123, %v2115
    %v2468 = vpack.c.b16 %v2124, %v2116
    %v2469 = vpack.c.b16 %v2125, %v2117
    %v2470 = vpack.c.b16 %v2126, %v2118
    %v2471 = vpack.c.b16 %v2135, %v2127
    %v2472 = vpack.c.b16 %v2136, %v2128
    %v2473 = vpack.c.b16 %v2137, %v2129
    %v2474 = vpack.c.b16 %v2138, %v2130
    %v2475 = vpack.c.b16 %v2139, %v2131
    %v2476 = vpack.c.b16 %v2140, %v2132
    %v2477 = vpack.c.b16 %v2141, %v2133
    %v2478 = vpack.c.b16 %v2142, %v2134
    %v2479 = vpack.c.b16 %v2151, %v2143
    %v2480 = vpack.c.b16 %v2152, %v2144
    %v2481 = vpack.c.b16 %v2153, %v2145
    %v2482 = vpack.c.b16 %v2154, %v2146
    %v2483 = vpack.c.b16 %v2155, %v2147
    %v2484 = vpack.c.b16 %v2156, %v2148
    %v2485 = vpack.c.b16 %v2157, %v2149
    %v2486 = vpack.c.b16 %v2158, %v2150
    %v2487 = vpack.c.b16 %v2167, %v2159
    %v2488 = vpack.c.b16 %v2168, %v2160
    %v2489 = vpack.c.b16 %v2169, %v2161
    %v2490 = vpack.c.b16 %v2170, %v2162
    %v2491 = vpack.c.b16 %v2171, %v2163
    %v2492 = vpack.c.b16 %v2172, %v2164
    %v2493 = vpack.c.b16 %v2173, %v2165
    %v2494 = vpack.c.b16 %v2174, %v2166
    %v2495 = vpack.c.b16 %v2183, %v2175
    %v2496 = vpack.c.b16 %v2184, %v2176
    %v2497 = vpack.c.b16 %v2185, %v2177
    %v2498 = vpack.c.b16 %v2186, %v2178
    %v2499 = vpack.c.b16 %v2187, %v2179
    %v2500 = vpack.c.b16 %v2188, %v2180
    %v2501 = vpack.c.b16 %v2189, %v2181
    %v2502 = vpack.c.b16 %v2190, %v2182
    %v2503 = vpack.c.b16 %v2199, %v2191
    %v2504 = vpack.c.b16 %v2200, %v2192
    %v2505 = vpack.c.b16 %v2201, %v2193
    %v2506 = vpack.c.b16 %v2202, %v2194
    %v2507 = vpack.c.b16 %v2203, %v2195
    %v2508 = vpack.c.b16 %v2204, %v2196
    %v2509 = vpack.c.b16 %v2205, %v2197
    %v2510 = vpack.c.b16 %v2206, %v2198
    %v2511 = vpack.c.b16 %v2215, %v2207
    %v2512 = vpack.c.b16 %v2216, %v2208
    %v2513 = vpack.c.b16 %v2217, %v2209
    %v2514 = vpack.c.b16 %v2218, %v2210
    %v2515 = vpack.c.b16 %v2219, %v2211
    %v2516 = vpack.c.b16 %v2220, %v2212
    %v2517 = vpack.c.b16 %v2221, %v2213
    %v2518 = vpack.c.b16 %v2222, %v2214
    %v2519 = vpack.c.b16 %v2231, %v2223
    %v2520 = vpack.c.b16 %v2232, %v2224
    %v2521 = vpack.c.b16 %v2233, %v2225
    %v2522 = vpack.c.b16 %v2234, %v2226
    %v2523 = vpack.c.b16 %v2235, %v2227
    %v2524 = vpack.c.b16 %v2236, %v2228
    %v2525 = vpack.c.b16 %v2237, %v2229
    %v2526 = vpack.c.b16 %v2238, %v2230
    %v2527 = vpack.c.b16 %v2247, %v2239
    %v2528 = vpack.c.b16 %v2248, %v2240
    %v2529 = vpack.c.b16 %v2249, %v2241
    %v2530 = vpack.c.b16 %v2250, %v2242
    %v2531 = vpack.c.b16 %v2251, %v2243
    %v2532 = vpack.c.b16 %v2252, %v2244
    %v2533 = vpack.c.b16 %v2253, %v2245
    %v2534 = vpack.c.b16 %v2254, %v2246
    %v2535 = vpack.c.b16 %v2263, %v2255
    %v2536 = vpack.c.b16 %v2264, %v2256
    %v2537 = vpack.c.b16 %v2265, %v2257
    %v2538 = vpack.c.b16 %v2266, %v2258
    %v2539 = vpack.c.b16 %v2267, %v2259
    %v2540 = vpack.c.b16 %v2268, %v2260
    %v2541 = vpack.c.b16 %v2269, %v2261
    %v2542 = vpack.c.b16 %v2270, %v2262
    %v2543 = vpack.c.b16 %v2279, %v2271
    %v2544 = vpack.c.b16 %v2280, %v2272
    %v2545 = vpack.c.b16 %v2281, %v2273
    %v2546 = vpack.c.b16 %v2282, %v2274
    %v2547 = vpack.c.b16 %v2283, %v2275
    %v2548 = vpack.c.b16 %v2284, %v2276
    %v2549 = vpack.c.b16 %v2285, %v2277
    %v2550 = vpack.c.b16 %v2286, %v2278
    %v2551 = vpack.c.b16 %v2295, %v2287
    %v2552 = vpack.c.b16 %v2296, %v2288
    %v2553 = vpack.c.b16 %v2297, %v2289
    %v2554 = vpack.c.b16 %v2298, %v2290
    %v2555 = vpack.c.b16 %v2299, %v2291
    %v2556 = vpack.c.b16 %v2300, %v2292
    %v2557 = vpack.c.b16 %v2301, %v2293
    %v2558 = vpack.c.b16 %v2302, %v2294
    %2815 = vmatprep.subr.bf16.mxu0 %v2304
    %2816 = vmatpush1.bf16.msra.mxu0 %v2303
    %2817 = vmatprep.subr.bf16.mxu0 %v2312
    %2818 = vmatpush1.bf16.msra.mxu0 %v2311
    %2819 = vmatprep.subr.bf16.mxu0 %v2320
    %2820 = vmatpush1.bf16.msra.mxu0 %v2319
    %2821 = vmatprep.subr.bf16.mxu0 %v2328
    %2822 = vmatpush1.bf16.msra.mxu0 %v2327
    %2823 = vmatprep.subr.bf16.mxu0 %v2336
    %2824 = vmatpush1.bf16.msra.mxu0 %v2335
    %2825 = vmatprep.subr.bf16.mxu0 %v2344
    %2826 = vmatpush1.bf16.msra.mxu0 %v2343
    %2827 = vmatprep.subr.bf16.mxu0 %v2352
    %2828 = vmatpush1.bf16.msra.mxu0 %v2351
    %2829 = vmatprep.subr.bf16.mxu0 %v2360
    %2830 = vmatpush1.bf16.msra.mxu0 %v2359
    %2831 = vmatprep.subr.bf16.mxu0 %v2368
    %2832 = vmatpush1.bf16.msra.mxu0 %v2367
    %2833 = vmatprep.subr.bf16.mxu0 %v2376
    %2834 = vmatpush1.bf16.msra.mxu0 %v2375
    %2835 = vmatprep.subr.bf16.mxu0 %v2384
    %2836 = vmatpush1.bf16.msra.mxu0 %v2383
    %2837 = vmatprep.subr.bf16.mxu0 %v2392
    %2838 = vmatpush1.bf16.msra.mxu0 %v2391
    %2839 = vmatprep.subr.bf16.mxu0 %v2400
    %2840 = vmatpush1.bf16.msra.mxu0 %v2399
    %2841 = vmatprep.subr.bf16.mxu0 %v2408
    %2842 = vmatpush1.bf16.msra.mxu0 %v2407
    %2843 = vmatprep.subr.bf16.mxu0 %v2416
    %2844 = vmatpush1.bf16.msra.mxu0 %v2415
    %2845 = vmatprep.subr.bf16.mxu0 %v2424
    %2846 = vmatpush1.bf16.msra.mxu0 %v2423
    %2847 = vmatprep.mubr.bf16.mxu0 %v1234
    %2848 = vmatmul.mubr.bf16.gmra.mrb[0].mxu0 %v1233
    %v2849 = vpop.f32.mrb[0].mxu0
    %v2850 = vadd.f32 %v1498, %v2849
    %v2851 = vpop.f32.mrb[0].mxu0
    %v2852 = vadd.f32 %v1502, %v2851
    %v2853 = vpop.f32.mrb[0].mxu0
    %v2854 = vpop.f32.mrb[0].mxu0
    %2855 = vdwg.mxu0
    %2856 = vmatprep.subr.bf16.mxu0 %v2432
    %2857 = vmatpush1.bf16.msra.mxu0 %v2431
    %2858 = vmatprep.subr.bf16.mxu0 %v2440
    %2859 = vmatpush1.bf16.msra.mxu0 %v2439
    %2860 = vmatprep.subr.bf16.mxu0 %v2448
    %2861 = vmatpush1.bf16.msra.mxu0 %v2447
    %2862 = vmatprep.subr.bf16.mxu0 %v2456
    %2863 = vmatpush1.bf16.msra.mxu0 %v2455
    %2864 = vmatprep.subr.bf16.mxu0 %v2464
    %2865 = vmatpush1.bf16.msra.mxu0 %v2463
    %2866 = vmatprep.subr.bf16.mxu0 %v2472
    %2867 = vmatpush1.bf16.msra.mxu0 %v2471
    %2868 = vmatprep.subr.bf16.mxu0 %v2480
    %2869 = vmatpush1.bf16.msra.mxu0 %v2479
    %2870 = vmatprep.subr.bf16.mxu0 %v2488
    %2871 = vmatpush1.bf16.msra.mxu0 %v2487
    %2872 = vmatprep.subr.bf16.mxu0 %v2496
    %2873 = vmatpush1.bf16.msra.mxu0 %v2495
    %2874 = vmatprep.subr.bf16.mxu0 %v2504
    %2875 = vmatpush1.bf16.msra.mxu0 %v2503
    %2876 = vmatprep.subr.bf16.mxu0 %v2512
    %2877 = vmatpush1.bf16.msra.mxu0 %v2511
    %2878 = vmatprep.subr.bf16.mxu0 %v2520
    %2879 = vmatpush1.bf16.msra.mxu0 %v2519
    %2880 = vmatprep.subr.bf16.mxu0 %v2528
    %2881 = vmatpush1.bf16.msra.mxu0 %v2527
    %2882 = vmatprep.subr.bf16.mxu0 %v2536
    %2883 = vmatpush1.bf16.msra.mxu0 %v2535
    %2884 = vmatprep.subr.bf16.mxu0 %v2544
    %2885 = vmatpush1.bf16.msra.mxu0 %v2543
    %2886 = vmatprep.subr.bf16.mxu0 %v2552
    %2887 = vmatpush1.bf16.msra.mxu0 %v2551
    %2888 = vmatprep.mubr.bf16.mxu0 %v1236
    %2889 = vmatmul.mubr.bf16.gmra.mrb[0].mxu0 %v1235
    %v2890 = vpop.f32.mrb[0].mxu0
    %v2891 = vadd.f32 %v2850, %v2890
    %v2892 = vpop.f32.mrb[0].mxu0
    %v2893 = vadd.f32 %v2852, %v2892
    %v2894 = vpop.f32.mrb[0].mxu0
    %v2895 = vpop.f32.mrb[0].mxu0
    %2896 = vdwg.mxu0
    %2897 = vmatprep.subr.bf16.mxu0 %v2306
    %2898 = vmatpush1.bf16.msra.mxu0 %v2305
    %2899 = vmatprep.subr.bf16.mxu0 %v2314
    %2900 = vmatpush1.bf16.msra.mxu0 %v2313
    %2901 = vmatprep.subr.bf16.mxu0 %v2322
    %2902 = vmatpush1.bf16.msra.mxu0 %v2321
    %2903 = vmatprep.subr.bf16.mxu0 %v2330
    %2904 = vmatpush1.bf16.msra.mxu0 %v2329
    %2905 = vmatprep.subr.bf16.mxu0 %v2338
    %2906 = vmatpush1.bf16.msra.mxu0 %v2337
    %2907 = vmatprep.subr.bf16.mxu0 %v2346
    %2908 = vmatpush1.bf16.msra.mxu0 %v2345
    %2909 = vmatprep.subr.bf16.mxu0 %v2354
    %2910 = vmatpush1.bf16.msra.mxu0 %v2353
    %2911 = vmatprep.subr.bf16.mxu0 %v2362
    %2912 = vmatpush1.bf16.msra.mxu0 %v2361
    %2913 = vmatprep.subr.bf16.mxu0 %v2370
    %2914 = vmatpush1.bf16.msra.mxu0 %v2369
    %2915 = vmatprep.subr.bf16.mxu0 %v2378
    %2916 = vmatpush1.bf16.msra.mxu0 %v2377
    %2917 = vmatprep.subr.bf16.mxu0 %v2386
    %2918 = vmatpush1.bf16.msra.mxu0 %v2385
    %2919 = vmatprep.subr.bf16.mxu0 %v2394
    %2920 = vmatpush1.bf16.msra.mxu0 %v2393
    %2921 = vmatprep.subr.bf16.mxu0 %v2402
    %2922 = vmatpush1.bf16.msra.mxu0 %v2401
    %2923 = vmatprep.subr.bf16.mxu0 %v2410
    %2924 = vmatpush1.bf16.msra.mxu0 %v2409
    %2925 = vmatprep.subr.bf16.mxu0 %v2418
    %2926 = vmatpush1.bf16.msra.mxu0 %v2417
    %2927 = vmatprep.subr.bf16.mxu0 %v2426
    %2928 = vmatpush1.bf16.msra.mxu0 %v2425
    %2929 = vmatprep.mubr.bf16.mxu0 %v1234
    %2930 = vmatmul.mubr.bf16.gmra.mrb[0].mxu0 %v1233
    %v2931 = vpop.f32.mrb[0].mxu0
    %v2932 = vadd.f32 %v1506, %v2931
    %v2933 = vpop.f32.mrb[0].mxu0
    %v2934 = vadd.f32 %v1510, %v2933
    %v2935 = vpop.f32.mrb[0].mxu0
    %v2936 = vpop.f32.mrb[0].mxu0
    %2937 = vdwg.mxu0
    %2938 = vmatprep.subr.bf16.mxu0 %v2434
    %2939 = vmatpush1.bf16.msra.mxu0 %v2433
    %2940 = vmatprep.subr.bf16.mxu0 %v2442
    %2941 = vmatpush1.bf16.msra.mxu0 %v2441
    %2942 = vmatprep.subr.bf16.mxu0 %v2450
    %2943 = vmatpush1.bf16.msra.mxu0 %v2449
    %2944 = vmatprep.subr.bf16.mxu0 %v2458
    %2945 = vmatpush1.bf16.msra.mxu0 %v2457
    %2946 = vmatprep.subr.bf16.mxu0 %v2466
    %2947 = vmatpush1.bf16.msra.mxu0 %v2465
    %2948 = vmatprep.subr.bf16.mxu0 %v2474
    %2949 = vmatpush1.bf16.msra.mxu0 %v2473
    %2950 = vmatprep.subr.bf16.mxu0 %v2482
    %2951 = vmatpush1.bf16.msra.mxu0 %v2481
    %2952 = vmatprep.subr.bf16.mxu0 %v2490
    %2953 = vmatpush1.bf16.msra.mxu0 %v2489
    %2954 = vmatprep.subr.bf16.mxu0 %v2498
    %2955 = vmatpush1.bf16.msra.mxu0 %v2497
    %2956 = vmatprep.subr.bf16.mxu0 %v2506
    %2957 = vmatpush1.bf16.msra.mxu0 %v2505
    %2958 = vmatprep.subr.bf16.mxu0 %v2514
    %2959 = vmatpush1.bf16.msra.mxu0 %v2513
    %2960 = vmatprep.subr.bf16.mxu0 %v2522
    %2961 = vmatpush1.bf16.msra.mxu0 %v2521
    %2962 = vmatprep.subr.bf16.mxu0 %v2530
    %2963 = vmatpush1.bf16.msra.mxu0 %v2529
    %2964 = vmatprep.subr.bf16.mxu0 %v2538
    %2965 = vmatpush1.bf16.msra.mxu0 %v2537
    %2966 = vmatprep.subr.bf16.mxu0 %v2546
    %2967 = vmatpush1.bf16.msra.mxu0 %v2545
    %2968 = vmatprep.subr.bf16.mxu0 %v2554
    %2969 = vmatpush1.bf16.msra.mxu0 %v2553
    %2970 = vmatprep.mubr.bf16.mxu0 %v1236
    %2971 = vmatmul.mubr.bf16.gmra.mrb[0].mxu0 %v1235
    %v2972 = vpop.f32.mrb[0].mxu0
    %v2973 = vadd.f32 %v2932, %v2972
    %v2974 = vpop.f32.mrb[0].mxu0
    %v2975 = vadd.f32 %v2934, %v2974
    %v2976 = vpop.f32.mrb[0].mxu0
    %v2977 = vpop.f32.mrb[0].mxu0
    %2978 = vdwg.mxu0
    %2979 = vmatprep.subr.bf16.mxu0 %v2308
    %2980 = vmatpush1.bf16.msra.mxu0 %v2307
    %2981 = vmatprep.subr.bf16.mxu0 %v2316
    %2982 = vmatpush1.bf16.msra.mxu0 %v2315
    %2983 = vmatprep.subr.bf16.mxu0 %v2324
    %2984 = vmatpush1.bf16.msra.mxu0 %v2323
    %2985 = vmatprep.subr.bf16.mxu0 %v2332
    %2986 = vmatpush1.bf16.msra.mxu0 %v2331
    %2987 = vmatprep.subr.bf16.mxu0 %v2340
    %2988 = vmatpush1.bf16.msra.mxu0 %v2339
    %2989 = vmatprep.subr.bf16.mxu0 %v2348
    %2990 = vmatpush1.bf16.msra.mxu0 %v2347
    %2991 = vmatprep.subr.bf16.mxu0 %v2356
    %2992 = vmatpush1.bf16.msra.mxu0 %v2355
    %2993 = vmatprep.subr.bf16.mxu0 %v2364
    %2994 = vmatpush1.bf16.msra.mxu0 %v2363
    %2995 = vmatprep.subr.bf16.mxu0 %v2372
    %2996 = vmatpush1.bf16.msra.mxu0 %v2371
    %2997 = vmatprep.subr.bf16.mxu0 %v2380
    %2998 = vmatpush1.bf16.msra.mxu0 %v2379
    %2999 = vmatprep.subr.bf16.mxu0 %v2388
    %3000 = vmatpush1.bf16.msra.mxu0 %v2387
    %3001 = vmatprep.subr.bf16.mxu0 %v2396
    %3002 = vmatpush1.bf16.msra.mxu0 %v2395
    %3003 = vmatprep.subr.bf16.mxu0 %v2404
    %3004 = vmatpush1.bf16.msra.mxu0 %v2403
    %3005 = vmatprep.subr.bf16.mxu0 %v2412
    %3006 = vmatpush1.bf16.msra.mxu0 %v2411
    %3007 = vmatprep.subr.bf16.mxu0 %v2420
    %3008 = vmatpush1.bf16.msra.mxu0 %v2419
    %3009 = vmatprep.subr.bf16.mxu0 %v2428
    %3010 = vmatpush1.bf16.msra.mxu0 %v2427
    %3011 = vmatprep.mubr.bf16.mxu0 %v1234
    %3012 = vmatmul.mubr.bf16.gmra.mrb[0].mxu0 %v1233
    %v3013 = vpop.f32.mrb[0].mxu0
    %v3014 = vadd.f32 %v1514, %v3013
    %v3015 = vpop.f32.mrb[0].mxu0
    %v3016 = vadd.f32 %v1518, %v3015
    %v3017 = vpop.f32.mrb[0].mxu0
    %v3018 = vpop.f32.mrb[0].mxu0
    %3019 = vdwg.mxu0
    %3020 = vmatprep.subr.bf16.mxu0 %v2436
    %3021 = vmatpush1.bf16.msra.mxu0 %v2435
    %3022 = vmatprep.subr.bf16.mxu0 %v2444
    %3023 = vmatpush1.bf16.msra.mxu0 %v2443
    %3024 = vmatprep.subr.bf16.mxu0 %v2452
    %3025 = vmatpush1.bf16.msra.mxu0 %v2451
    %3026 = vmatprep.subr.bf16.mxu0 %v2460
    %3027 = vmatpush1.bf16.msra.mxu0 %v2459
    %3028 = vmatprep.subr.bf16.mxu0 %v2468
    %3029 = vmatpush1.bf16.msra.mxu0 %v2467
    %3030 = vmatprep.subr.bf16.mxu0 %v2476
    %3031 = vmatpush1.bf16.msra.mxu0 %v2475
    %3032 = vmatprep.subr.bf16.mxu0 %v2484
    %3033 = vmatpush1.bf16.msra.mxu0 %v2483
    %3034 = vmatprep.subr.bf16.mxu0 %v2492
    %3035 = vmatpush1.bf16.msra.mxu0 %v2491
    %3036 = vmatprep.subr.bf16.mxu0 %v2500
    %3037 = vmatpush1.bf16.msra.mxu0 %v2499
    %3038 = vmatprep.subr.bf16.mxu0 %v2508
    %3039 = vmatpush1.bf16.msra.mxu0 %v2507
    %3040 = vmatprep.subr.bf16.mxu0 %v2516
    %3041 = vmatpush1.bf16.msra.mxu0 %v2515
    %3042 = vmatprep.subr.bf16.mxu0 %v2524
    %3043 = vmatpush1.bf16.msra.mxu0 %v2523
    %3044 = vmatprep.subr.bf16.mxu0 %v2532
    %3045 = vmatpush1.bf16.msra.mxu0 %v2531
    %3046 = vmatprep.subr.bf16.mxu0 %v2540
    %3047 = vmatpush1.bf16.msra.mxu0 %v2539
    %3048 = vmatprep.subr.bf16.mxu0 %v2548
    %3049 = vmatpush1.bf16.msra.mxu0 %v2547
    %3050 = vmatprep.subr.bf16.mxu0 %v2556
    %3051 = vmatpush1.bf16.msra.mxu0 %v2555
    %3052 = vmatprep.mubr.bf16.mxu0 %v1236
    %3053 = vmatmul.mubr.bf16.gmra.mrb[0].mxu0 %v1235
    %v3054 = vpop.f32.mrb[0].mxu0
    %v3055 = vadd.f32 %v3014, %v3054
    %v3056 = vpop.f32.mrb[0].mxu0
    %v3057 = vadd.f32 %v3016, %v3056
    %v3058 = vpop.f32.mrb[0].mxu0
    %v3059 = vpop.f32.mrb[0].mxu0
    %3060 = vdwg.mxu0
    %3061 = vmatprep.subr.bf16.mxu0 %v2310
    %3062 = vmatpush1.bf16.msra.mxu0 %v2309
    %3063 = vmatprep.subr.bf16.mxu0 %v2318
    %3064 = vmatpush1.bf16.msra.mxu0 %v2317
    %3065 = vmatprep.subr.bf16.mxu0 %v2326
    %3066 = vmatpush1.bf16.msra.mxu0 %v2325
    %3067 = vmatprep.subr.bf16.mxu0 %v2334
    %3068 = vmatpush1.bf16.msra.mxu0 %v2333
    %3069 = vmatprep.subr.bf16.mxu0 %v2342
    %3070 = vmatpush1.bf16.msra.mxu0 %v2341
    %3071 = vmatprep.subr.bf16.mxu0 %v2350
    %3072 = vmatpush1.bf16.msra.mxu0 %v2349
    %3073 = vmatprep.subr.bf16.mxu0 %v2358
    %3074 = vmatpush1.bf16.msra.mxu0 %v2357
    %3075 = vmatprep.subr.bf16.mxu0 %v2366
    %3076 = vmatpush1.bf16.msra.mxu0 %v2365
    %3077 = vmatprep.subr.bf16.mxu0 %v2374
    %3078 = vmatpush1.bf16.msra.mxu0 %v2373
    %3079 = vmatprep.subr.bf16.mxu0 %v2382
    %3080 = vmatpush1.bf16.msra.mxu0 %v2381
    %3081 = vmatprep.subr.bf16.mxu0 %v2390
    %3082 = vmatpush1.bf16.msra.mxu0 %v2389
    %3083 = vmatprep.subr.bf16.mxu0 %v2398
    %3084 = vmatpush1.bf16.msra.mxu0 %v2397
    %3085 = vmatprep.subr.bf16.mxu0 %v2406
    %3086 = vmatpush1.bf16.msra.mxu0 %v2405
    %3087 = vmatprep.subr.bf16.mxu0 %v2414
    %3088 = vmatpush1.bf16.msra.mxu0 %v2413
    %3089 = vmatprep.subr.bf16.mxu0 %v2422
    %3090 = vmatpush1.bf16.msra.mxu0 %v2421
    %3091 = vmatprep.subr.bf16.mxu0 %v2430
    %3092 = vmatpush1.bf16.msra.mxu0 %v2429
    %3093 = vmatprep.mubr.bf16.mxu0 %v1234
    %3094 = vmatmul.mubr.bf16.gmra.mrb[0].mxu0 %v1233
    %v3095 = vpop.f32.mrb[0].mxu0
    %v3096 = vadd.f32 %v1522, %v3095
    %v3097 = vpop.f32.mrb[0].mxu0
    %v3098 = vadd.f32 %v1526, %v3097
    %v3099 = vpop.f32.mrb[0].mxu0
    %v3100 = vpop.f32.mrb[0].mxu0
    %3101 = vdwg.mxu0
    %3102 = vmatprep.subr.bf16.mxu0 %v2438
    %3103 = vmatpush1.bf16.msra.mxu0 %v2437
    %3104 = vmatprep.subr.bf16.mxu0 %v2446
    %3105 = vmatpush1.bf16.msra.mxu0 %v2445
    %3106 = vmatprep.subr.bf16.mxu0 %v2454
    %3107 = vmatpush1.bf16.msra.mxu0 %v2453
    %3108 = vmatprep.subr.bf16.mxu0 %v2462
    %3109 = vmatpush1.bf16.msra.mxu0 %v2461
    %3110 = vmatprep.subr.bf16.mxu0 %v2470
    %3111 = vmatpush1.bf16.msra.mxu0 %v2469
    %3112 = vmatprep.subr.bf16.mxu0 %v2478
    %3113 = vmatpush1.bf16.msra.mxu0 %v2477
    %3114 = vmatprep.subr.bf16.mxu0 %v2486
    %3115 = vmatpush1.bf16.msra.mxu0 %v2485
    %3116 = vmatprep.subr.bf16.mxu0 %v2494
    %3117 = vmatpush1.bf16.msra.mxu0 %v2493
    %3118 = vmatprep.subr.bf16.mxu0 %v2502
    %3119 = vmatpush1.bf16.msra.mxu0 %v2501
    %3120 = vmatprep.subr.bf16.mxu0 %v2510
    %3121 = vmatpush1.bf16.msra.mxu0 %v2509
    %3122 = vmatprep.subr.bf16.mxu0 %v2518
    %3123 = vmatpush1.bf16.msra.mxu0 %v2517
    %3124 = vmatprep.subr.bf16.mxu0 %v2526
    %3125 = vmatpush1.bf16.msra.mxu0 %v2525
    %3126 = vmatprep.subr.bf16.mxu0 %v2534
    %3127 = vmatpush1.bf16.msra.mxu0 %v2533
    %3128 = vmatprep.subr.bf16.mxu0 %v2542
    %3129 = vmatpush1.bf16.msra.mxu0 %v2541
    %3130 = vmatprep.subr.bf16.mxu0 %v2550
    %3131 = vmatpush1.bf16.msra.mxu0 %v2549
    %3132 = vmatprep.subr.bf16.mxu0 %v2558
    %3133 = vmatpush1.bf16.msra.mxu0 %v2557
    %3134 = vmatprep.mubr.bf16.mxu0 %v1236
    %3135 = vmatmul.mubr.bf16.gmra.mrb[0].mxu0 %v1235
    %v3136 = vpop.f32.mrb[0].mxu0
    %v3137 = vadd.f32 %v3096, %v3136
    %v3138 = vpop.f32.mrb[0].mxu0
    %v3139 = vadd.f32 %v3098, %v3138
    %v3140 = vpop.f32.mrb[0].mxu0
    %v3141 = vpop.f32.mrb[0].mxu0
    %3142 = vdwg.mxu0
    %v3143 = vrot.slane %v2891, 4
    %v3144 = vadd.f32 %v2891, %v3143
    %v3145 = vrot.slane %v3144, 2
    %v3146 = vadd.f32 %v3144, %v3145
    %v3147 = vrot.slane %v3146, 1
    %v3148 = vadd.f32 %v3146, %v3147
    %v3149 = vrot.slane %v2893, 4
    %v3150 = vadd.f32 %v2893, %v3149
    %v3151 = vrot.slane %v3150, 2
    %v3152 = vadd.f32 %v3150, %v3151
    %v3153 = vrot.slane %v3152, 1
    %v3154 = vadd.f32 %v3152, %v3153
    %v3155 = vrot.slane %v2973, 4
    %v3156 = vadd.f32 %v2973, %v3155
    %v3157 = vrot.slane %v3156, 2
    %v3158 = vadd.f32 %v3156, %v3157
    %v3159 = vrot.slane %v3158, 1
    %v3160 = vadd.f32 %v3158, %v3159
    %v3161 = vrot.slane %v2975, 4
    %v3162 = vadd.f32 %v2975, %v3161
    %v3163 = vrot.slane %v3162, 2
    %v3164 = vadd.f32 %v3162, %v3163
    %v3165 = vrot.slane %v3164, 1
    %v3166 = vadd.f32 %v3164, %v3165
    %v3167 = vrot.slane %v3055, 4
    %v3168 = vadd.f32 %v3055, %v3167
    %v3169 = vrot.slane %v3168, 2
    %v3170 = vadd.f32 %v3168, %v3169
    %v3171 = vrot.slane %v3170, 1
    %v3172 = vadd.f32 %v3170, %v3171
    %v3173 = vrot.slane %v3057, 4
    %v3174 = vadd.f32 %v3057, %v3173
    %v3175 = vrot.slane %v3174, 2
    %v3176 = vadd.f32 %v3174, %v3175
    %v3177 = vrot.slane %v3176, 1
    %v3178 = vadd.f32 %v3176, %v3177
    %v3179 = vrot.slane %v3137, 4
    %v3180 = vadd.f32 %v3137, %v3179
    %v3181 = vrot.slane %v3180, 2
    %v3182 = vadd.f32 %v3180, %v3181
    %v3183 = vrot.slane %v3182, 1
    %v3184 = vadd.f32 %v3182, %v3183
    %v3185 = vrot.slane %v3139, 4
    %v3186 = vadd.f32 %v3139, %v3185
    %v3187 = vrot.slane %v3186, 2
    %v3188 = vadd.f32 %v3186, %v3187
    %v3189 = vrot.slane %v3188, 1
    %v3190 = vadd.f32 %v3188, %v3189
    %v3191 = vmul.f32 %v3148, %v542
    %v3192 = vmul.f32 %v3154, %v542
    %v3193 = vmul.f32 %v3160, %v542
    %v3194 = vmul.f32 %v3166, %v542
    %v3195 = vmul.f32 %v3172, %v542
    %v3196 = vmul.f32 %v3178, %v542
    %v3197 = vmul.f32 %v3184, %v542
    %v3198 = vmul.f32 %v3190, %v542
    %v3199 = vsub.f32 %v2891, %v3191
    %v3200 = vsub.f32 %v2893, %v3192
    %v3201 = vsub.f32 %v2973, %v3193
    %v3202 = vsub.f32 %v2975, %v3194
    %v3203 = vsub.f32 %v3055, %v3195
    %v3204 = vsub.f32 %v3057, %v3196
    %v3205 = vsub.f32 %v3137, %v3197
    %v3206 = vsub.f32 %v3139, %v3198
    %v3207 = vmul.f32 %v3199, %v3199
    %v3208 = vmul.f32 %v3200, %v3200
    %v3209 = vmul.f32 %v3201, %v3201
    %v3210 = vmul.f32 %v3202, %v3202
    %v3211 = vmul.f32 %v3203, %v3203
    %v3212 = vmul.f32 %v3204, %v3204
    %v3213 = vmul.f32 %v3205, %v3205
    %v3214 = vmul.f32 %v3206, %v3206
    %v3215 = vrot.slane %v3207, 4
    %v3216 = vadd.f32 %v3207, %v3215
    %v3217 = vrot.slane %v3216, 2
    %v3218 = vadd.f32 %v3216, %v3217
    %v3219 = vrot.slane %v3218, 1
    %v3220 = vadd.f32 %v3218, %v3219
    %v3221 = vrot.slane %v3208, 4
    %v3222 = vadd.f32 %v3208, %v3221
    %v3223 = vrot.slane %v3222, 2
    %v3224 = vadd.f32 %v3222, %v3223
    %v3225 = vrot.slane %v3224, 1
    %v3226 = vadd.f32 %v3224, %v3225
    %v3227 = vrot.slane %v3209, 4
    %v3228 = vadd.f32 %v3209, %v3227
    %v3229 = vrot.slane %v3228, 2
    %v3230 = vadd.f32 %v3228, %v3229
    %v3231 = vrot.slane %v3230, 1
    %v3232 = vadd.f32 %v3230, %v3231
    %v3233 = vrot.slane %v3210, 4
    %v3234 = vadd.f32 %v3210, %v3233
    %v3235 = vrot.slane %v3234, 2
    %v3236 = vadd.f32 %v3234, %v3235
    %v3237 = vrot.slane %v3236, 1
    %v3238 = vadd.f32 %v3236, %v3237
    %v3239 = vrot.slane %v3211, 4
    %v3240 = vadd.f32 %v3211, %v3239
    %v3241 = vrot.slane %v3240, 2
    %v3242 = vadd.f32 %v3240, %v3241
    %v3243 = vrot.slane %v3242, 1
    %v3244 = vadd.f32 %v3242, %v3243
    %v3245 = vrot.slane %v3212, 4
    %v3246 = vadd.f32 %v3212, %v3245
    %v3247 = vrot.slane %v3246, 2
    %v3248 = vadd.f32 %v3246, %v3247
    %v3249 = vrot.slane %v3248, 1
    %v3250 = vadd.f32 %v3248, %v3249
    %v3251 = vrot.slane %v3213, 4
    %v3252 = vadd.f32 %v3213, %v3251
    %v3253 = vrot.slane %v3252, 2
    %v3254 = vadd.f32 %v3252, %v3253
    %v3255 = vrot.slane %v3254, 1
    %v3256 = vadd.f32 %v3254, %v3255
    %v3257 = vrot.slane %v3214, 4
    %v3258 = vadd.f32 %v3214, %v3257
    %v3259 = vrot.slane %v3258, 2
    %v3260 = vadd.f32 %v3258, %v3259
    %v3261 = vrot.slane %v3260, 1
    %v3262 = vadd.f32 %v3260, %v3261
    %v3263 = vmul.f32 %v3220, %v542
    %v3264 = vmul.f32 %v3226, %v542
    %v3265 = vmul.f32 %v3232, %v542
    %v3266 = vmul.f32 %v3238, %v542
    %v3267 = vmul.f32 %v3244, %v542
    %v3268 = vmul.f32 %v3250, %v542
    %v3269 = vmul.f32 %v3256, %v542
    %v3270 = vmul.f32 %v3262, %v542
    %v3271 = vadd.f32 %v3263, 0.8
    %v3272 = vadd.f32 %v3264, 0.8
    %v3273 = vadd.f32 %v3265, 0.8
    %v3274 = vadd.f32 %v3266, 0.8
    %v3275 = vadd.f32 %v3267, 0.8
    %v3276 = vadd.f32 %v3268, 0.8
    %v3277 = vadd.f32 %v3269, 0.8
    %v3278 = vadd.f32 %v3270, 0.8
    %v3279 = vrsqrt.pop %v3271
    %v3280 = vrsqrt.pop %v3272
    %v3281 = vrsqrt.pop %v3273
    %v3282 = vrsqrt.pop %v3274
    %v3283 = vrsqrt.pop %v3275
    %v3284 = vrsqrt.pop %v3276
    %v3285 = vrsqrt.pop %v3277
    %v3286 = vrsqrt.pop %v3278
    %v3287 = vmul.f32 %v3199, %v3279
    %v3288 = vmul.f32 %v3200, %v3280
    %v3289 = vmul.f32 %v3201, %v3281
    %v3290 = vmul.f32 %v3202, %v3282
    %v3291 = vmul.f32 %v3203, %v3283
    %v3292 = vmul.f32 %v3204, %v3284
    %v3293 = vmul.f32 %v3205, %v3285
    %v3294 = vmul.f32 %v3206, %v3286
    %v3295 = vld [vmem:[#allocation23] sm:$0xff]
    %v3297 = vlaneseq
    %v3298 = vshrl.u32 %v3297, 7
    %v3299 = vsub.s32 0, %v3298
    %v3300 = vrot.slane %v3295, %v3299
    %v3301 = vlaneseq
    %v3302 = vshrl.u32 %v3301, 7
    %v3303 = vsub.s32 1, %v3302
    %v3304 = vrot.slane %v3295, %v3303
    %v3305 = vlaneseq
    %v3306 = vshrl.u32 %v3305, 7
    %v3307 = vsub.s32 2, %v3306
    %v3308 = vrot.slane %v3295, %v3307
    %v3309 = vlaneseq
    %v3310 = vshrl.u32 %v3309, 7
    %v3311 = vsub.s32 3, %v3310
    %v3312 = vrot.slane %v3295, %v3311
    %v3313 = vlaneseq
    %v3314 = vshrl.u32 %v3313, 7
    %v3315 = vsub.s32 4, %v3314
    %v3316 = vrot.slane %v3295, %v3315
    %v3317 = vlaneseq
    %v3318 = vshrl.u32 %v3317, 7
    %v3319 = vsub.s32 5, %v3318
    %v3320 = vrot.slane %v3295, %v3319
    %v3321 = vlaneseq
    %v3322 = vshrl.u32 %v3321, 7
    %v3323 = vsub.s32 6, %v3322
    %v3324 = vrot.slane %v3295, %v3323
    %v3325 = vlaneseq
    %v3326 = vshrl.u32 %v3325, 7
    %v3327 = vsub.s32 7, %v3326
    %v3328 = vrot.slane %v3295, %v3327
    %v3337 = vmul.f32 %v3287, %v3300
    %v3338 = vmul.f32 %v3288, %v3304
    %v3339 = vmul.f32 %v3289, %v3308
    %v3340 = vmul.f32 %v3290, %v3312
    %v3341 = vmul.f32 %v3291, %v3316
    %v3342 = vmul.f32 %v3292, %v3320
    %v3343 = vmul.f32 %v3293, %v3324
    %v3344 = vmul.f32 %v3294, %v3328
    %v3345 = vld [vmem:[#allocation25] sm:$0xff]
    %v3347 = vlaneseq
    %v3348 = vshrl.u32 %v3347, 7
    %v3349 = vsub.s32 0, %v3348
    %v3350 = vrot.slane %v3345, %v3349
    %v3351 = vlaneseq
    %v3352 = vshrl.u32 %v3351, 7
    %v3353 = vsub.s32 1, %v3352
    %v3354 = vrot.slane %v3345, %v3353
    %v3355 = vlaneseq
    %v3356 = vshrl.u32 %v3355, 7
    %v3357 = vsub.s32 2, %v3356
    %v3358 = vrot.slane %v3345, %v3357
    %v3359 = vlaneseq
    %v3360 = vshrl.u32 %v3359, 7
    %v3361 = vsub.s32 3, %v3360
    %v3362 = vrot.slane %v3345, %v3361
    %v3363 = vlaneseq
    %v3364 = vshrl.u32 %v3363, 7
    %v3365 = vsub.s32 4, %v3364
    %v3366 = vrot.slane %v3345, %v3365
    %v3367 = vlaneseq
    %v3368 = vshrl.u32 %v3367, 7
    %v3369 = vsub.s32 5, %v3368
    %v3370 = vrot.slane %v3345, %v3369
    %v3371 = vlaneseq
    %v3372 = vshrl.u32 %v3371, 7
    %v3373 = vsub.s32 6, %v3372
    %v3374 = vrot.slane %v3345, %v3373
    %v3375 = vlaneseq
    %v3376 = vshrl.u32 %v3375, 7
    %v3377 = vsub.s32 7, %v3376
    %v3378 = vrot.slane %v3345, %v3377
    %v3387 = vadd.f32 %v3337, %v3350
    %v3388 = vadd.f32 %v3338, %v3354
    %v3389 = vadd.f32 %v3339, %v3358
    %v3390 = vadd.f32 %v3340, %v3362
    %v3391 = vadd.f32 %v3341, %v3366
    %v3392 = vadd.f32 %v3342, %v3370
    %v3393 = vadd.f32 %v3343, %v3374
    %v3394 = vadd.f32 %v3344, %v3378
    %vm3395 = vcmp.gt.f32.partialorder %v3387, 0.0
    %vm3396 = vcmp.gt.f32.partialorder %v3388, 0.0
    %vm3397 = vcmp.gt.f32.partialorder %v3389, 0.0
    %vm3398 = vcmp.gt.f32.partialorder %v3390, 0.0
    %vm3399 = vcmp.gt.f32.partialorder %v3391, 0.0
    %vm3400 = vcmp.gt.f32.partialorder %v3392, 0.0
    %vm3401 = vcmp.gt.f32.partialorder %v3393, 0.0
    %vm3402 = vcmp.gt.f32.partialorder %v3394, 0.0
    %v3403 = vmul.f32 %v3387, 0.2
    %v3404 = vmul.f32 %v3388, 0.2
    %v3405 = vmul.f32 %v3389, 0.2
    %v3406 = vmul.f32 %v3390, 0.2
    %v3407 = vmul.f32 %v3391, 0.2
    %v3408 = vmul.f32 %v3392, 0.2
    %v3409 = vmul.f32 %v3393, 0.2
    %v3410 = vmul.f32 %v3394, 0.2
    %v3411 = vsel %vm3395, %v3387, %v3403
    %v3412 = vsel %vm3396, %v3388, %v3404
    %v3413 = vsel %vm3397, %v3389, %v3405
    %v3414 = vsel %vm3398, %v3390, %v3406
    %v3415 = vsel %vm3399, %v3391, %v3407
    %v3416 = vsel %vm3400, %v3392, %v3408
    %v3417 = vsel %vm3401, %v3393, %v3409
    %v3418 = vsel %vm3402, %v3394, %v3410
    %v3419 = vpack.c.bf16 %v3411, %v3411
    %v3420 = vpack.c.bf16 %v3412, %v3412
    %v3421 = vpack.c.bf16 %v3413, %v3413
    %v3422 = vpack.c.bf16 %v3414, %v3414
    %v3423 = vpack.c.bf16 %v3415, %v3415
    %v3424 = vpack.c.bf16 %v3416, %v3416
    %v3425 = vpack.c.bf16 %v3417, %v3417
    %v3426 = vpack.c.bf16 %v3418, %v3418
    %v3427 = vld [vmem:[#allocation26] sm:$0xff]
    %v3428 = vld [vmem:[#allocation26 + $0x8] sm:$0xff]
    %v3429 = vld [vmem:[#allocation26 + $0x10] sm:$0xff]
    %v3430 = vld [vmem:[#allocation26 + $0x18] sm:$0xff]
    %v3431 = vld [vmem:[#allocation26 + $0x20] sm:$0xff]
    %v3432 = vld [vmem:[#allocation26 + $0x28] sm:$0xff]
    %v3433 = vld [vmem:[#allocation26 + $0x30] sm:$0xff]
    %v3434 = vld [vmem:[#allocation26 + $0x38] sm:$0xff]
    %v3435 = vld [vmem:[#allocation26 + $0x40] sm:$0xff]
    %v3436 = vld [vmem:[#allocation26 + $0x48] sm:$0xff]
    %v3437 = vld [vmem:[#allocation26 + $0x50] sm:$0xff]
    %v3438 = vld [vmem:[#allocation26 + $0x58] sm:$0xff]
    %v3439 = vld [vmem:[#allocation26 + $0x60] sm:$0xff]
    %v3440 = vld [vmem:[#allocation26 + $0x68] sm:$0xff]
    %v3441 = vld [vmem:[#allocation26 + $0x70] sm:$0xff]
    %v3442 = vld [vmem:[#allocation26 + $0x78] sm:$0xff]
    %v3443 = vld [vmem:[#allocation26 + $0x80] sm:$0xff]
    %v3444 = vld [vmem:[#allocation26 + $0x88] sm:$0xff]
    %v3445 = vld [vmem:[#allocation26 + $0x90] sm:$0xff]
    %v3446 = vld [vmem:[#allocation26 + $0x98] sm:$0xff]
    %v3447 = vld [vmem:[#allocation26 + $0xa0] sm:$0xff]
    %v3448 = vld [vmem:[#allocation26 + $0xa8] sm:$0xff]
    %v3449 = vld [vmem:[#allocation26 + $0xb0] sm:$0xff]
    %v3450 = vld [vmem:[#allocation26 + $0xb8] sm:$0xff]
    %v3451 = vld [vmem:[#allocation26 + $0xc0] sm:$0xff]
    %v3452 = vld [vmem:[#allocation26 + $0xc8] sm:$0xff]
    %v3453 = vld [vmem:[#allocation26 + $0xd0] sm:$0xff]
    %v3454 = vld [vmem:[#allocation26 + $0xd8] sm:$0xff]
    %v3455 = vld [vmem:[#allocation26 + $0xe0] sm:$0xff]
    %v3456 = vld [vmem:[#allocation26 + $0xe8] sm:$0xff]
    %v3457 = vld [vmem:[#allocation26 + $0xf0] sm:$0xff]
    %v3458 = vld [vmem:[#allocation26 + $0xf8] sm:$0xff]
    %v3459 = vld [vmem:[#allocation26 + $0x100] sm:$0xff]
    %v3460 = vld [vmem:[#allocation26 + $0x108] sm:$0xff]
    %v3461 = vld [vmem:[#allocation26 + $0x110] sm:$0xff]
    %v3462 = vld [vmem:[#allocation26 + $0x118] sm:$0xff]
    %v3463 = vld [vmem:[#allocation26 + $0x120] sm:$0xff]
    %v3464 = vld [vmem:[#allocation26 + $0x128] sm:$0xff]
    %v3465 = vld [vmem:[#allocation26 + $0x130] sm:$0xff]
    %v3466 = vld [vmem:[#allocation26 + $0x138] sm:$0xff]
    %v3467 = vld [vmem:[#allocation26 + $0x140] sm:$0xff]
    %v3468 = vld [vmem:[#allocation26 + $0x148] sm:$0xff]
    %v3469 = vld [vmem:[#allocation26 + $0x150] sm:$0xff]
    %v3470 = vld [vmem:[#allocation26 + $0x158] sm:$0xff]
    %v3471 = vld [vmem:[#allocation26 + $0x160] sm:$0xff]
    %v3472 = vld [vmem:[#allocation26 + $0x168] sm:$0xff]
    %v3473 = vld [vmem:[#allocation26 + $0x170] sm:$0xff]
    %v3474 = vld [vmem:[#allocation26 + $0x178] sm:$0xff]
    %v3475 = vld [vmem:[#allocation26 + $0x180] sm:$0xff]
    %v3476 = vld [vmem:[#allocation26 + $0x188] sm:$0xff]
    %v3477 = vld [vmem:[#allocation26 + $0x190] sm:$0xff]
    %v3478 = vld [vmem:[#allocation26 + $0x198] sm:$0xff]
    %v3479 = vld [vmem:[#allocation26 + $0x1a0] sm:$0xff]
    %v3480 = vld [vmem:[#allocation26 + $0x1a8] sm:$0xff]
    %v3481 = vld [vmem:[#allocation26 + $0x1b0] sm:$0xff]
    %v3482 = vld [vmem:[#allocation26 + $0x1b8] sm:$0xff]
    %v3483 = vld [vmem:[#allocation26 + $0x1c0] sm:$0xff]
    %v3484 = vld [vmem:[#allocation26 + $0x1c8] sm:$0xff]
    %v3485 = vld [vmem:[#allocation26 + $0x1d0] sm:$0xff]
    %v3486 = vld [vmem:[#allocation26 + $0x1d8] sm:$0xff]
    %v3487 = vld [vmem:[#allocation26 + $0x1e0] sm:$0xff]
    %v3488 = vld [vmem:[#allocation26 + $0x1e8] sm:$0xff]
    %v3489 = vld [vmem:[#allocation26 + $0x1f0] sm:$0xff]
    %v3490 = vld [vmem:[#allocation26 + $0x1f8] sm:$0xff]
    %v3491 = vld [vmem:[#allocation26 + $0x200] sm:$0xff]
    %v3492 = vld [vmem:[#allocation26 + $0x208] sm:$0xff]
    %v3493 = vld [vmem:[#allocation26 + $0x210] sm:$0xff]
    %v3494 = vld [vmem:[#allocation26 + $0x218] sm:$0xff]
    %v3495 = vld [vmem:[#allocation26 + $0x220] sm:$0xff]
    %v3496 = vld [vmem:[#allocation26 + $0x228] sm:$0xff]
    %v3497 = vld [vmem:[#allocation26 + $0x230] sm:$0xff]
    %v3498 = vld [vmem:[#allocation26 + $0x238] sm:$0xff]
    %v3499 = vld [vmem:[#allocation26 + $0x240] sm:$0xff]
    %v3500 = vld [vmem:[#allocation26 + $0x248] sm:$0xff]
    %v3501 = vld [vmem:[#allocation26 + $0x250] sm:$0xff]
    %v3502 = vld [vmem:[#allocation26 + $0x258] sm:$0xff]
    %v3503 = vld [vmem:[#allocation26 + $0x260] sm:$0xff]
    %v3504 = vld [vmem:[#allocation26 + $0x268] sm:$0xff]
    %v3505 = vld [vmem:[#allocation26 + $0x270] sm:$0xff]
    %v3506 = vld [vmem:[#allocation26 + $0x278] sm:$0xff]
    %v3507 = vld [vmem:[#allocation26 + $0x280] sm:$0xff]
    %v3508 = vld [vmem:[#allocation26 + $0x288] sm:$0xff]
    %v3509 = vld [vmem:[#allocation26 + $0x290] sm:$0xff]
    %v3510 = vld [vmem:[#allocation26 + $0x298] sm:$0xff]
    %v3511 = vld [vmem:[#allocation26 + $0x2a0] sm:$0xff]
    %v3512 = vld [vmem:[#allocation26 + $0x2a8] sm:$0xff]
    %v3513 = vld [vmem:[#allocation26 + $0x2b0] sm:$0xff]
    %v3514 = vld [vmem:[#allocation26 + $0x2b8] sm:$0xff]
    %v3515 = vld [vmem:[#allocation26 + $0x2c0] sm:$0xff]
    %v3516 = vld [vmem:[#allocation26 + $0x2c8] sm:$0xff]
    %v3517 = vld [vmem:[#allocation26 + $0x2d0] sm:$0xff]
    %v3518 = vld [vmem:[#allocation26 + $0x2d8] sm:$0xff]
    %v3519 = vld [vmem:[#allocation26 + $0x2e0] sm:$0xff]
    %v3520 = vld [vmem:[#allocation26 + $0x2e8] sm:$0xff]
    %v3521 = vld [vmem:[#allocation26 + $0x2f0] sm:$0xff]
    %v3522 = vld [vmem:[#allocation26 + $0x2f8] sm:$0xff]
    %v3523 = vld [vmem:[#allocation26 + $0x300] sm:$0xff]
    %v3524 = vld [vmem:[#allocation26 + $0x308] sm:$0xff]
    %v3525 = vld [vmem:[#allocation26 + $0x310] sm:$0xff]
    %v3526 = vld [vmem:[#allocation26 + $0x318] sm:$0xff]
    %v3527 = vld [vmem:[#allocation26 + $0x320] sm:$0xff]
    %v3528 = vld [vmem:[#allocation26 + $0x328] sm:$0xff]
    %v3529 = vld [vmem:[#allocation26 + $0x330] sm:$0xff]
    %v3530 = vld [vmem:[#allocation26 + $0x338] sm:$0xff]
    %v3531 = vld [vmem:[#allocation26 + $0x340] sm:$0xff]
    %v3532 = vld [vmem:[#allocation26 + $0x348] sm:$0xff]
    %v3533 = vld [vmem:[#allocation26 + $0x350] sm:$0xff]
    %v3534 = vld [vmem:[#allocation26 + $0x358] sm:$0xff]
    %v3535 = vld [vmem:[#allocation26 + $0x360] sm:$0xff]
    %v3536 = vld [vmem:[#allocation26 + $0x368] sm:$0xff]
    %v3537 = vld [vmem:[#allocation26 + $0x370] sm:$0xff]
    %v3538 = vld [vmem:[#allocation26 + $0x378] sm:$0xff]
    %v3539 = vld [vmem:[#allocation26 + $0x380] sm:$0xff]
    %v3540 = vld [vmem:[#allocation26 + $0x388] sm:$0xff]
    %v3541 = vld [vmem:[#allocation26 + $0x390] sm:$0xff]
    %v3542 = vld [vmem:[#allocation26 + $0x398] sm:$0xff]
    %v3543 = vld [vmem:[#allocation26 + $0x3a0] sm:$0xff]
    %v3544 = vld [vmem:[#allocation26 + $0x3a8] sm:$0xff]
    %v3545 = vld [vmem:[#allocation26 + $0x3b0] sm:$0xff]
    %v3546 = vld [vmem:[#allocation26 + $0x3b8] sm:$0xff]
    %v3547 = vld [vmem:[#allocation26 + $0x3c0] sm:$0xff]
    %v3548 = vld [vmem:[#allocation26 + $0x3c8] sm:$0xff]
    %v3549 = vld [vmem:[#allocation26 + $0x3d0] sm:$0xff]
    %v3550 = vld [vmem:[#allocation26 + $0x3d8] sm:$0xff]
    %v3551 = vld [vmem:[#allocation26 + $0x3e0] sm:$0xff]
    %v3552 = vld [vmem:[#allocation26 + $0x3e8] sm:$0xff]
    %v3553 = vld [vmem:[#allocation26 + $0x3f0] sm:$0xff]
    %v3554 = vld [vmem:[#allocation26 + $0x3f8] sm:$0xff]
    %v3555 = vld [vmem:[#allocation26 + $0x400] sm:$0xff]
    %v3556 = vld [vmem:[#allocation26 + $0x408] sm:$0xff]
    %v3557 = vld [vmem:[#allocation26 + $0x410] sm:$0xff]
    %v3558 = vld [vmem:[#allocation26 + $0x418] sm:$0xff]
    %v3559 = vld [vmem:[#allocation26 + $0x420] sm:$0xff]
    %v3560 = vld [vmem:[#allocation26 + $0x428] sm:$0xff]
    %v3561 = vld [vmem:[#allocation26 + $0x430] sm:$0xff]
    %v3562 = vld [vmem:[#allocation26 + $0x438] sm:$0xff]
    %v3563 = vld [vmem:[#allocation26 + $0x440] sm:$0xff]
    %v3564 = vld [vmem:[#allocation26 + $0x448] sm:$0xff]
    %v3565 = vld [vmem:[#allocation26 + $0x450] sm:$0xff]
    %v3566 = vld [vmem:[#allocation26 + $0x458] sm:$0xff]
    %v3567 = vld [vmem:[#allocation26 + $0x460] sm:$0xff]
    %v3568 = vld [vmem:[#allocation26 + $0x468] sm:$0xff]
    %v3569 = vld [vmem:[#allocation26 + $0x470] sm:$0xff]
    %v3570 = vld [vmem:[#allocation26 + $0x478] sm:$0xff]
    %v3571 = vld [vmem:[#allocation26 + $0x480] sm:$0xff]
    %v3572 = vld [vmem:[#allocation26 + $0x488] sm:$0xff]
    %v3573 = vld [vmem:[#allocation26 + $0x490] sm:$0xff]
    %v3574 = vld [vmem:[#allocation26 + $0x498] sm:$0xff]
    %v3575 = vld [vmem:[#allocation26 + $0x4a0] sm:$0xff]
    %v3576 = vld [vmem:[#allocation26 + $0x4a8] sm:$0xff]
    %v3577 = vld [vmem:[#allocation26 + $0x4b0] sm:$0xff]
    %v3578 = vld [vmem:[#allocation26 + $0x4b8] sm:$0xff]
    %v3579 = vld [vmem:[#allocation26 + $0x4c0] sm:$0xff]
    %v3580 = vld [vmem:[#allocation26 + $0x4c8] sm:$0xff]
    %v3581 = vld [vmem:[#allocation26 + $0x4d0] sm:$0xff]
    %v3582 = vld [vmem:[#allocation26 + $0x4d8] sm:$0xff]
    %v3583 = vld [vmem:[#allocation26 + $0x4e0] sm:$0xff]
    %v3584 = vld [vmem:[#allocation26 + $0x4e8] sm:$0xff]
    %v3585 = vld [vmem:[#allocation26 + $0x4f0] sm:$0xff]
    %v3586 = vld [vmem:[#allocation26 + $0x4f8] sm:$0xff]
    %v3587 = vld [vmem:[#allocation26 + $0x500] sm:$0xff]
    %v3588 = vld [vmem:[#allocation26 + $0x508] sm:$0xff]
    %v3589 = vld [vmem:[#allocation26 + $0x510] sm:$0xff]
    %v3590 = vld [vmem:[#allocation26 + $0x518] sm:$0xff]
    %v3591 = vld [vmem:[#allocation26 + $0x520] sm:$0xff]
    %v3592 = vld [vmem:[#allocation26 + $0x528] sm:$0xff]
    %v3593 = vld [vmem:[#allocation26 + $0x530] sm:$0xff]
    %v3594 = vld [vmem:[#allocation26 + $0x538] sm:$0xff]
    %v3595 = vld [vmem:[#allocation26 + $0x540] sm:$0xff]
    %v3596 = vld [vmem:[#allocation26 + $0x548] sm:$0xff]
    %v3597 = vld [vmem:[#allocation26 + $0x550] sm:$0xff]
    %v3598 = vld [vmem:[#allocation26 + $0x558] sm:$0xff]
    %v3599 = vld [vmem:[#allocation26 + $0x560] sm:$0xff]
    %v3600 = vld [vmem:[#allocation26 + $0x568] sm:$0xff]
    %v3601 = vld [vmem:[#allocation26 + $0x570] sm:$0xff]
    %v3602 = vld [vmem:[#allocation26 + $0x578] sm:$0xff]
    %v3603 = vld [vmem:[#allocation26 + $0x580] sm:$0xff]
    %v3604 = vld [vmem:[#allocation26 + $0x588] sm:$0xff]
    %v3605 = vld [vmem:[#allocation26 + $0x590] sm:$0xff]
    %v3606 = vld [vmem:[#allocation26 + $0x598] sm:$0xff]
    %v3607 = vld [vmem:[#allocation26 + $0x5a0] sm:$0xff]
    %v3608 = vld [vmem:[#allocation26 + $0x5a8] sm:$0xff]
    %v3609 = vld [vmem:[#allocation26 + $0x5b0] sm:$0xff]
    %v3610 = vld [vmem:[#allocation26 + $0x5b8] sm:$0xff]
    %v3611 = vld [vmem:[#allocation26 + $0x5c0] sm:$0xff]
    %v3612 = vld [vmem:[#allocation26 + $0x5c8] sm:$0xff]
    %v3613 = vld [vmem:[#allocation26 + $0x5d0] sm:$0xff]
    %v3614 = vld [vmem:[#allocation26 + $0x5d8] sm:$0xff]
    %v3615 = vld [vmem:[#allocation26 + $0x5e0] sm:$0xff]
    %v3616 = vld [vmem:[#allocation26 + $0x5e8] sm:$0xff]
    %v3617 = vld [vmem:[#allocation26 + $0x5f0] sm:$0xff]
    %v3618 = vld [vmem:[#allocation26 + $0x5f8] sm:$0xff]
    %v3619 = vld [vmem:[#allocation26 + $0x600] sm:$0xff]
    %v3620 = vld [vmem:[#allocation26 + $0x608] sm:$0xff]
    %v3621 = vld [vmem:[#allocation26 + $0x610] sm:$0xff]
    %v3622 = vld [vmem:[#allocation26 + $0x618] sm:$0xff]
    %v3623 = vld [vmem:[#allocation26 + $0x620] sm:$0xff]
    %v3624 = vld [vmem:[#allocation26 + $0x628] sm:$0xff]
    %v3625 = vld [vmem:[#allocation26 + $0x630] sm:$0xff]
    %v3626 = vld [vmem:[#allocation26 + $0x638] sm:$0xff]
    %v3627 = vld [vmem:[#allocation26 + $0x640] sm:$0xff]
    %v3628 = vld [vmem:[#allocation26 + $0x648] sm:$0xff]
    %v3629 = vld [vmem:[#allocation26 + $0x650] sm:$0xff]
    %v3630 = vld [vmem:[#allocation26 + $0x658] sm:$0xff]
    %v3631 = vld [vmem:[#allocation26 + $0x660] sm:$0xff]
    %v3632 = vld [vmem:[#allocation26 + $0x668] sm:$0xff]
    %v3633 = vld [vmem:[#allocation26 + $0x670] sm:$0xff]
    %v3634 = vld [vmem:[#allocation26 + $0x678] sm:$0xff]
    %v3635 = vld [vmem:[#allocation26 + $0x680] sm:$0xff]
    %v3636 = vld [vmem:[#allocation26 + $0x688] sm:$0xff]
    %v3637 = vld [vmem:[#allocation26 + $0x690] sm:$0xff]
    %v3638 = vld [vmem:[#allocation26 + $0x698] sm:$0xff]
    %v3639 = vld [vmem:[#allocation26 + $0x6a0] sm:$0xff]
    %v3640 = vld [vmem:[#allocation26 + $0x6a8] sm:$0xff]
    %v3641 = vld [vmem:[#allocation26 + $0x6b0] sm:$0xff]
    %v3642 = vld [vmem:[#allocation26 + $0x6b8] sm:$0xff]
    %v3643 = vld [vmem:[#allocation26 + $0x6c0] sm:$0xff]
    %v3644 = vld [vmem:[#allocation26 + $0x6c8] sm:$0xff]
    %v3645 = vld [vmem:[#allocation26 + $0x6d0] sm:$0xff]
    %v3646 = vld [vmem:[#allocation26 + $0x6d8] sm:$0xff]
    %v3647 = vld [vmem:[#allocation26 + $0x6e0] sm:$0xff]
    %v3648 = vld [vmem:[#allocation26 + $0x6e8] sm:$0xff]
    %v3649 = vld [vmem:[#allocation26 + $0x6f0] sm:$0xff]
    %v3650 = vld [vmem:[#allocation26 + $0x6f8] sm:$0xff]
    %v3651 = vld [vmem:[#allocation26 + $0x700] sm:$0xff]
    %v3652 = vld [vmem:[#allocation26 + $0x708] sm:$0xff]
    %v3653 = vld [vmem:[#allocation26 + $0x710] sm:$0xff]
    %v3654 = vld [vmem:[#allocation26 + $0x718] sm:$0xff]
    %v3655 = vld [vmem:[#allocation26 + $0x720] sm:$0xff]
    %v3656 = vld [vmem:[#allocation26 + $0x728] sm:$0xff]
    %v3657 = vld [vmem:[#allocation26 + $0x730] sm:$0xff]
    %v3658 = vld [vmem:[#allocation26 + $0x738] sm:$0xff]
    %v3659 = vld [vmem:[#allocation26 + $0x740] sm:$0xff]
    %v3660 = vld [vmem:[#allocation26 + $0x748] sm:$0xff]
    %v3661 = vld [vmem:[#allocation26 + $0x750] sm:$0xff]
    %v3662 = vld [vmem:[#allocation26 + $0x758] sm:$0xff]
    %v3663 = vld [vmem:[#allocation26 + $0x760] sm:$0xff]
    %v3664 = vld [vmem:[#allocation26 + $0x768] sm:$0xff]
    %v3665 = vld [vmem:[#allocation26 + $0x770] sm:$0xff]
    %v3666 = vld [vmem:[#allocation26 + $0x778] sm:$0xff]
    %v3667 = vld [vmem:[#allocation26 + $0x780] sm:$0xff]
    %v3668 = vld [vmem:[#allocation26 + $0x788] sm:$0xff]
    %v3669 = vld [vmem:[#allocation26 + $0x790] sm:$0xff]
    %v3670 = vld [vmem:[#allocation26 + $0x798] sm:$0xff]
    %v3671 = vld [vmem:[#allocation26 + $0x7a0] sm:$0xff]
    %v3672 = vld [vmem:[#allocation26 + $0x7a8] sm:$0xff]
    %v3673 = vld [vmem:[#allocation26 + $0x7b0] sm:$0xff]
    %v3674 = vld [vmem:[#allocation26 + $0x7b8] sm:$0xff]
    %v3675 = vld [vmem:[#allocation26 + $0x7c0] sm:$0xff]
    %v3676 = vld [vmem:[#allocation26 + $0x7c8] sm:$0xff]
    %v3677 = vld [vmem:[#allocation26 + $0x7d0] sm:$0xff]
    %v3678 = vld [vmem:[#allocation26 + $0x7d8] sm:$0xff]
    %v3679 = vld [vmem:[#allocation26 + $0x7e0] sm:$0xff]
    %v3680 = vld [vmem:[#allocation26 + $0x7e8] sm:$0xff]
    %v3681 = vld [vmem:[#allocation26 + $0x7f0] sm:$0xff]
    %v3682 = vld [vmem:[#allocation26 + $0x7f8] sm:$0xff]
    %v3683 = vld [vmem:[#allocation26 + $0x800] sm:$0xff]
    %v3684 = vld [vmem:[#allocation26 + $0x808] sm:$0xff]
    %v3685 = vld [vmem:[#allocation26 + $0x810] sm:$0xff]
    %v3686 = vld [vmem:[#allocation26 + $0x818] sm:$0xff]
    %v3687 = vld [vmem:[#allocation26 + $0x820] sm:$0xff]
    %v3688 = vld [vmem:[#allocation26 + $0x828] sm:$0xff]
    %v3689 = vld [vmem:[#allocation26 + $0x830] sm:$0xff]
    %v3690 = vld [vmem:[#allocation26 + $0x838] sm:$0xff]
    %v3691 = vld [vmem:[#allocation26 + $0x840] sm:$0xff]
    %v3692 = vld [vmem:[#allocation26 + $0x848] sm:$0xff]
    %v3693 = vld [vmem:[#allocation26 + $0x850] sm:$0xff]
    %v3694 = vld [vmem:[#allocation26 + $0x858] sm:$0xff]
    %v3695 = vld [vmem:[#allocation26 + $0x860] sm:$0xff]
    %v3696 = vld [vmem:[#allocation26 + $0x868] sm:$0xff]
    %v3697 = vld [vmem:[#allocation26 + $0x870] sm:$0xff]
    %v3698 = vld [vmem:[#allocation26 + $0x878] sm:$0xff]
    %v3699 = vld [vmem:[#allocation26 + $0x880] sm:$0xff]
    %v3700 = vld [vmem:[#allocation26 + $0x888] sm:$0xff]
    %v3701 = vld [vmem:[#allocation26 + $0x890] sm:$0xff]
    %v3702 = vld [vmem:[#allocation26 + $0x898] sm:$0xff]
    %v3703 = vld [vmem:[#allocation26 + $0x8a0] sm:$0xff]
    %v3704 = vld [vmem:[#allocation26 + $0x8a8] sm:$0xff]
    %v3705 = vld [vmem:[#allocation26 + $0x8b0] sm:$0xff]
    %v3706 = vld [vmem:[#allocation26 + $0x8b8] sm:$0xff]
    %v3707 = vld [vmem:[#allocation26 + $0x8c0] sm:$0xff]
    %v3708 = vld [vmem:[#allocation26 + $0x8c8] sm:$0xff]
    %v3709 = vld [vmem:[#allocation26 + $0x8d0] sm:$0xff]
    %v3710 = vld [vmem:[#allocation26 + $0x8d8] sm:$0xff]
    %v3711 = vld [vmem:[#allocation26 + $0x8e0] sm:$0xff]
    %v3712 = vld [vmem:[#allocation26 + $0x8e8] sm:$0xff]
    %v3713 = vld [vmem:[#allocation26 + $0x8f0] sm:$0xff]
    %v3714 = vld [vmem:[#allocation26 + $0x8f8] sm:$0xff]
    %v3715 = vld [vmem:[#allocation26 + $0x900] sm:$0xff]
    %v3716 = vld [vmem:[#allocation26 + $0x908] sm:$0xff]
    %v3717 = vld [vmem:[#allocation26 + $0x910] sm:$0xff]
    %v3718 = vld [vmem:[#allocation26 + $0x918] sm:$0xff]
    %v3719 = vld [vmem:[#allocation26 + $0x920] sm:$0xff]
    %v3720 = vld [vmem:[#allocation26 + $0x928] sm:$0xff]
    %v3721 = vld [vmem:[#allocation26 + $0x930] sm:$0xff]
    %v3722 = vld [vmem:[#allocation26 + $0x938] sm:$0xff]
    %v3723 = vld [vmem:[#allocation26 + $0x940] sm:$0xff]
    %v3724 = vld [vmem:[#allocation26 + $0x948] sm:$0xff]
    %v3725 = vld [vmem:[#allocation26 + $0x950] sm:$0xff]
    %v3726 = vld [vmem:[#allocation26 + $0x958] sm:$0xff]
    %v3727 = vld [vmem:[#allocation26 + $0x960] sm:$0xff]
    %v3728 = vld [vmem:[#allocation26 + $0x968] sm:$0xff]
    %v3729 = vld [vmem:[#allocation26 + $0x970] sm:$0xff]
    %v3730 = vld [vmem:[#allocation26 + $0x978] sm:$0xff]
    %v3731 = vld [vmem:[#allocation26 + $0x980] sm:$0xff]
    %v3732 = vld [vmem:[#allocation26 + $0x988] sm:$0xff]
    %v3733 = vld [vmem:[#allocation26 + $0x990] sm:$0xff]
    %v3734 = vld [vmem:[#allocation26 + $0x998] sm:$0xff]
    %v3735 = vld [vmem:[#allocation26 + $0x9a0] sm:$0xff]
    %v3736 = vld [vmem:[#allocation26 + $0x9a8] sm:$0xff]
    %v3737 = vld [vmem:[#allocation26 + $0x9b0] sm:$0xff]
    %v3738 = vld [vmem:[#allocation26 + $0x9b8] sm:$0xff]
    %v3739 = vld [vmem:[#allocation26 + $0x9c0] sm:$0xff]
    %v3740 = vld [vmem:[#allocation26 + $0x9c8] sm:$0xff]
    %v3741 = vld [vmem:[#allocation26 + $0x9d0] sm:$0xff]
    %v3742 = vld [vmem:[#allocation26 + $0x9d8] sm:$0xff]
    %v3743 = vld [vmem:[#allocation26 + $0x9e0] sm:$0xff]
    %v3744 = vld [vmem:[#allocation26 + $0x9e8] sm:$0xff]
    %v3745 = vld [vmem:[#allocation26 + $0x9f0] sm:$0xff]
    %v3746 = vld [vmem:[#allocation26 + $0x9f8] sm:$0xff]
    %v3747 = vld [vmem:[#allocation26 + $0xa00] sm:$0xff]
    %v3748 = vld [vmem:[#allocation26 + $0xa08] sm:$0xff]
    %v3749 = vld [vmem:[#allocation26 + $0xa10] sm:$0xff]
    %v3750 = vld [vmem:[#allocation26 + $0xa18] sm:$0xff]
    %v3751 = vld [vmem:[#allocation26 + $0xa20] sm:$0xff]
    %v3752 = vld [vmem:[#allocation26 + $0xa28] sm:$0xff]
    %v3753 = vld [vmem:[#allocation26 + $0xa30] sm:$0xff]
    %v3754 = vld [vmem:[#allocation26 + $0xa38] sm:$0xff]
    %v3755 = vld [vmem:[#allocation26 + $0xa40] sm:$0xff]
    %v3756 = vld [vmem:[#allocation26 + $0xa48] sm:$0xff]
    %v3757 = vld [vmem:[#allocation26 + $0xa50] sm:$0xff]
    %v3758 = vld [vmem:[#allocation26 + $0xa58] sm:$0xff]
    %v3759 = vld [vmem:[#allocation26 + $0xa60] sm:$0xff]
    %v3760 = vld [vmem:[#allocation26 + $0xa68] sm:$0xff]
    %v3761 = vld [vmem:[#allocation26 + $0xa70] sm:$0xff]
    %v3762 = vld [vmem:[#allocation26 + $0xa78] sm:$0xff]
    %v3763 = vld [vmem:[#allocation26 + $0xa80] sm:$0xff]
    %v3764 = vld [vmem:[#allocation26 + $0xa88] sm:$0xff]
    %v3765 = vld [vmem:[#allocation26 + $0xa90] sm:$0xff]
    %v3766 = vld [vmem:[#allocation26 + $0xa98] sm:$0xff]
    %v3767 = vld [vmem:[#allocation26 + $0xaa0] sm:$0xff]
    %v3768 = vld [vmem:[#allocation26 + $0xaa8] sm:$0xff]
    %v3769 = vld [vmem:[#allocation26 + $0xab0] sm:$0xff]
    %v3770 = vld [vmem:[#allocation26 + $0xab8] sm:$0xff]
    %v3771 = vld [vmem:[#allocation26 + $0xac0] sm:$0xff]
    %v3772 = vld [vmem:[#allocation26 + $0xac8] sm:$0xff]
    %v3773 = vld [vmem:[#allocation26 + $0xad0] sm:$0xff]
    %v3774 = vld [vmem:[#allocation26 + $0xad8] sm:$0xff]
    %v3775 = vld [vmem:[#allocation26 + $0xae0] sm:$0xff]
    %v3776 = vld [vmem:[#allocation26 + $0xae8] sm:$0xff]
    %v3777 = vld [vmem:[#allocation26 + $0xaf0] sm:$0xff]
    %v3778 = vld [vmem:[#allocation26 + $0xaf8] sm:$0xff]
    %v3779 = vld [vmem:[#allocation26 + $0xb00] sm:$0xff]
    %v3780 = vld [vmem:[#allocation26 + $0xb08] sm:$0xff]
    %v3781 = vld [vmem:[#allocation26 + $0xb10] sm:$0xff]
    %v3782 = vld [vmem:[#allocation26 + $0xb18] sm:$0xff]
    %v3783 = vld [vmem:[#allocation26 + $0xb20] sm:$0xff]
    %v3784 = vld [vmem:[#allocation26 + $0xb28] sm:$0xff]
    %v3785 = vld [vmem:[#allocation26 + $0xb30] sm:$0xff]
    %v3786 = vld [vmem:[#allocation26 + $0xb38] sm:$0xff]
    %v3787 = vld [vmem:[#allocation26 + $0xb40] sm:$0xff]
    %v3788 = vld [vmem:[#allocation26 + $0xb48] sm:$0xff]
    %v3789 = vld [vmem:[#allocation26 + $0xb50] sm:$0xff]
    %v3790 = vld [vmem:[#allocation26 + $0xb58] sm:$0xff]
    %v3791 = vld [vmem:[#allocation26 + $0xb60] sm:$0xff]
    %v3792 = vld [vmem:[#allocation26 + $0xb68] sm:$0xff]
    %v3793 = vld [vmem:[#allocation26 + $0xb70] sm:$0xff]
    %v3794 = vld [vmem:[#allocation26 + $0xb78] sm:$0xff]
    %v3795 = vld [vmem:[#allocation26 + $0xb80] sm:$0xff]
    %v3796 = vld [vmem:[#allocation26 + $0xb88] sm:$0xff]
    %v3797 = vld [vmem:[#allocation26 + $0xb90] sm:$0xff]
    %v3798 = vld [vmem:[#allocation26 + $0xb98] sm:$0xff]
    %v3799 = vld [vmem:[#allocation26 + $0xba0] sm:$0xff]
    %v3800 = vld [vmem:[#allocation26 + $0xba8] sm:$0xff]
    %v3801 = vld [vmem:[#allocation26 + $0xbb0] sm:$0xff]
    %v3802 = vld [vmem:[#allocation26 + $0xbb8] sm:$0xff]
    %v3803 = vld [vmem:[#allocation26 + $0xbc0] sm:$0xff]
    %v3804 = vld [vmem:[#allocation26 + $0xbc8] sm:$0xff]
    %v3805 = vld [vmem:[#allocation26 + $0xbd0] sm:$0xff]
    %v3806 = vld [vmem:[#allocation26 + $0xbd8] sm:$0xff]
    %v3807 = vld [vmem:[#allocation26 + $0xbe0] sm:$0xff]
    %v3808 = vld [vmem:[#allocation26 + $0xbe8] sm:$0xff]
    %v3809 = vld [vmem:[#allocation26 + $0xbf0] sm:$0xff]
    %v3810 = vld [vmem:[#allocation26 + $0xbf8] sm:$0xff]
    %v3811 = vld [vmem:[#allocation28] sm:$0x3f]
    %v3813 = vlaneseq
    %v3814 = vshrl.u32 %v3813, 7
    %v3815 = vsub.s32 0, %v3814
    %v3816 = vrot.slane %v3811, %v3815
    %v3817 = vlaneseq
    %v3818 = vshrl.u32 %v3817, 7
    %v3819 = vsub.s32 1, %v3818
    %v3820 = vrot.slane %v3811, %v3819
    %v3821 = vlaneseq
    %v3822 = vshrl.u32 %v3821, 7
    %v3823 = vsub.s32 2, %v3822
    %v3824 = vrot.slane %v3811, %v3823
    %v3825 = vlaneseq
    %v3826 = vshrl.u32 %v3825, 7
    %v3827 = vsub.s32 3, %v3826
    %v3828 = vrot.slane %v3811, %v3827
    %v3829 = vlaneseq
    %v3830 = vshrl.u32 %v3829, 7
    %v3831 = vsub.s32 4, %v3830
    %v3832 = vrot.slane %v3811, %v3831
    %v3833 = vlaneseq
    %v3834 = vshrl.u32 %v3833, 7
    %v3835 = vsub.s32 5, %v3834
    %v3836 = vrot.slane %v3811, %v3835
    %v4227 = vunpack.c.l.b16 %v3427
    %v4228 = vunpack.c.h.b16 %v3427
    %v4229 = vunpack.c.l.b16 %v3428
    %v4230 = vunpack.c.h.b16 %v3428
    %v4231 = vunpack.c.l.b16 %v3429
    %v4232 = vunpack.c.h.b16 %v3429
    %v4233 = vunpack.c.l.b16 %v3430
    %v4234 = vunpack.c.h.b16 %v3430
    %v4235 = vunpack.c.l.b16 %v3431
    %v4236 = vunpack.c.h.b16 %v3431
    %v4237 = vunpack.c.l.b16 %v3432
    %v4238 = vunpack.c.h.b16 %v3432
    %v4239 = vunpack.c.l.b16 %v3433
    %v4240 = vunpack.c.h.b16 %v3433
    %v4241 = vunpack.c.l.b16 %v3434
    %v4242 = vunpack.c.h.b16 %v3434
    %v4243 = vunpack.c.l.b16 %v3435
    %v4244 = vunpack.c.h.b16 %v3435
    %v4245 = vunpack.c.l.b16 %v3436
    %v4246 = vunpack.c.h.b16 %v3436
    %v4247 = vunpack.c.l.b16 %v3437
    %v4248 = vunpack.c.h.b16 %v3437
    %v4249 = vunpack.c.l.b16 %v3438
    %v4250 = vunpack.c.h.b16 %v3438
    %v4251 = vunpack.c.l.b16 %v3439
    %v4252 = vunpack.c.h.b16 %v3439
    %v4253 = vunpack.c.l.b16 %v3440
    %v4254 = vunpack.c.h.b16 %v3440
    %v4255 = vunpack.c.l.b16 %v3441
    %v4256 = vunpack.c.h.b16 %v3441
    %v4257 = vunpack.c.l.b16 %v3442
    %v4258 = vunpack.c.h.b16 %v3442
    %v4259 = vunpack.c.l.b16 %v3443
    %v4260 = vunpack.c.h.b16 %v3443
    %v4261 = vunpack.c.l.b16 %v3444
    %v4262 = vunpack.c.h.b16 %v3444
    %v4263 = vunpack.c.l.b16 %v3445
    %v4264 = vunpack.c.h.b16 %v3445
    %v4265 = vunpack.c.l.b16 %v3446
    %v4266 = vunpack.c.h.b16 %v3446
    %v4267 = vunpack.c.l.b16 %v3447
    %v4268 = vunpack.c.h.b16 %v3447
    %v4269 = vunpack.c.l.b16 %v3448
    %v4270 = vunpack.c.h.b16 %v3448
    %v4271 = vunpack.c.l.b16 %v3449
    %v4272 = vunpack.c.h.b16 %v3449
    %v4273 = vunpack.c.l.b16 %v3450
    %v4274 = vunpack.c.h.b16 %v3450
    %v4275 = vunpack.c.l.b16 %v3451
    %v4276 = vunpack.c.h.b16 %v3451
    %v4277 = vunpack.c.l.b16 %v3452
    %v4278 = vunpack.c.h.b16 %v3452
    %v4279 = vunpack.c.l.b16 %v3453
    %v4280 = vunpack.c.h.b16 %v3453
    %v4281 = vunpack.c.l.b16 %v3454
    %v4282 = vunpack.c.h.b16 %v3454
    %v4283 = vunpack.c.l.b16 %v3455
    %v4284 = vunpack.c.h.b16 %v3455
    %v4285 = vunpack.c.l.b16 %v3456
    %v4286 = vunpack.c.h.b16 %v3456
    %v4287 = vunpack.c.l.b16 %v3457
    %v4288 = vunpack.c.h.b16 %v3457
    %v4289 = vunpack.c.l.b16 %v3458
    %v4290 = vunpack.c.h.b16 %v3458
    %v4291 = vunpack.c.l.b16 %v3459
    %v4292 = vunpack.c.h.b16 %v3459
    %v4293 = vunpack.c.l.b16 %v3460
    %v4294 = vunpack.c.h.b16 %v3460
    %v4295 = vunpack.c.l.b16 %v3461
    %v4296 = vunpack.c.h.b16 %v3461
    %v4297 = vunpack.c.l.b16 %v3462
    %v4298 = vunpack.c.h.b16 %v3462
    %v4299 = vunpack.c.l.b16 %v3463
    %v4300 = vunpack.c.h.b16 %v3463
    %v4301 = vunpack.c.l.b16 %v3464
    %v4302 = vunpack.c.h.b16 %v3464
    %v4303 = vunpack.c.l.b16 %v3465
    %v4304 = vunpack.c.h.b16 %v3465
    %v4305 = vunpack.c.l.b16 %v3466
    %v4306 = vunpack.c.h.b16 %v3466
    %v4307 = vunpack.c.l.b16 %v3467
    %v4308 = vunpack.c.h.b16 %v3467
    %v4309 = vunpack.c.l.b16 %v3468
    %v4310 = vunpack.c.h.b16 %v3468
    %v4311 = vunpack.c.l.b16 %v3469
    %v4312 = vunpack.c.h.b16 %v3469
    %v4313 = vunpack.c.l.b16 %v3470
    %v4314 = vunpack.c.h.b16 %v3470
    %v4315 = vunpack.c.l.b16 %v3471
    %v4316 = vunpack.c.h.b16 %v3471
    %v4317 = vunpack.c.l.b16 %v3472
    %v4318 = vunpack.c.h.b16 %v3472
    %v4319 = vunpack.c.l.b16 %v3473
    %v4320 = vunpack.c.h.b16 %v3473
    %v4321 = vunpack.c.l.b16 %v3474
    %v4322 = vunpack.c.h.b16 %v3474
    %v4323 = vunpack.c.l.b16 %v3475
    %v4324 = vunpack.c.h.b16 %v3475
    %v4325 = vunpack.c.l.b16 %v3476
    %v4326 = vunpack.c.h.b16 %v3476
    %v4327 = vunpack.c.l.b16 %v3477
    %v4328 = vunpack.c.h.b16 %v3477
    %v4329 = vunpack.c.l.b16 %v3478
    %v4330 = vunpack.c.h.b16 %v3478
    %v4331 = vunpack.c.l.b16 %v3479
    %v4332 = vunpack.c.h.b16 %v3479
    %v4333 = vunpack.c.l.b16 %v3480
    %v4334 = vunpack.c.h.b16 %v3480
    %v4335 = vunpack.c.l.b16 %v3481
    %v4336 = vunpack.c.h.b16 %v3481
    %v4337 = vunpack.c.l.b16 %v3482
    %v4338 = vunpack.c.h.b16 %v3482
    %v4339 = vunpack.c.l.b16 %v3483
    %v4340 = vunpack.c.h.b16 %v3483
    %v4341 = vunpack.c.l.b16 %v3484
    %v4342 = vunpack.c.h.b16 %v3484
    %v4343 = vunpack.c.l.b16 %v3485
    %v4344 = vunpack.c.h.b16 %v3485
    %v4345 = vunpack.c.l.b16 %v3486
    %v4346 = vunpack.c.h.b16 %v3486
    %v4347 = vunpack.c.l.b16 %v3487
    %v4348 = vunpack.c.h.b16 %v3487
    %v4349 = vunpack.c.l.b16 %v3488
    %v4350 = vunpack.c.h.b16 %v3488
    %v4351 = vunpack.c.l.b16 %v3489
    %v4352 = vunpack.c.h.b16 %v3489
    %v4353 = vunpack.c.l.b16 %v3490
    %v4354 = vunpack.c.h.b16 %v3490
    %v4355 = vunpack.c.l.b16 %v3491
    %v4356 = vunpack.c.h.b16 %v3491
    %v4357 = vunpack.c.l.b16 %v3492
    %v4358 = vunpack.c.h.b16 %v3492
    %v4359 = vunpack.c.l.b16 %v3493
    %v4360 = vunpack.c.h.b16 %v3493
    %v4361 = vunpack.c.l.b16 %v3494
    %v4362 = vunpack.c.h.b16 %v3494
    %v4363 = vunpack.c.l.b16 %v3495
    %v4364 = vunpack.c.h.b16 %v3495
    %v4365 = vunpack.c.l.b16 %v3496
    %v4366 = vunpack.c.h.b16 %v3496
    %v4367 = vunpack.c.l.b16 %v3497
    %v4368 = vunpack.c.h.b16 %v3497
    %v4369 = vunpack.c.l.b16 %v3498
    %v4370 = vunpack.c.h.b16 %v3498
    %v4371 = vunpack.c.l.b16 %v3499
    %v4372 = vunpack.c.h.b16 %v3499
    %v4373 = vunpack.c.l.b16 %v3500
    %v4374 = vunpack.c.h.b16 %v3500
    %v4375 = vunpack.c.l.b16 %v3501
    %v4376 = vunpack.c.h.b16 %v3501
    %v4377 = vunpack.c.l.b16 %v3502
    %v4378 = vunpack.c.h.b16 %v3502
    %v4379 = vunpack.c.l.b16 %v3503
    %v4380 = vunpack.c.h.b16 %v3503
    %v4381 = vunpack.c.l.b16 %v3504
    %v4382 = vunpack.c.h.b16 %v3504
    %v4383 = vunpack.c.l.b16 %v3505
    %v4384 = vunpack.c.h.b16 %v3505
    %v4385 = vunpack.c.l.b16 %v3506
    %v4386 = vunpack.c.h.b16 %v3506
    %v4387 = vunpack.c.l.b16 %v3507
    %v4388 = vunpack.c.h.b16 %v3507
    %v4389 = vunpack.c.l.b16 %v3508
    %v4390 = vunpack.c.h.b16 %v3508
    %v4391 = vunpack.c.l.b16 %v3509
    %v4392 = vunpack.c.h.b16 %v3509
    %v4393 = vunpack.c.l.b16 %v3510
    %v4394 = vunpack.c.h.b16 %v3510
    %v4395 = vunpack.c.l.b16 %v3511
    %v4396 = vunpack.c.h.b16 %v3511
    %v4397 = vunpack.c.l.b16 %v3512
    %v4398 = vunpack.c.h.b16 %v3512
    %v4399 = vunpack.c.l.b16 %v3513
    %v4400 = vunpack.c.h.b16 %v3513
    %v4401 = vunpack.c.l.b16 %v3514
    %v4402 = vunpack.c.h.b16 %v3514
    %v4403 = vunpack.c.l.b16 %v3515
    %v4404 = vunpack.c.h.b16 %v3515
    %v4405 = vunpack.c.l.b16 %v3516
    %v4406 = vunpack.c.h.b16 %v3516
    %v4407 = vunpack.c.l.b16 %v3517
    %v4408 = vunpack.c.h.b16 %v3517
    %v4409 = vunpack.c.l.b16 %v3518
    %v4410 = vunpack.c.h.b16 %v3518
    %v4411 = vunpack.c.l.b16 %v3519
    %v4412 = vunpack.c.h.b16 %v3519
    %v4413 = vunpack.c.l.b16 %v3520
    %v4414 = vunpack.c.h.b16 %v3520
    %v4415 = vunpack.c.l.b16 %v3521
    %v4416 = vunpack.c.h.b16 %v3521
    %v4417 = vunpack.c.l.b16 %v3522
    %v4418 = vunpack.c.h.b16 %v3522
    %v4419 = vunpack.c.l.b16 %v3523
    %v4420 = vunpack.c.h.b16 %v3523
    %v4421 = vunpack.c.l.b16 %v3524
    %v4422 = vunpack.c.h.b16 %v3524
    %v4423 = vunpack.c.l.b16 %v3525
    %v4424 = vunpack.c.h.b16 %v3525
    %v4425 = vunpack.c.l.b16 %v3526
    %v4426 = vunpack.c.h.b16 %v3526
    %v4427 = vunpack.c.l.b16 %v3527
    %v4428 = vunpack.c.h.b16 %v3527
    %v4429 = vunpack.c.l.b16 %v3528
    %v4430 = vunpack.c.h.b16 %v3528
    %v4431 = vunpack.c.l.b16 %v3529
    %v4432 = vunpack.c.h.b16 %v3529
    %v4433 = vunpack.c.l.b16 %v3530
    %v4434 = vunpack.c.h.b16 %v3530
    %v4435 = vunpack.c.l.b16 %v3531
    %v4436 = vunpack.c.h.b16 %v3531
    %v4437 = vunpack.c.l.b16 %v3532
    %v4438 = vunpack.c.h.b16 %v3532
    %v4439 = vunpack.c.l.b16 %v3533
    %v4440 = vunpack.c.h.b16 %v3533
    %v4441 = vunpack.c.l.b16 %v3534
    %v4442 = vunpack.c.h.b16 %v3534
    %v4443 = vunpack.c.l.b16 %v3535
    %v4444 = vunpack.c.h.b16 %v3535
    %v4445 = vunpack.c.l.b16 %v3536
    %v4446 = vunpack.c.h.b16 %v3536
    %v4447 = vunpack.c.l.b16 %v3537
    %v4448 = vunpack.c.h.b16 %v3537
    %v4449 = vunpack.c.l.b16 %v3538
    %v4450 = vunpack.c.h.b16 %v3538
    %v4451 = vunpack.c.l.b16 %v3539
    %v4452 = vunpack.c.h.b16 %v3539
    %v4453 = vunpack.c.l.b16 %v3540
    %v4454 = vunpack.c.h.b16 %v3540
    %v4455 = vunpack.c.l.b16 %v3541
    %v4456 = vunpack.c.h.b16 %v3541
    %v4457 = vunpack.c.l.b16 %v3542
    %v4458 = vunpack.c.h.b16 %v3542
    %v4459 = vunpack.c.l.b16 %v3543
    %v4460 = vunpack.c.h.b16 %v3543
    %v4461 = vunpack.c.l.b16 %v3544
    %v4462 = vunpack.c.h.b16 %v3544
    %v4463 = vunpack.c.l.b16 %v3545
    %v4464 = vunpack.c.h.b16 %v3545
    %v4465 = vunpack.c.l.b16 %v3546
    %v4466 = vunpack.c.h.b16 %v3546
    %v4467 = vunpack.c.l.b16 %v3547
    %v4468 = vunpack.c.h.b16 %v3547
    %v4469 = vunpack.c.l.b16 %v3548
    %v4470 = vunpack.c.h.b16 %v3548
    %v4471 = vunpack.c.l.b16 %v3549
    %v4472 = vunpack.c.h.b16 %v3549
    %v4473 = vunpack.c.l.b16 %v3550
    %v4474 = vunpack.c.h.b16 %v3550
    %v4475 = vunpack.c.l.b16 %v3551
    %v4476 = vunpack.c.h.b16 %v3551
    %v4477 = vunpack.c.l.b16 %v3552
    %v4478 = vunpack.c.h.b16 %v3552
    %v4479 = vunpack.c.l.b16 %v3553
    %v4480 = vunpack.c.h.b16 %v3553
    %v4481 = vunpack.c.l.b16 %v3554
    %v4482 = vunpack.c.h.b16 %v3554
    %v4483 = vunpack.c.l.b16 %v3555
    %v4484 = vunpack.c.h.b16 %v3555
    %v4485 = vunpack.c.l.b16 %v3556
    %v4486 = vunpack.c.h.b16 %v3556
    %v4487 = vunpack.c.l.b16 %v3557
    %v4488 = vunpack.c.h.b16 %v3557
    %v4489 = vunpack.c.l.b16 %v3558
    %v4490 = vunpack.c.h.b16 %v3558
    %v4491 = vunpack.c.l.b16 %v3559
    %v4492 = vunpack.c.h.b16 %v3559
    %v4493 = vunpack.c.l.b16 %v3560
    %v4494 = vunpack.c.h.b16 %v3560
    %v4495 = vunpack.c.l.b16 %v3561
    %v4496 = vunpack.c.h.b16 %v3561
    %v4497 = vunpack.c.l.b16 %v3562
    %v4498 = vunpack.c.h.b16 %v3562
    %v4499 = vunpack.c.l.b16 %v3563
    %v4500 = vunpack.c.h.b16 %v3563
    %v4501 = vunpack.c.l.b16 %v3564
    %v4502 = vunpack.c.h.b16 %v3564
    %v4503 = vunpack.c.l.b16 %v3565
    %v4504 = vunpack.c.h.b16 %v3565
    %v4505 = vunpack.c.l.b16 %v3566
    %v4506 = vunpack.c.h.b16 %v3566
    %v4507 = vunpack.c.l.b16 %v3567
    %v4508 = vunpack.c.h.b16 %v3567
    %v4509 = vunpack.c.l.b16 %v3568
    %v4510 = vunpack.c.h.b16 %v3568
    %v4511 = vunpack.c.l.b16 %v3569
    %v4512 = vunpack.c.h.b16 %v3569
    %v4513 = vunpack.c.l.b16 %v3570
    %v4514 = vunpack.c.h.b16 %v3570
    %v4515 = vunpack.c.l.b16 %v3571
    %v4516 = vunpack.c.h.b16 %v3571
    %v4517 = vunpack.c.l.b16 %v3572
    %v4518 = vunpack.c.h.b16 %v3572
    %v4519 = vunpack.c.l.b16 %v3573
    %v4520 = vunpack.c.h.b16 %v3573
    %v4521 = vunpack.c.l.b16 %v3574
    %v4522 = vunpack.c.h.b16 %v3574
    %v4523 = vunpack.c.l.b16 %v3575
    %v4524 = vunpack.c.h.b16 %v3575
    %v4525 = vunpack.c.l.b16 %v3576
    %v4526 = vunpack.c.h.b16 %v3576
    %v4527 = vunpack.c.l.b16 %v3577
    %v4528 = vunpack.c.h.b16 %v3577
    %v4529 = vunpack.c.l.b16 %v3578
    %v4530 = vunpack.c.h.b16 %v3578
    %v4531 = vunpack.c.l.b16 %v3579
    %v4532 = vunpack.c.h.b16 %v3579
    %v4533 = vunpack.c.l.b16 %v3580
    %v4534 = vunpack.c.h.b16 %v3580
    %v4535 = vunpack.c.l.b16 %v3581
    %v4536 = vunpack.c.h.b16 %v3581
    %v4537 = vunpack.c.l.b16 %v3582
    %v4538 = vunpack.c.h.b16 %v3582
    %v4539 = vunpack.c.l.b16 %v3583
    %v4540 = vunpack.c.h.b16 %v3583
    %v4541 = vunpack.c.l.b16 %v3584
    %v4542 = vunpack.c.h.b16 %v3584
    %v4543 = vunpack.c.l.b16 %v3585
    %v4544 = vunpack.c.h.b16 %v3585
    %v4545 = vunpack.c.l.b16 %v3586
    %v4546 = vunpack.c.h.b16 %v3586
    %v4547 = vunpack.c.l.b16 %v3587
    %v4548 = vunpack.c.h.b16 %v3587
    %v4549 = vunpack.c.l.b16 %v3588
    %v4550 = vunpack.c.h.b16 %v3588
    %v4551 = vunpack.c.l.b16 %v3589
    %v4552 = vunpack.c.h.b16 %v3589
    %v4553 = vunpack.c.l.b16 %v3590
    %v4554 = vunpack.c.h.b16 %v3590
    %v4555 = vunpack.c.l.b16 %v3591
    %v4556 = vunpack.c.h.b16 %v3591
    %v4557 = vunpack.c.l.b16 %v3592
    %v4558 = vunpack.c.h.b16 %v3592
    %v4559 = vunpack.c.l.b16 %v3593
    %v4560 = vunpack.c.h.b16 %v3593
    %v4561 = vunpack.c.l.b16 %v3594
    %v4562 = vunpack.c.h.b16 %v3594
    %v4563 = vunpack.c.l.b16 %v3595
    %v4564 = vunpack.c.h.b16 %v3595
    %v4565 = vunpack.c.l.b16 %v3596
    %v4566 = vunpack.c.h.b16 %v3596
    %v4567 = vunpack.c.l.b16 %v3597
    %v4568 = vunpack.c.h.b16 %v3597
    %v4569 = vunpack.c.l.b16 %v3598
    %v4570 = vunpack.c.h.b16 %v3598
    %v4571 = vunpack.c.l.b16 %v3599
    %v4572 = vunpack.c.h.b16 %v3599
    %v4573 = vunpack.c.l.b16 %v3600
    %v4574 = vunpack.c.h.b16 %v3600
    %v4575 = vunpack.c.l.b16 %v3601
    %v4576 = vunpack.c.h.b16 %v3601
    %v4577 = vunpack.c.l.b16 %v3602
    %v4578 = vunpack.c.h.b16 %v3602
    %v4579 = vunpack.c.l.b16 %v3603
    %v4580 = vunpack.c.h.b16 %v3603
    %v4581 = vunpack.c.l.b16 %v3604
    %v4582 = vunpack.c.h.b16 %v3604
    %v4583 = vunpack.c.l.b16 %v3605
    %v4584 = vunpack.c.h.b16 %v3605
    %v4585 = vunpack.c.l.b16 %v3606
    %v4586 = vunpack.c.h.b16 %v3606
    %v4587 = vunpack.c.l.b16 %v3607
    %v4588 = vunpack.c.h.b16 %v3607
    %v4589 = vunpack.c.l.b16 %v3608
    %v4590 = vunpack.c.h.b16 %v3608
    %v4591 = vunpack.c.l.b16 %v3609
    %v4592 = vunpack.c.h.b16 %v3609
    %v4593 = vunpack.c.l.b16 %v3610
    %v4594 = vunpack.c.h.b16 %v3610
    %v4595 = vunpack.c.l.b16 %v3611
    %v4596 = vunpack.c.h.b16 %v3611
    %v4597 = vunpack.c.l.b16 %v3612
    %v4598 = vunpack.c.h.b16 %v3612
    %v4599 = vunpack.c.l.b16 %v3613
    %v4600 = vunpack.c.h.b16 %v3613
    %v4601 = vunpack.c.l.b16 %v3614
    %v4602 = vunpack.c.h.b16 %v3614
    %v4603 = vunpack.c.l.b16 %v3615
    %v4604 = vunpack.c.h.b16 %v3615
    %v4605 = vunpack.c.l.b16 %v3616
    %v4606 = vunpack.c.h.b16 %v3616
    %v4607 = vunpack.c.l.b16 %v3617
    %v4608 = vunpack.c.h.b16 %v3617
    %v4609 = vunpack.c.l.b16 %v3618
    %v4610 = vunpack.c.h.b16 %v3618
    %v4611 = vunpack.c.l.b16 %v3619
    %v4612 = vunpack.c.h.b16 %v3619
    %v4613 = vunpack.c.l.b16 %v3620
    %v4614 = vunpack.c.h.b16 %v3620
    %v4615 = vunpack.c.l.b16 %v3621
    %v4616 = vunpack.c.h.b16 %v3621
    %v4617 = vunpack.c.l.b16 %v3622
    %v4618 = vunpack.c.h.b16 %v3622
    %v4619 = vunpack.c.l.b16 %v3623
    %v4620 = vunpack.c.h.b16 %v3623
    %v4621 = vunpack.c.l.b16 %v3624
    %v4622 = vunpack.c.h.b16 %v3624
    %v4623 = vunpack.c.l.b16 %v3625
    %v4624 = vunpack.c.h.b16 %v3625
    %v4625 = vunpack.c.l.b16 %v3626
    %v4626 = vunpack.c.h.b16 %v3626
    %v4627 = vunpack.c.l.b16 %v3627
    %v4628 = vunpack.c.h.b16 %v3627
    %v4629 = vunpack.c.l.b16 %v3628
    %v4630 = vunpack.c.h.b16 %v3628
    %v4631 = vunpack.c.l.b16 %v3629
    %v4632 = vunpack.c.h.b16 %v3629
    %v4633 = vunpack.c.l.b16 %v3630
    %v4634 = vunpack.c.h.b16 %v3630
    %v4635 = vunpack.c.l.b16 %v3631
    %v4636 = vunpack.c.h.b16 %v3631
    %v4637 = vunpack.c.l.b16 %v3632
    %v4638 = vunpack.c.h.b16 %v3632
    %v4639 = vunpack.c.l.b16 %v3633
    %v4640 = vunpack.c.h.b16 %v3633
    %v4641 = vunpack.c.l.b16 %v3634
    %v4642 = vunpack.c.h.b16 %v3634
    %v4643 = vunpack.c.l.b16 %v3635
    %v4644 = vunpack.c.h.b16 %v3635
    %v4645 = vunpack.c.l.b16 %v3636
    %v4646 = vunpack.c.h.b16 %v3636
    %v4647 = vunpack.c.l.b16 %v3637
    %v4648 = vunpack.c.h.b16 %v3637
    %v4649 = vunpack.c.l.b16 %v3638
    %v4650 = vunpack.c.h.b16 %v3638
    %v4651 = vunpack.c.l.b16 %v3639
    %v4652 = vunpack.c.h.b16 %v3639
    %v4653 = vunpack.c.l.b16 %v3640
    %v4654 = vunpack.c.h.b16 %v3640
    %v4655 = vunpack.c.l.b16 %v3641
    %v4656 = vunpack.c.h.b16 %v3641
    %v4657 = vunpack.c.l.b16 %v3642
    %v4658 = vunpack.c.h.b16 %v3642
    %v4659 = vunpack.c.l.b16 %v3643
    %v4660 = vunpack.c.h.b16 %v3643
    %v4661 = vunpack.c.l.b16 %v3644
    %v4662 = vunpack.c.h.b16 %v3644
    %v4663 = vunpack.c.l.b16 %v3645
    %v4664 = vunpack.c.h.b16 %v3645
    %v4665 = vunpack.c.l.b16 %v3646
    %v4666 = vunpack.c.h.b16 %v3646
    %v4667 = vunpack.c.l.b16 %v3647
    %v4668 = vunpack.c.h.b16 %v3647
    %v4669 = vunpack.c.l.b16 %v3648
    %v4670 = vunpack.c.h.b16 %v3648
    %v4671 = vunpack.c.l.b16 %v3649
    %v4672 = vunpack.c.h.b16 %v3649
    %v4673 = vunpack.c.l.b16 %v3650
    %v4674 = vunpack.c.h.b16 %v3650
    %v4675 = vunpack.c.l.b16 %v3651
    %v4676 = vunpack.c.h.b16 %v3651
    %v4677 = vunpack.c.l.b16 %v3652
    %v4678 = vunpack.c.h.b16 %v3652
    %v4679 = vunpack.c.l.b16 %v3653
    %v4680 = vunpack.c.h.b16 %v3653
    %v4681 = vunpack.c.l.b16 %v3654
    %v4682 = vunpack.c.h.b16 %v3654
    %v4683 = vunpack.c.l.b16 %v3655
    %v4684 = vunpack.c.h.b16 %v3655
    %v4685 = vunpack.c.l.b16 %v3656
    %v4686 = vunpack.c.h.b16 %v3656
    %v4687 = vunpack.c.l.b16 %v3657
    %v4688 = vunpack.c.h.b16 %v3657
    %v4689 = vunpack.c.l.b16 %v3658
    %v4690 = vunpack.c.h.b16 %v3658
    %v4691 = vunpack.c.l.b16 %v3659
    %v4692 = vunpack.c.h.b16 %v3659
    %v4693 = vunpack.c.l.b16 %v3660
    %v4694 = vunpack.c.h.b16 %v3660
    %v4695 = vunpack.c.l.b16 %v3661
    %v4696 = vunpack.c.h.b16 %v3661
    %v4697 = vunpack.c.l.b16 %v3662
    %v4698 = vunpack.c.h.b16 %v3662
    %v4699 = vunpack.c.l.b16 %v3663
    %v4700 = vunpack.c.h.b16 %v3663
    %v4701 = vunpack.c.l.b16 %v3664
    %v4702 = vunpack.c.h.b16 %v3664
    %v4703 = vunpack.c.l.b16 %v3665
    %v4704 = vunpack.c.h.b16 %v3665
    %v4705 = vunpack.c.l.b16 %v3666
    %v4706 = vunpack.c.h.b16 %v3666
    %v4707 = vunpack.c.l.b16 %v3667
    %v4708 = vunpack.c.h.b16 %v3667
    %v4709 = vunpack.c.l.b16 %v3668
    %v4710 = vunpack.c.h.b16 %v3668
    %v4711 = vunpack.c.l.b16 %v3669
    %v4712 = vunpack.c.h.b16 %v3669
    %v4713 = vunpack.c.l.b16 %v3670
    %v4714 = vunpack.c.h.b16 %v3670
    %v4715 = vunpack.c.l.b16 %v3671
    %v4716 = vunpack.c.h.b16 %v3671
    %v4717 = vunpack.c.l.b16 %v3672
    %v4718 = vunpack.c.h.b16 %v3672
    %v4719 = vunpack.c.l.b16 %v3673
    %v4720 = vunpack.c.h.b16 %v3673
    %v4721 = vunpack.c.l.b16 %v3674
    %v4722 = vunpack.c.h.b16 %v3674
    %v4723 = vunpack.c.l.b16 %v3675
    %v4724 = vunpack.c.h.b16 %v3675
    %v4725 = vunpack.c.l.b16 %v3676
    %v4726 = vunpack.c.h.b16 %v3676
    %v4727 = vunpack.c.l.b16 %v3677
    %v4728 = vunpack.c.h.b16 %v3677
    %v4729 = vunpack.c.l.b16 %v3678
    %v4730 = vunpack.c.h.b16 %v3678
    %v4731 = vunpack.c.l.b16 %v3679
    %v4732 = vunpack.c.h.b16 %v3679
    %v4733 = vunpack.c.l.b16 %v3680
    %v4734 = vunpack.c.h.b16 %v3680
    %v4735 = vunpack.c.l.b16 %v3681
    %v4736 = vunpack.c.h.b16 %v3681
    %v4737 = vunpack.c.l.b16 %v3682
    %v4738 = vunpack.c.h.b16 %v3682
    %v4739 = vunpack.c.l.b16 %v3683
    %v4740 = vunpack.c.h.b16 %v3683
    %v4741 = vunpack.c.l.b16 %v3684
    %v4742 = vunpack.c.h.b16 %v3684
    %v4743 = vunpack.c.l.b16 %v3685
    %v4744 = vunpack.c.h.b16 %v3685
    %v4745 = vunpack.c.l.b16 %v3686
    %v4746 = vunpack.c.h.b16 %v3686
    %v4747 = vunpack.c.l.b16 %v3687
    %v4748 = vunpack.c.h.b16 %v3687
    %v4749 = vunpack.c.l.b16 %v3688
    %v4750 = vunpack.c.h.b16 %v3688
    %v4751 = vunpack.c.l.b16 %v3689
    %v4752 = vunpack.c.h.b16 %v3689
    %v4753 = vunpack.c.l.b16 %v3690
    %v4754 = vunpack.c.h.b16 %v3690
    %v4755 = vunpack.c.l.b16 %v3691
    %v4756 = vunpack.c.h.b16 %v3691
    %v4757 = vunpack.c.l.b16 %v3692
    %v4758 = vunpack.c.h.b16 %v3692
    %v4759 = vunpack.c.l.b16 %v3693
    %v4760 = vunpack.c.h.b16 %v3693
    %v4761 = vunpack.c.l.b16 %v3694
    %v4762 = vunpack.c.h.b16 %v3694
    %v4763 = vunpack.c.l.b16 %v3695
    %v4764 = vunpack.c.h.b16 %v3695
    %v4765 = vunpack.c.l.b16 %v3696
    %v4766 = vunpack.c.h.b16 %v3696
    %v4767 = vunpack.c.l.b16 %v3697
    %v4768 = vunpack.c.h.b16 %v3697
    %v4769 = vunpack.c.l.b16 %v3698
    %v4770 = vunpack.c.h.b16 %v3698
    %v4771 = vunpack.c.l.b16 %v3699
    %v4772 = vunpack.c.h.b16 %v3699
    %v4773 = vunpack.c.l.b16 %v3700
    %v4774 = vunpack.c.h.b16 %v3700
    %v4775 = vunpack.c.l.b16 %v3701
    %v4776 = vunpack.c.h.b16 %v3701
    %v4777 = vunpack.c.l.b16 %v3702
    %v4778 = vunpack.c.h.b16 %v3702
    %v4779 = vunpack.c.l.b16 %v3703
    %v4780 = vunpack.c.h.b16 %v3703
    %v4781 = vunpack.c.l.b16 %v3704
    %v4782 = vunpack.c.h.b16 %v3704
    %v4783 = vunpack.c.l.b16 %v3705
    %v4784 = vunpack.c.h.b16 %v3705
    %v4785 = vunpack.c.l.b16 %v3706
    %v4786 = vunpack.c.h.b16 %v3706
    %v4787 = vunpack.c.l.b16 %v3707
    %v4788 = vunpack.c.h.b16 %v3707
    %v4789 = vunpack.c.l.b16 %v3708
    %v4790 = vunpack.c.h.b16 %v3708
    %v4791 = vunpack.c.l.b16 %v3709
    %v4792 = vunpack.c.h.b16 %v3709
    %v4793 = vunpack.c.l.b16 %v3710
    %v4794 = vunpack.c.h.b16 %v3710
    %v4795 = vunpack.c.l.b16 %v3711
    %v4796 = vunpack.c.h.b16 %v3711
    %v4797 = vunpack.c.l.b16 %v3712
    %v4798 = vunpack.c.h.b16 %v3712
    %v4799 = vunpack.c.l.b16 %v3713
    %v4800 = vunpack.c.h.b16 %v3713
    %v4801 = vunpack.c.l.b16 %v3714
    %v4802 = vunpack.c.h.b16 %v3714
    %v4803 = vunpack.c.l.b16 %v3715
    %v4804 = vunpack.c.h.b16 %v3715
    %v4805 = vunpack.c.l.b16 %v3716
    %v4806 = vunpack.c.h.b16 %v3716
    %v4807 = vunpack.c.l.b16 %v3717
    %v4808 = vunpack.c.h.b16 %v3717
    %v4809 = vunpack.c.l.b16 %v3718
    %v4810 = vunpack.c.h.b16 %v3718
    %v4811 = vunpack.c.l.b16 %v3719
    %v4812 = vunpack.c.h.b16 %v3719
    %v4813 = vunpack.c.l.b16 %v3720
    %v4814 = vunpack.c.h.b16 %v3720
    %v4815 = vunpack.c.l.b16 %v3721
    %v4816 = vunpack.c.h.b16 %v3721
    %v4817 = vunpack.c.l.b16 %v3722
    %v4818 = vunpack.c.h.b16 %v3722
    %v4819 = vunpack.c.l.b16 %v3723
    %v4820 = vunpack.c.h.b16 %v3723
    %v4821 = vunpack.c.l.b16 %v3724
    %v4822 = vunpack.c.h.b16 %v3724
    %v4823 = vunpack.c.l.b16 %v3725
    %v4824 = vunpack.c.h.b16 %v3725
    %v4825 = vunpack.c.l.b16 %v3726
    %v4826 = vunpack.c.h.b16 %v3726
    %v4827 = vunpack.c.l.b16 %v3727
    %v4828 = vunpack.c.h.b16 %v3727
    %v4829 = vunpack.c.l.b16 %v3728
    %v4830 = vunpack.c.h.b16 %v3728
    %v4831 = vunpack.c.l.b16 %v3729
    %v4832 = vunpack.c.h.b16 %v3729
    %v4833 = vunpack.c.l.b16 %v3730
    %v4834 = vunpack.c.h.b16 %v3730
    %v4835 = vunpack.c.l.b16 %v3731
    %v4836 = vunpack.c.h.b16 %v3731
    %v4837 = vunpack.c.l.b16 %v3732
    %v4838 = vunpack.c.h.b16 %v3732
    %v4839 = vunpack.c.l.b16 %v3733
    %v4840 = vunpack.c.h.b16 %v3733
    %v4841 = vunpack.c.l.b16 %v3734
    %v4842 = vunpack.c.h.b16 %v3734
    %v4843 = vunpack.c.l.b16 %v3735
    %v4844 = vunpack.c.h.b16 %v3735
    %v4845 = vunpack.c.l.b16 %v3736
    %v4846 = vunpack.c.h.b16 %v3736
    %v4847 = vunpack.c.l.b16 %v3737
    %v4848 = vunpack.c.h.b16 %v3737
    %v4849 = vunpack.c.l.b16 %v3738
    %v4850 = vunpack.c.h.b16 %v3738
    %v4851 = vunpack.c.l.b16 %v3739
    %v4852 = vunpack.c.h.b16 %v3739
    %v4853 = vunpack.c.l.b16 %v3740
    %v4854 = vunpack.c.h.b16 %v3740
    %v4855 = vunpack.c.l.b16 %v3741
    %v4856 = vunpack.c.h.b16 %v3741
    %v4857 = vunpack.c.l.b16 %v3742
    %v4858 = vunpack.c.h.b16 %v3742
    %v4859 = vunpack.c.l.b16 %v3743
    %v4860 = vunpack.c.h.b16 %v3743
    %v4861 = vunpack.c.l.b16 %v3744
    %v4862 = vunpack.c.h.b16 %v3744
    %v4863 = vunpack.c.l.b16 %v3745
    %v4864 = vunpack.c.h.b16 %v3745
    %v4865 = vunpack.c.l.b16 %v3746
    %v4866 = vunpack.c.h.b16 %v3746
    %v4867 = vunpack.c.l.b16 %v3747
    %v4868 = vunpack.c.h.b16 %v3747
    %v4869 = vunpack.c.l.b16 %v3748
    %v4870 = vunpack.c.h.b16 %v3748
    %v4871 = vunpack.c.l.b16 %v3749
    %v4872 = vunpack.c.h.b16 %v3749
    %v4873 = vunpack.c.l.b16 %v3750
    %v4874 = vunpack.c.h.b16 %v3750
    %v4875 = vunpack.c.l.b16 %v3751
    %v4876 = vunpack.c.h.b16 %v3751
    %v4877 = vunpack.c.l.b16 %v3752
    %v4878 = vunpack.c.h.b16 %v3752
    %v4879 = vunpack.c.l.b16 %v3753
    %v4880 = vunpack.c.h.b16 %v3753
    %v4881 = vunpack.c.l.b16 %v3754
    %v4882 = vunpack.c.h.b16 %v3754
    %v4883 = vunpack.c.l.b16 %v3755
    %v4884 = vunpack.c.h.b16 %v3755
    %v4885 = vunpack.c.l.b16 %v3756
    %v4886 = vunpack.c.h.b16 %v3756
    %v4887 = vunpack.c.l.b16 %v3757
    %v4888 = vunpack.c.h.b16 %v3757
    %v4889 = vunpack.c.l.b16 %v3758
    %v4890 = vunpack.c.h.b16 %v3758
    %v4891 = vunpack.c.l.b16 %v3759
    %v4892 = vunpack.c.h.b16 %v3759
    %v4893 = vunpack.c.l.b16 %v3760
    %v4894 = vunpack.c.h.b16 %v3760
    %v4895 = vunpack.c.l.b16 %v3761
    %v4896 = vunpack.c.h.b16 %v3761
    %v4897 = vunpack.c.l.b16 %v3762
    %v4898 = vunpack.c.h.b16 %v3762
    %v4899 = vunpack.c.l.b16 %v3763
    %v4900 = vunpack.c.h.b16 %v3763
    %v4901 = vunpack.c.l.b16 %v3764
    %v4902 = vunpack.c.h.b16 %v3764
    %v4903 = vunpack.c.l.b16 %v3765
    %v4904 = vunpack.c.h.b16 %v3765
    %v4905 = vunpack.c.l.b16 %v3766
    %v4906 = vunpack.c.h.b16 %v3766
    %v4907 = vunpack.c.l.b16 %v3767
    %v4908 = vunpack.c.h.b16 %v3767
    %v4909 = vunpack.c.l.b16 %v3768
    %v4910 = vunpack.c.h.b16 %v3768
    %v4911 = vunpack.c.l.b16 %v3769
    %v4912 = vunpack.c.h.b16 %v3769
    %v4913 = vunpack.c.l.b16 %v3770
    %v4914 = vunpack.c.h.b16 %v3770
    %v4915 = vunpack.c.l.b16 %v3771
    %v4916 = vunpack.c.h.b16 %v3771
    %v4917 = vunpack.c.l.b16 %v3772
    %v4918 = vunpack.c.h.b16 %v3772
    %v4919 = vunpack.c.l.b16 %v3773
    %v4920 = vunpack.c.h.b16 %v3773
    %v4921 = vunpack.c.l.b16 %v3774
    %v4922 = vunpack.c.h.b16 %v3774
    %v4923 = vunpack.c.l.b16 %v3775
    %v4924 = vunpack.c.h.b16 %v3775
    %v4925 = vunpack.c.l.b16 %v3776
    %v4926 = vunpack.c.h.b16 %v3776
    %v4927 = vunpack.c.l.b16 %v3777
    %v4928 = vunpack.c.h.b16 %v3777
    %v4929 = vunpack.c.l.b16 %v3778
    %v4930 = vunpack.c.h.b16 %v3778
    %v4931 = vunpack.c.l.b16 %v3779
    %v4932 = vunpack.c.h.b16 %v3779
    %v4933 = vunpack.c.l.b16 %v3780
    %v4934 = vunpack.c.h.b16 %v3780
    %v4935 = vunpack.c.l.b16 %v3781
    %v4936 = vunpack.c.h.b16 %v3781
    %v4937 = vunpack.c.l.b16 %v3782
    %v4938 = vunpack.c.h.b16 %v3782
    %v4939 = vunpack.c.l.b16 %v3783
    %v4940 = vunpack.c.h.b16 %v3783
    %v4941 = vunpack.c.l.b16 %v3784
    %v4942 = vunpack.c.h.b16 %v3784
    %v4943 = vunpack.c.l.b16 %v3785
    %v4944 = vunpack.c.h.b16 %v3785
    %v4945 = vunpack.c.l.b16 %v3786
    %v4946 = vunpack.c.h.b16 %v3786
    %v4947 = vunpack.c.l.b16 %v3787
    %v4948 = vunpack.c.h.b16 %v3787
    %v4949 = vunpack.c.l.b16 %v3788
    %v4950 = vunpack.c.h.b16 %v3788
    %v4951 = vunpack.c.l.b16 %v3789
    %v4952 = vunpack.c.h.b16 %v3789
    %v4953 = vunpack.c.l.b16 %v3790
    %v4954 = vunpack.c.h.b16 %v3790
    %v4955 = vunpack.c.l.b16 %v3791
    %v4956 = vunpack.c.h.b16 %v3791
    %v4957 = vunpack.c.l.b16 %v3792
    %v4958 = vunpack.c.h.b16 %v3792
    %v4959 = vunpack.c.l.b16 %v3793
    %v4960 = vunpack.c.h.b16 %v3793
    %v4961 = vunpack.c.l.b16 %v3794
    %v4962 = vunpack.c.h.b16 %v3794
    %v4963 = vunpack.c.l.b16 %v3795
    %v4964 = vunpack.c.h.b16 %v3795
    %v4965 = vunpack.c.l.b16 %v3796
    %v4966 = vunpack.c.h.b16 %v3796
    %v4967 = vunpack.c.l.b16 %v3797
    %v4968 = vunpack.c.h.b16 %v3797
    %v4969 = vunpack.c.l.b16 %v3798
    %v4970 = vunpack.c.h.b16 %v3798
    %v4971 = vunpack.c.l.b16 %v3799
    %v4972 = vunpack.c.h.b16 %v3799
    %v4973 = vunpack.c.l.b16 %v3800
    %v4974 = vunpack.c.h.b16 %v3800
    %v4975 = vunpack.c.l.b16 %v3801
    %v4976 = vunpack.c.h.b16 %v3801
    %v4977 = vunpack.c.l.b16 %v3802
    %v4978 = vunpack.c.h.b16 %v3802
    %v4979 = vunpack.c.l.b16 %v3803
    %v4980 = vunpack.c.h.b16 %v3803
    %v4981 = vunpack.c.l.b16 %v3804
    %v4982 = vunpack.c.h.b16 %v3804
    %v4983 = vunpack.c.l.b16 %v3805
    %v4984 = vunpack.c.h.b16 %v3805
    %v4985 = vunpack.c.l.b16 %v3806
    %v4986 = vunpack.c.h.b16 %v3806
    %v4987 = vunpack.c.l.b16 %v3807
    %v4988 = vunpack.c.h.b16 %v3807
    %v4989 = vunpack.c.l.b16 %v3808
    %v4990 = vunpack.c.h.b16 %v3808
    %v4991 = vunpack.c.l.b16 %v3809
    %v4992 = vunpack.c.h.b16 %v3809
    %v4993 = vunpack.c.l.b16 %v3810
    %v4994 = vunpack.c.h.b16 %v3810
    %v4995 = vpack.c.b16 %v4233, %v4227
    %v4996 = vpack.c.b16 %v4234, %v4228
    %v4997 = vpack.c.b16 %v4235, %v4229
    %v4998 = vpack.c.b16 %v4236, %v4230
    %v4999 = vpack.c.b16 %v4237, %v4231
    %v5000 = vpack.c.b16 %v4238, %v4232
    %v5001 = vpack.c.b16 %v4245, %v4239
    %v5002 = vpack.c.b16 %v4246, %v4240
    %v5003 = vpack.c.b16 %v4247, %v4241
    %v5004 = vpack.c.b16 %v4248, %v4242
    %v5005 = vpack.c.b16 %v4249, %v4243
    %v5006 = vpack.c.b16 %v4250, %v4244
    %v5007 = vpack.c.b16 %v4257, %v4251
    %v5008 = vpack.c.b16 %v4258, %v4252
    %v5009 = vpack.c.b16 %v4259, %v4253
    %v5010 = vpack.c.b16 %v4260, %v4254
    %v5011 = vpack.c.b16 %v4261, %v4255
    %v5012 = vpack.c.b16 %v4262, %v4256
    %v5013 = vpack.c.b16 %v4269, %v4263
    %v5014 = vpack.c.b16 %v4270, %v4264
    %v5015 = vpack.c.b16 %v4271, %v4265
    %v5016 = vpack.c.b16 %v4272, %v4266
    %v5017 = vpack.c.b16 %v4273, %v4267
    %v5018 = vpack.c.b16 %v4274, %v4268
    %v5019 = vpack.c.b16 %v4281, %v4275
    %v5020 = vpack.c.b16 %v4282, %v4276
    %v5021 = vpack.c.b16 %v4283, %v4277
    %v5022 = vpack.c.b16 %v4284, %v4278
    %v5023 = vpack.c.b16 %v4285, %v4279
    %v5024 = vpack.c.b16 %v4286, %v4280
    %v5025 = vpack.c.b16 %v4293, %v4287
    %v5026 = vpack.c.b16 %v4294, %v4288
    %v5027 = vpack.c.b16 %v4295, %v4289
    %v5028 = vpack.c.b16 %v4296, %v4290
    %v5029 = vpack.c.b16 %v4297, %v4291
    %v5030 = vpack.c.b16 %v4298, %v4292
    %v5031 = vpack.c.b16 %v4305, %v4299
    %v5032 = vpack.c.b16 %v4306, %v4300
    %v5033 = vpack.c.b16 %v4307, %v4301
    %v5034 = vpack.c.b16 %v4308, %v4302
    %v5035 = vpack.c.b16 %v4309, %v4303
    %v5036 = vpack.c.b16 %v4310, %v4304
    %v5037 = vpack.c.b16 %v4317, %v4311
    %v5038 = vpack.c.b16 %v4318, %v4312
    %v5039 = vpack.c.b16 %v4319, %v4313
    %v5040 = vpack.c.b16 %v4320, %v4314
    %v5041 = vpack.c.b16 %v4321, %v4315
    %v5042 = vpack.c.b16 %v4322, %v4316
    %v5043 = vpack.c.b16 %v4329, %v4323
    %v5044 = vpack.c.b16 %v4330, %v4324
    %v5045 = vpack.c.b16 %v4331, %v4325
    %v5046 = vpack.c.b16 %v4332, %v4326
    %v5047 = vpack.c.b16 %v4333, %v4327
    %v5048 = vpack.c.b16 %v4334, %v4328
    %v5049 = vpack.c.b16 %v4341, %v4335
    %v5050 = vpack.c.b16 %v4342, %v4336
    %v5051 = vpack.c.b16 %v4343, %v4337
    %v5052 = vpack.c.b16 %v4344, %v4338
    %v5053 = vpack.c.b16 %v4345, %v4339
    %v5054 = vpack.c.b16 %v4346, %v4340
    %v5055 = vpack.c.b16 %v4353, %v4347
    %v5056 = vpack.c.b16 %v4354, %v4348
    %v5057 = vpack.c.b16 %v4355, %v4349
    %v5058 = vpack.c.b16 %v4356, %v4350
    %v5059 = vpack.c.b16 %v4357, %v4351
    %v5060 = vpack.c.b16 %v4358, %v4352
    %v5061 = vpack.c.b16 %v4365, %v4359
    %v5062 = vpack.c.b16 %v4366, %v4360
    %v5063 = vpack.c.b16 %v4367, %v4361
    %v5064 = vpack.c.b16 %v4368, %v4362
    %v5065 = vpack.c.b16 %v4369, %v4363
    %v5066 = vpack.c.b16 %v4370, %v4364
    %v5067 = vpack.c.b16 %v4377, %v4371
    %v5068 = vpack.c.b16 %v4378, %v4372
    %v5069 = vpack.c.b16 %v4379, %v4373
    %v5070 = vpack.c.b16 %v4380, %v4374
    %v5071 = vpack.c.b16 %v4381, %v4375
    %v5072 = vpack.c.b16 %v4382, %v4376
    %v5073 = vpack.c.b16 %v4389, %v4383
    %v5074 = vpack.c.b16 %v4390, %v4384
    %v5075 = vpack.c.b16 %v4391, %v4385
    %v5076 = vpack.c.b16 %v4392, %v4386
    %v5077 = vpack.c.b16 %v4393, %v4387
    %v5078 = vpack.c.b16 %v4394, %v4388
    %v5079 = vpack.c.b16 %v4401, %v4395
    %v5080 = vpack.c.b16 %v4402, %v4396
    %v5081 = vpack.c.b16 %v4403, %v4397
    %v5082 = vpack.c.b16 %v4404, %v4398
    %v5083 = vpack.c.b16 %v4405, %v4399
    %v5084 = vpack.c.b16 %v4406, %v4400
    %v5085 = vpack.c.b16 %v4413, %v4407
    %v5086 = vpack.c.b16 %v4414, %v4408
    %v5087 = vpack.c.b16 %v4415, %v4409
    %v5088 = vpack.c.b16 %v4416, %v4410
    %v5089 = vpack.c.b16 %v4417, %v4411
    %v5090 = vpack.c.b16 %v4418, %v4412
    %v5091 = vpack.c.b16 %v4425, %v4419
    %v5092 = vpack.c.b16 %v4426, %v4420
    %v5093 = vpack.c.b16 %v4427, %v4421
    %v5094 = vpack.c.b16 %v4428, %v4422
    %v5095 = vpack.c.b16 %v4429, %v4423
    %v5096 = vpack.c.b16 %v4430, %v4424
    %v5097 = vpack.c.b16 %v4437, %v4431
    %v5098 = vpack.c.b16 %v4438, %v4432
    %v5099 = vpack.c.b16 %v4439, %v4433
    %v5100 = vpack.c.b16 %v4440, %v4434
    %v5101 = vpack.c.b16 %v4441, %v4435
    %v5102 = vpack.c.b16 %v4442, %v4436
    %v5103 = vpack.c.b16 %v4449, %v4443
    %v5104 = vpack.c.b16 %v4450, %v4444
    %v5105 = vpack.c.b16 %v4451, %v4445
    %v5106 = vpack.c.b16 %v4452, %v4446
    %v5107 = vpack.c.b16 %v4453, %v4447
    %v5108 = vpack.c.b16 %v4454, %v4448
    %v5109 = vpack.c.b16 %v4461, %v4455
    %v5110 = vpack.c.b16 %v4462, %v4456
    %v5111 = vpack.c.b16 %v4463, %v4457
    %v5112 = vpack.c.b16 %v4464, %v4458
    %v5113 = vpack.c.b16 %v4465, %v4459
    %v5114 = vpack.c.b16 %v4466, %v4460
    %v5115 = vpack.c.b16 %v4473, %v4467
    %v5116 = vpack.c.b16 %v4474, %v4468
    %v5117 = vpack.c.b16 %v4475, %v4469
    %v5118 = vpack.c.b16 %v4476, %v4470
    %v5119 = vpack.c.b16 %v4477, %v4471
    %v5120 = vpack.c.b16 %v4478, %v4472
    %v5121 = vpack.c.b16 %v4485, %v4479
    %v5122 = vpack.c.b16 %v4486, %v4480
    %v5123 = vpack.c.b16 %v4487, %v4481
    %v5124 = vpack.c.b16 %v4488, %v4482
    %v5125 = vpack.c.b16 %v4489, %v4483
    %v5126 = vpack.c.b16 %v4490, %v4484
    %v5127 = vpack.c.b16 %v4497, %v4491
    %v5128 = vpack.c.b16 %v4498, %v4492
    %v5129 = vpack.c.b16 %v4499, %v4493
    %v5130 = vpack.c.b16 %v4500, %v4494
    %v5131 = vpack.c.b16 %v4501, %v4495
    %v5132 = vpack.c.b16 %v4502, %v4496
    %v5133 = vpack.c.b16 %v4509, %v4503
    %v5134 = vpack.c.b16 %v4510, %v4504
    %v5135 = vpack.c.b16 %v4511, %v4505
    %v5136 = vpack.c.b16 %v4512, %v4506
    %v5137 = vpack.c.b16 %v4513, %v4507
    %v5138 = vpack.c.b16 %v4514, %v4508
    %v5139 = vpack.c.b16 %v4521, %v4515
    %v5140 = vpack.c.b16 %v4522, %v4516
    %v5141 = vpack.c.b16 %v4523, %v4517
    %v5142 = vpack.c.b16 %v4524, %v4518
    %v5143 = vpack.c.b16 %v4525, %v4519
    %v5144 = vpack.c.b16 %v4526, %v4520
    %v5145 = vpack.c.b16 %v4533, %v4527
    %v5146 = vpack.c.b16 %v4534, %v4528
    %v5147 = vpack.c.b16 %v4535, %v4529
    %v5148 = vpack.c.b16 %v4536, %v4530
    %v5149 = vpack.c.b16 %v4537, %v4531
    %v5150 = vpack.c.b16 %v4538, %v4532
    %v5151 = vpack.c.b16 %v4545, %v4539
    %v5152 = vpack.c.b16 %v4546, %v4540
    %v5153 = vpack.c.b16 %v4547, %v4541
    %v5154 = vpack.c.b16 %v4548, %v4542
    %v5155 = vpack.c.b16 %v4549, %v4543
    %v5156 = vpack.c.b16 %v4550, %v4544
    %v5157 = vpack.c.b16 %v4557, %v4551
    %v5158 = vpack.c.b16 %v4558, %v4552
    %v5159 = vpack.c.b16 %v4559, %v4553
    %v5160 = vpack.c.b16 %v4560, %v4554
    %v5161 = vpack.c.b16 %v4561, %v4555
    %v5162 = vpack.c.b16 %v4562, %v4556
    %v5163 = vpack.c.b16 %v4569, %v4563
    %v5164 = vpack.c.b16 %v4570, %v4564
    %v5165 = vpack.c.b16 %v4571, %v4565
    %v5166 = vpack.c.b16 %v4572, %v4566
    %v5167 = vpack.c.b16 %v4573, %v4567
    %v5168 = vpack.c.b16 %v4574, %v4568
    %v5169 = vpack.c.b16 %v4581, %v4575
    %v5170 = vpack.c.b16 %v4582, %v4576
    %v5171 = vpack.c.b16 %v4583, %v4577
    %v5172 = vpack.c.b16 %v4584, %v4578
    %v5173 = vpack.c.b16 %v4585, %v4579
    %v5174 = vpack.c.b16 %v4586, %v4580
    %v5175 = vpack.c.b16 %v4593, %v4587
    %v5176 = vpack.c.b16 %v4594, %v4588
    %v5177 = vpack.c.b16 %v4595, %v4589
    %v5178 = vpack.c.b16 %v4596, %v4590
    %v5179 = vpack.c.b16 %v4597, %v4591
    %v5180 = vpack.c.b16 %v4598, %v4592
    %v5181 = vpack.c.b16 %v4605, %v4599
    %v5182 = vpack.c.b16 %v4606, %v4600
    %v5183 = vpack.c.b16 %v4607, %v4601
    %v5184 = vpack.c.b16 %v4608, %v4602
    %v5185 = vpack.c.b16 %v4609, %v4603
    %v5186 = vpack.c.b16 %v4610, %v4604
    %v5187 = vpack.c.b16 %v4617, %v4611
    %v5188 = vpack.c.b16 %v4618, %v4612
    %v5189 = vpack.c.b16 %v4619, %v4613
    %v5190 = vpack.c.b16 %v4620, %v4614
    %v5191 = vpack.c.b16 %v4621, %v4615
    %v5192 = vpack.c.b16 %v4622, %v4616
    %v5193 = vpack.c.b16 %v4629, %v4623
    %v5194 = vpack.c.b16 %v4630, %v4624
    %v5195 = vpack.c.b16 %v4631, %v4625
    %v5196 = vpack.c.b16 %v4632, %v4626
    %v5197 = vpack.c.b16 %v4633, %v4627
    %v5198 = vpack.c.b16 %v4634, %v4628
    %v5199 = vpack.c.b16 %v4641, %v4635
    %v5200 = vpack.c.b16 %v4642, %v4636
    %v5201 = vpack.c.b16 %v4643, %v4637
    %v5202 = vpack.c.b16 %v4644, %v4638
    %v5203 = vpack.c.b16 %v4645, %v4639
    %v5204 = vpack.c.b16 %v4646, %v4640
    %v5205 = vpack.c.b16 %v4653, %v4647
    %v5206 = vpack.c.b16 %v4654, %v4648
    %v5207 = vpack.c.b16 %v4655, %v4649
    %v5208 = vpack.c.b16 %v4656, %v4650
    %v5209 = vpack.c.b16 %v4657, %v4651
    %v5210 = vpack.c.b16 %v4658, %v4652
    %v5211 = vpack.c.b16 %v4665, %v4659
    %v5212 = vpack.c.b16 %v4666, %v4660
    %v5213 = vpack.c.b16 %v4667, %v4661
    %v5214 = vpack.c.b16 %v4668, %v4662
    %v5215 = vpack.c.b16 %v4669, %v4663
    %v5216 = vpack.c.b16 %v4670, %v4664
    %v5217 = vpack.c.b16 %v4677, %v4671
    %v5218 = vpack.c.b16 %v4678, %v4672
    %v5219 = vpack.c.b16 %v4679, %v4673
    %v5220 = vpack.c.b16 %v4680, %v4674
    %v5221 = vpack.c.b16 %v4681, %v4675
    %v5222 = vpack.c.b16 %v4682, %v4676
    %v5223 = vpack.c.b16 %v4689, %v4683
    %v5224 = vpack.c.b16 %v4690, %v4684
    %v5225 = vpack.c.b16 %v4691, %v4685
    %v5226 = vpack.c.b16 %v4692, %v4686
    %v5227 = vpack.c.b16 %v4693, %v4687
    %v5228 = vpack.c.b16 %v4694, %v4688
    %v5229 = vpack.c.b16 %v4701, %v4695
    %v5230 = vpack.c.b16 %v4702, %v4696
    %v5231 = vpack.c.b16 %v4703, %v4697
    %v5232 = vpack.c.b16 %v4704, %v4698
    %v5233 = vpack.c.b16 %v4705, %v4699
    %v5234 = vpack.c.b16 %v4706, %v4700
    %v5235 = vpack.c.b16 %v4713, %v4707
    %v5236 = vpack.c.b16 %v4714, %v4708
    %v5237 = vpack.c.b16 %v4715, %v4709
    %v5238 = vpack.c.b16 %v4716, %v4710
    %v5239 = vpack.c.b16 %v4717, %v4711
    %v5240 = vpack.c.b16 %v4718, %v4712
    %v5241 = vpack.c.b16 %v4725, %v4719
    %v5242 = vpack.c.b16 %v4726, %v4720
    %v5243 = vpack.c.b16 %v4727, %v4721
    %v5244 = vpack.c.b16 %v4728, %v4722
    %v5245 = vpack.c.b16 %v4729, %v4723
    %v5246 = vpack.c.b16 %v4730, %v4724
    %v5247 = vpack.c.b16 %v4737, %v4731
    %v5248 = vpack.c.b16 %v4738, %v4732
    %v5249 = vpack.c.b16 %v4739, %v4733
    %v5250 = vpack.c.b16 %v4740, %v4734
    %v5251 = vpack.c.b16 %v4741, %v4735
    %v5252 = vpack.c.b16 %v4742, %v4736
    %v5253 = vpack.c.b16 %v4749, %v4743
    %v5254 = vpack.c.b16 %v4750, %v4744
    %v5255 = vpack.c.b16 %v4751, %v4745
    %v5256 = vpack.c.b16 %v4752, %v4746
    %v5257 = vpack.c.b16 %v4753, %v4747
    %v5258 = vpack.c.b16 %v4754, %v4748
    %v5259 = vpack.c.b16 %v4761, %v4755
    %v5260 = vpack.c.b16 %v4762, %v4756
    %v5261 = vpack.c.b16 %v4763, %v4757
    %v5262 = vpack.c.b16 %v4764, %v4758
    %v5263 = vpack.c.b16 %v4765, %v4759
    %v5264 = vpack.c.b16 %v4766, %v4760
    %v5265 = vpack.c.b16 %v4773, %v4767
    %v5266 = vpack.c.b16 %v4774, %v4768
    %v5267 = vpack.c.b16 %v4775, %v4769
    %v5268 = vpack.c.b16 %v4776, %v4770
    %v5269 = vpack.c.b16 %v4777, %v4771
    %v5270 = vpack.c.b16 %v4778, %v4772
    %v5271 = vpack.c.b16 %v4785, %v4779
    %v5272 = vpack.c.b16 %v4786, %v4780
    %v5273 = vpack.c.b16 %v4787, %v4781
    %v5274 = vpack.c.b16 %v4788, %v4782
    %v5275 = vpack.c.b16 %v4789, %v4783
    %v5276 = vpack.c.b16 %v4790, %v4784
    %v5277 = vpack.c.b16 %v4797, %v4791
    %v5278 = vpack.c.b16 %v4798, %v4792
    %v5279 = vpack.c.b16 %v4799, %v4793
    %v5280 = vpack.c.b16 %v4800, %v4794
    %v5281 = vpack.c.b16 %v4801, %v4795
    %v5282 = vpack.c.b16 %v4802, %v4796
    %v5283 = vpack.c.b16 %v4809, %v4803
    %v5284 = vpack.c.b16 %v4810, %v4804
    %v5285 = vpack.c.b16 %v4811, %v4805
    %v5286 = vpack.c.b16 %v4812, %v4806
    %v5287 = vpack.c.b16 %v4813, %v4807
    %v5288 = vpack.c.b16 %v4814, %v4808
    %v5289 = vpack.c.b16 %v4821, %v4815
    %v5290 = vpack.c.b16 %v4822, %v4816
    %v5291 = vpack.c.b16 %v4823, %v4817
    %v5292 = vpack.c.b16 %v4824, %v4818
    %v5293 = vpack.c.b16 %v4825, %v4819
    %v5294 = vpack.c.b16 %v4826, %v4820
    %v5295 = vpack.c.b16 %v4833, %v4827
    %v5296 = vpack.c.b16 %v4834, %v4828
    %v5297 = vpack.c.b16 %v4835, %v4829
    %v5298 = vpack.c.b16 %v4836, %v4830
    %v5299 = vpack.c.b16 %v4837, %v4831
    %v5300 = vpack.c.b16 %v4838, %v4832
    %v5301 = vpack.c.b16 %v4845, %v4839
    %v5302 = vpack.c.b16 %v4846, %v4840
    %v5303 = vpack.c.b16 %v4847, %v4841
    %v5304 = vpack.c.b16 %v4848, %v4842
    %v5305 = vpack.c.b16 %v4849, %v4843
    %v5306 = vpack.c.b16 %v4850, %v4844
    %v5307 = vpack.c.b16 %v4857, %v4851
    %v5308 = vpack.c.b16 %v4858, %v4852
    %v5309 = vpack.c.b16 %v4859, %v4853
    %v5310 = vpack.c.b16 %v4860, %v4854
    %v5311 = vpack.c.b16 %v4861, %v4855
    %v5312 = vpack.c.b16 %v4862, %v4856
    %v5313 = vpack.c.b16 %v4869, %v4863
    %v5314 = vpack.c.b16 %v4870, %v4864
    %v5315 = vpack.c.b16 %v4871, %v4865
    %v5316 = vpack.c.b16 %v4872, %v4866
    %v5317 = vpack.c.b16 %v4873, %v4867
    %v5318 = vpack.c.b16 %v4874, %v4868
    %v5319 = vpack.c.b16 %v4881, %v4875
    %v5320 = vpack.c.b16 %v4882, %v4876
    %v5321 = vpack.c.b16 %v4883, %v4877
    %v5322 = vpack.c.b16 %v4884, %v4878
    %v5323 = vpack.c.b16 %v4885, %v4879
    %v5324 = vpack.c.b16 %v4886, %v4880
    %v5325 = vpack.c.b16 %v4893, %v4887
    %v5326 = vpack.c.b16 %v4894, %v4888
    %v5327 = vpack.c.b16 %v4895, %v4889
    %v5328 = vpack.c.b16 %v4896, %v4890
    %v5329 = vpack.c.b16 %v4897, %v4891
    %v5330 = vpack.c.b16 %v4898, %v4892
    %v5331 = vpack.c.b16 %v4905, %v4899
    %v5332 = vpack.c.b16 %v4906, %v4900
    %v5333 = vpack.c.b16 %v4907, %v4901
    %v5334 = vpack.c.b16 %v4908, %v4902
    %v5335 = vpack.c.b16 %v4909, %v4903
    %v5336 = vpack.c.b16 %v4910, %v4904
    %v5337 = vpack.c.b16 %v4917, %v4911
    %v5338 = vpack.c.b16 %v4918, %v4912
    %v5339 = vpack.c.b16 %v4919, %v4913
    %v5340 = vpack.c.b16 %v4920, %v4914
    %v5341 = vpack.c.b16 %v4921, %v4915
    %v5342 = vpack.c.b16 %v4922, %v4916
    %v5343 = vpack.c.b16 %v4929, %v4923
    %v5344 = vpack.c.b16 %v4930, %v4924
    %v5345 = vpack.c.b16 %v4931, %v4925
    %v5346 = vpack.c.b16 %v4932, %v4926
    %v5347 = vpack.c.b16 %v4933, %v4927
    %v5348 = vpack.c.b16 %v4934, %v4928
    %v5349 = vpack.c.b16 %v4941, %v4935
    %v5350 = vpack.c.b16 %v4942, %v4936
    %v5351 = vpack.c.b16 %v4943, %v4937
    %v5352 = vpack.c.b16 %v4944, %v4938
    %v5353 = vpack.c.b16 %v4945, %v4939
    %v5354 = vpack.c.b16 %v4946, %v4940
    %v5355 = vpack.c.b16 %v4953, %v4947
    %v5356 = vpack.c.b16 %v4954, %v4948
    %v5357 = vpack.c.b16 %v4955, %v4949
    %v5358 = vpack.c.b16 %v4956, %v4950
    %v5359 = vpack.c.b16 %v4957, %v4951
    %v5360 = vpack.c.b16 %v4958, %v4952
    %v5361 = vpack.c.b16 %v4965, %v4959
    %v5362 = vpack.c.b16 %v4966, %v4960
    %v5363 = vpack.c.b16 %v4967, %v4961
    %v5364 = vpack.c.b16 %v4968, %v4962
    %v5365 = vpack.c.b16 %v4969, %v4963
    %v5366 = vpack.c.b16 %v4970, %v4964
    %v5367 = vpack.c.b16 %v4977, %v4971
    %v5368 = vpack.c.b16 %v4978, %v4972
    %v5369 = vpack.c.b16 %v4979, %v4973
    %v5370 = vpack.c.b16 %v4980, %v4974
    %v5371 = vpack.c.b16 %v4981, %v4975
    %v5372 = vpack.c.b16 %v4982, %v4976
    %v5373 = vpack.c.b16 %v4989, %v4983
    %v5374 = vpack.c.b16 %v4990, %v4984
    %v5375 = vpack.c.b16 %v4991, %v4985
    %v5376 = vpack.c.b16 %v4992, %v4986
    %v5377 = vpack.c.b16 %v4993, %v4987
    %v5378 = vpack.c.b16 %v4994, %v4988
    %5763 = vmatprep.subr.bf16.mxu0 %v4996
    %5764 = vmatpush1.bf16.msra.mxu0 %v4995
    %5765 = vmatprep.subr.bf16.mxu0 %v5002
    %5766 = vmatpush1.bf16.msra.mxu0 %v5001
    %5767 = vmatprep.subr.bf16.mxu0 %v5008
    %5768 = vmatpush1.bf16.msra.mxu0 %v5007
    %5769 = vmatprep.subr.bf16.mxu0 %v5014
    %5770 = vmatpush1.bf16.msra.mxu0 %v5013
    %5771 = vmatprep.subr.bf16.mxu0 %v5020
    %5772 = vmatpush1.bf16.msra.mxu0 %v5019
    %5773 = vmatprep.subr.bf16.mxu0 %v5026
    %5774 = vmatpush1.bf16.msra.mxu0 %v5025
    %5775 = vmatprep.subr.bf16.mxu0 %v5032
    %5776 = vmatpush1.bf16.msra.mxu0 %v5031
    %5777 = vmatprep.subr.bf16.mxu0 %v5038
    %5778 = vmatpush1.bf16.msra.mxu0 %v5037
    %5779 = vmatprep.subr.bf16.mxu0 %v5044
    %5780 = vmatpush1.bf16.msra.mxu0 %v5043
    %5781 = vmatprep.subr.bf16.mxu0 %v5050
    %5782 = vmatpush1.bf16.msra.mxu0 %v5049
    %5783 = vmatprep.subr.bf16.mxu0 %v5056
    %5784 = vmatpush1.bf16.msra.mxu0 %v5055
    %5785 = vmatprep.subr.bf16.mxu0 %v5062
    %5786 = vmatpush1.bf16.msra.mxu0 %v5061
    %5787 = vmatprep.subr.bf16.mxu0 %v5068
    %5788 = vmatpush1.bf16.msra.mxu0 %v5067
    %5789 = vmatprep.subr.bf16.mxu0 %v5074
    %5790 = vmatpush1.bf16.msra.mxu0 %v5073
    %5791 = vmatprep.subr.bf16.mxu0 %v5080
    %5792 = vmatpush1.bf16.msra.mxu0 %v5079
    %5793 = vmatprep.subr.bf16.mxu0 %v5086
    %5794 = vmatpush1.bf16.msra.mxu0 %v5085
    %5795 = vmatprep.mubr.bf16.mxu0 %v3420
    %5796 = vmatmul.mubr.bf16.gmra.mrb[0].mxu0 %v3419
    %v5797 = vpop.f32.mrb[0].mxu0
    %v5798 = vadd.f32 %v3816, %v5797
    %v5799 = vpop.f32.mrb[0].mxu0
    %v5800 = vadd.f32 %v3820, %v5799
    %v5801 = vpop.f32.mrb[0].mxu0
    %v5802 = vpop.f32.mrb[0].mxu0
    %5803 = vdwg.mxu0
    %5804 = vmatprep.subr.bf16.mxu0 %v5092
    %5805 = vmatpush1.bf16.msra.mxu0 %v5091
    %5806 = vmatprep.subr.bf16.mxu0 %v5098
    %5807 = vmatpush1.bf16.msra.mxu0 %v5097
    %5808 = vmatprep.subr.bf16.mxu0 %v5104
    %5809 = vmatpush1.bf16.msra.mxu0 %v5103
    %5810 = vmatprep.subr.bf16.mxu0 %v5110
    %5811 = vmatpush1.bf16.msra.mxu0 %v5109
    %5812 = vmatprep.subr.bf16.mxu0 %v5116
    %5813 = vmatpush1.bf16.msra.mxu0 %v5115
    %5814 = vmatprep.subr.bf16.mxu0 %v5122
    %5815 = vmatpush1.bf16.msra.mxu0 %v5121
    %5816 = vmatprep.subr.bf16.mxu0 %v5128
    %5817 = vmatpush1.bf16.msra.mxu0 %v5127
    %5818 = vmatprep.subr.bf16.mxu0 %v5134
    %5819 = vmatpush1.bf16.msra.mxu0 %v5133
    %5820 = vmatprep.subr.bf16.mxu0 %v5140
    %5821 = vmatpush1.bf16.msra.mxu0 %v5139
    %5822 = vmatprep.subr.bf16.mxu0 %v5146
    %5823 = vmatpush1.bf16.msra.mxu0 %v5145
    %5824 = vmatprep.subr.bf16.mxu0 %v5152
    %5825 = vmatpush1.bf16.msra.mxu0 %v5151
    %5826 = vmatprep.subr.bf16.mxu0 %v5158
    %5827 = vmatpush1.bf16.msra.mxu0 %v5157
    %5828 = vmatprep.subr.bf16.mxu0 %v5164
    %5829 = vmatpush1.bf16.msra.mxu0 %v5163
    %5830 = vmatprep.subr.bf16.mxu0 %v5170
    %5831 = vmatpush1.bf16.msra.mxu0 %v5169
    %5832 = vmatprep.subr.bf16.mxu0 %v5176
    %5833 = vmatpush1.bf16.msra.mxu0 %v5175
    %5834 = vmatprep.subr.bf16.mxu0 %v5182
    %5835 = vmatpush1.bf16.msra.mxu0 %v5181
    %5836 = vmatprep.mubr.bf16.mxu0 %v3422
    %5837 = vmatmul.mubr.bf16.gmra.mrb[0].mxu0 %v3421
    %v5838 = vpop.f32.mrb[0].mxu0
    %v5839 = vadd.f32 %v5798, %v5838
    %v5840 = vpop.f32.mrb[0].mxu0
    %v5841 = vadd.f32 %v5800, %v5840
    %v5842 = vpop.f32.mrb[0].mxu0
    %v5843 = vpop.f32.mrb[0].mxu0
    %5844 = vdwg.mxu0
    %5845 = vmatprep.subr.bf16.mxu0 %v5188
    %5846 = vmatpush1.bf16.msra.mxu0 %v5187
    %5847 = vmatprep.subr.bf16.mxu0 %v5194
    %5848 = vmatpush1.bf16.msra.mxu0 %v5193
    %5849 = vmatprep.subr.bf16.mxu0 %v5200
    %5850 = vmatpush1.bf16.msra.mxu0 %v5199
    %5851 = vmatprep.subr.bf16.mxu0 %v5206
    %5852 = vmatpush1.bf16.msra.mxu0 %v5205
    %5853 = vmatprep.subr.bf16.mxu0 %v5212
    %5854 = vmatpush1.bf16.msra.mxu0 %v5211
    %5855 = vmatprep.subr.bf16.mxu0 %v5218
    %5856 = vmatpush1.bf16.msra.mxu0 %v5217
    %5857 = vmatprep.subr.bf16.mxu0 %v5224
    %5858 = vmatpush1.bf16.msra.mxu0 %v5223
    %5859 = vmatprep.subr.bf16.mxu0 %v5230
    %5860 = vmatpush1.bf16.msra.mxu0 %v5229
    %5861 = vmatprep.subr.bf16.mxu0 %v5236
    %5862 = vmatpush1.bf16.msra.mxu0 %v5235
    %5863 = vmatprep.subr.bf16.mxu0 %v5242
    %5864 = vmatpush1.bf16.msra.mxu0 %v5241
    %5865 = vmatprep.subr.bf16.mxu0 %v5248
    %5866 = vmatpush1.bf16.msra.mxu0 %v5247
    %5867 = vmatprep.subr.bf16.mxu0 %v5254
    %5868 = vmatpush1.bf16.msra.mxu0 %v5253
    %5869 = vmatprep.subr.bf16.mxu0 %v5260
    %5870 = vmatpush1.bf16.msra.mxu0 %v5259
    %5871 = vmatprep.subr.bf16.mxu0 %v5266
    %5872 = vmatpush1.bf16.msra.mxu0 %v5265
    %5873 = vmatprep.subr.bf16.mxu0 %v5272
    %5874 = vmatpush1.bf16.msra.mxu0 %v5271
    %5875 = vmatprep.subr.bf16.mxu0 %v5278
    %5876 = vmatpush1.bf16.msra.mxu0 %v5277
    %5877 = vmatprep.mubr.bf16.mxu0 %v3424
    %5878 = vmatmul.mubr.bf16.gmra.mrb[0].mxu0 %v3423
    %v5879 = vpop.f32.mrb[0].mxu0
    %v5880 = vadd.f32 %v5839, %v5879
    %v5881 = vpop.f32.mrb[0].mxu0
    %v5882 = vadd.f32 %v5841, %v5881
    %v5883 = vpop.f32.mrb[0].mxu0
    %v5884 = vpop.f32.mrb[0].mxu0
    %5885 = vdwg.mxu0
    %5886 = vmatprep.subr.bf16.mxu0 %v5284
    %5887 = vmatpush1.bf16.msra.mxu0 %v5283
    %5888 = vmatprep.subr.bf16.mxu0 %v5290
    %5889 = vmatpush1.bf16.msra.mxu0 %v5289
    %5890 = vmatprep.subr.bf16.mxu0 %v5296
    %5891 = vmatpush1.bf16.msra.mxu0 %v5295
    %5892 = vmatprep.subr.bf16.mxu0 %v5302
    %5893 = vmatpush1.bf16.msra.mxu0 %v5301
    %5894 = vmatprep.subr.bf16.mxu0 %v5308
    %5895 = vmatpush1.bf16.msra.mxu0 %v5307
    %5896 = vmatprep.subr.bf16.mxu0 %v5314
    %5897 = vmatpush1.bf16.msra.mxu0 %v5313
    %5898 = vmatprep.subr.bf16.mxu0 %v5320
    %5899 = vmatpush1.bf16.msra.mxu0 %v5319
    %5900 = vmatprep.subr.bf16.mxu0 %v5326
    %5901 = vmatpush1.bf16.msra.mxu0 %v5325
    %5902 = vmatprep.subr.bf16.mxu0 %v5332
    %5903 = vmatpush1.bf16.msra.mxu0 %v5331
    %5904 = vmatprep.subr.bf16.mxu0 %v5338
    %5905 = vmatpush1.bf16.msra.mxu0 %v5337
    %5906 = vmatprep.subr.bf16.mxu0 %v5344
    %5907 = vmatpush1.bf16.msra.mxu0 %v5343
    %5908 = vmatprep.subr.bf16.mxu0 %v5350
    %5909 = vmatpush1.bf16.msra.mxu0 %v5349
    %5910 = vmatprep.subr.bf16.mxu0 %v5356
    %5911 = vmatpush1.bf16.msra.mxu0 %v5355
    %5912 = vmatprep.subr.bf16.mxu0 %v5362
    %5913 = vmatpush1.bf16.msra.mxu0 %v5361
    %5914 = vmatprep.subr.bf16.mxu0 %v5368
    %5915 = vmatpush1.bf16.msra.mxu0 %v5367
    %5916 = vmatprep.subr.bf16.mxu0 %v5374
    %5917 = vmatpush1.bf16.msra.mxu0 %v5373
    %5918 = vmatprep.mubr.bf16.mxu0 %v3426
    %5919 = vmatmul.mubr.bf16.gmra.mrb[0].mxu0 %v3425
    %v5920 = vpop.f32.mrb[0].mxu0
    %v5921 = vadd.f32 %v5880, %v5920
    %v5922 = vpop.f32.mrb[0].mxu0
    %v5923 = vadd.f32 %v5882, %v5922
    %v5924 = vpop.f32.mrb[0].mxu0
    %v5925 = vpop.f32.mrb[0].mxu0
    %5926 = vdwg.mxu0
    %5927 = vmatprep.subr.bf16.mxu0 %v4998
    %5928 = vmatpush1.bf16.msra.mxu0 %v4997
    %5929 = vmatprep.subr.bf16.mxu0 %v5004
    %5930 = vmatpush1.bf16.msra.mxu0 %v5003
    %5931 = vmatprep.subr.bf16.mxu0 %v5010
    %5932 = vmatpush1.bf16.msra.mxu0 %v5009
    %5933 = vmatprep.subr.bf16.mxu0 %v5016
    %5934 = vmatpush1.bf16.msra.mxu0 %v5015
    %5935 = vmatprep.subr.bf16.mxu0 %v5022
    %5936 = vmatpush1.bf16.msra.mxu0 %v5021
    %5937 = vmatprep.subr.bf16.mxu0 %v5028
    %5938 = vmatpush1.bf16.msra.mxu0 %v5027
    %5939 = vmatprep.subr.bf16.mxu0 %v5034
    %5940 = vmatpush1.bf16.msra.mxu0 %v5033
    %5941 = vmatprep.subr.bf16.mxu0 %v5040
    %5942 = vmatpush1.bf16.msra.mxu0 %v5039
    %5943 = vmatprep.subr.bf16.mxu0 %v5046
    %5944 = vmatpush1.bf16.msra.mxu0 %v5045
    %5945 = vmatprep.subr.bf16.mxu0 %v5052
    %5946 = vmatpush1.bf16.msra.mxu0 %v5051
    %5947 = vmatprep.subr.bf16.mxu0 %v5058
    %5948 = vmatpush1.bf16.msra.mxu0 %v5057
    %5949 = vmatprep.subr.bf16.mxu0 %v5064
    %5950 = vmatpush1.bf16.msra.mxu0 %v5063
    %5951 = vmatprep.subr.bf16.mxu0 %v5070
    %5952 = vmatpush1.bf16.msra.mxu0 %v5069
    %5953 = vmatprep.subr.bf16.mxu0 %v5076
    %5954 = vmatpush1.bf16.msra.mxu0 %v5075
    %5955 = vmatprep.subr.bf16.mxu0 %v5082
    %5956 = vmatpush1.bf16.msra.mxu0 %v5081
    %5957 = vmatprep.subr.bf16.mxu0 %v5088
    %5958 = vmatpush1.bf16.msra.mxu0 %v5087
    %5959 = vmatprep.mubr.bf16.mxu0 %v3420
    %5960 = vmatmul.mubr.bf16.gmra.mrb[0].mxu0 %v3419
    %v5961 = vpop.f32.mrb[0].mxu0
    %v5962 = vadd.f32 %v3824, %v5961
    %v5963 = vpop.f32.mrb[0].mxu0
    %v5964 = vadd.f32 %v3828, %v5963
    %v5965 = vpop.f32.mrb[0].mxu0
    %v5966 = vpop.f32.mrb[0].mxu0
    %5967 = vdwg.mxu0
    %5968 = vmatprep.subr.bf16.mxu0 %v5094
    %5969 = vmatpush1.bf16.msra.mxu0 %v5093
    %5970 = vmatprep.subr.bf16.mxu0 %v5100
    %5971 = vmatpush1.bf16.msra.mxu0 %v5099
    %5972 = vmatprep.subr.bf16.mxu0 %v5106
    %5973 = vmatpush1.bf16.msra.mxu0 %v5105
    %5974 = vmatprep.subr.bf16.mxu0 %v5112
    %5975 = vmatpush1.bf16.msra.mxu0 %v5111
    %5976 = vmatprep.subr.bf16.mxu0 %v5118
    %5977 = vmatpush1.bf16.msra.mxu0 %v5117
    %5978 = vmatprep.subr.bf16.mxu0 %v5124
    %5979 = vmatpush1.bf16.msra.mxu0 %v5123
    %5980 = vmatprep.subr.bf16.mxu0 %v5130
    %5981 = vmatpush1.bf16.msra.mxu0 %v5129
    %5982 = vmatprep.subr.bf16.mxu0 %v5136
    %5983 = vmatpush1.bf16.msra.mxu0 %v5135
    %5984 = vmatprep.subr.bf16.mxu0 %v5142
    %5985 = vmatpush1.bf16.msra.mxu0 %v5141
    %5986 = vmatprep.subr.bf16.mxu0 %v5148
    %5987 = vmatpush1.bf16.msra.mxu0 %v5147
    %5988 = vmatprep.subr.bf16.mxu0 %v5154
    %5989 = vmatpush1.bf16.msra.mxu0 %v5153
    %5990 = vmatprep.subr.bf16.mxu0 %v5160
    %5991 = vmatpush1.bf16.msra.mxu0 %v5159
    %5992 = vmatprep.subr.bf16.mxu0 %v5166
    %5993 = vmatpush1.bf16.msra.mxu0 %v5165
    %5994 = vmatprep.subr.bf16.mxu0 %v5172
    %5995 = vmatpush1.bf16.msra.mxu0 %v5171
    %5996 = vmatprep.subr.bf16.mxu0 %v5178
    %5997 = vmatpush1.bf16.msra.mxu0 %v5177
    %5998 = vmatprep.subr.bf16.mxu0 %v5184
    %5999 = vmatpush1.bf16.msra.mxu0 %v5183
    %6000 = vmatprep.mubr.bf16.mxu0 %v3422
    %6001 = vmatmul.mubr.bf16.gmra.mrb[0].mxu0 %v3421
    %v6002 = vpop.f32.mrb[0].mxu0
    %v6003 = vadd.f32 %v5962, %v6002
    %v6004 = vpop.f32.mrb[0].mxu0
    %v6005 = vadd.f32 %v5964, %v6004
    %v6006 = vpop.f32.mrb[0].mxu0
    %v6007 = vpop.f32.mrb[0].mxu0
    %6008 = vdwg.mxu0
    %6009 = vmatprep.subr.bf16.mxu0 %v5190
    %6010 = vmatpush1.bf16.msra.mxu0 %v5189
    %6011 = vmatprep.subr.bf16.mxu0 %v5196
    %6012 = vmatpush1.bf16.msra.mxu0 %v5195
    %6013 = vmatprep.subr.bf16.mxu0 %v5202
    %6014 = vmatpush1.bf16.msra.mxu0 %v5201
    %6015 = vmatprep.subr.bf16.mxu0 %v5208
    %6016 = vmatpush1.bf16.msra.mxu0 %v5207
    %6017 = vmatprep.subr.bf16.mxu0 %v5214
    %6018 = vmatpush1.bf16.msra.mxu0 %v5213
    %6019 = vmatprep.subr.bf16.mxu0 %v5220
    %6020 = vmatpush1.bf16.msra.mxu0 %v5219
    %6021 = vmatprep.subr.bf16.mxu0 %v5226
    %6022 = vmatpush1.bf16.msra.mxu0 %v5225
    %6023 = vmatprep.subr.bf16.mxu0 %v5232
    %6024 = vmatpush1.bf16.msra.mxu0 %v5231
    %6025 = vmatprep.subr.bf16.mxu0 %v5238
    %6026 = vmatpush1.bf16.msra.mxu0 %v5237
    %6027 = vmatprep.subr.bf16.mxu0 %v5244
    %6028 = vmatpush1.bf16.msra.mxu0 %v5243
    %6029 = vmatprep.subr.bf16.mxu0 %v5250
    %6030 = vmatpush1.bf16.msra.mxu0 %v5249
    %6031 = vmatprep.subr.bf16.mxu0 %v5256
    %6032 = vmatpush1.bf16.msra.mxu0 %v5255
    %6033 = vmatprep.subr.bf16.mxu0 %v5262
    %6034 = vmatpush1.bf16.msra.mxu0 %v5261
    %6035 = vmatprep.subr.bf16.mxu0 %v5268
    %6036 = vmatpush1.bf16.msra.mxu0 %v5267
    %6037 = vmatprep.subr.bf16.mxu0 %v5274
    %6038 = vmatpush1.bf16.msra.mxu0 %v5273
    %6039 = vmatprep.subr.bf16.mxu0 %v5280
    %6040 = vmatpush1.bf16.msra.mxu0 %v5279
    %6041 = vmatprep.mubr.bf16.mxu0 %v3424
    %6042 = vmatmul.mubr.bf16.gmra.mrb[0].mxu0 %v3423
    %v6043 = vpop.f32.mrb[0].mxu0
    %v6044 = vadd.f32 %v6003, %v6043
    %v6045 = vpop.f32.mrb[0].mxu0
    %v6046 = vadd.f32 %v6005, %v6045
    %v6047 = vpop.f32.mrb[0].mxu0
    %v6048 = vpop.f32.mrb[0].mxu0
    %6049 = vdwg.mxu0
    %6050 = vmatprep.subr.bf16.mxu0 %v5286
    %6051 = vmatpush1.bf16.msra.mxu0 %v5285
    %6052 = vmatprep.subr.bf16.mxu0 %v5292
    %6053 = vmatpush1.bf16.msra.mxu0 %v5291
    %6054 = vmatprep.subr.bf16.mxu0 %v5298
    %6055 = vmatpush1.bf16.msra.mxu0 %v5297
    %6056 = vmatprep.subr.bf16.mxu0 %v5304
    %6057 = vmatpush1.bf16.msra.mxu0 %v5303
    %6058 = vmatprep.subr.bf16.mxu0 %v5310
    %6059 = vmatpush1.bf16.msra.mxu0 %v5309
    %6060 = vmatprep.subr.bf16.mxu0 %v5316
    %6061 = vmatpush1.bf16.msra.mxu0 %v5315
    %6062 = vmatprep.subr.bf16.mxu0 %v5322
    %6063 = vmatpush1.bf16.msra.mxu0 %v5321
    %6064 = vmatprep.subr.bf16.mxu0 %v5328
    %6065 = vmatpush1.bf16.msra.mxu0 %v5327
    %6066 = vmatprep.subr.bf16.mxu0 %v5334
    %6067 = vmatpush1.bf16.msra.mxu0 %v5333
    %6068 = vmatprep.subr.bf16.mxu0 %v5340
    %6069 = vmatpush1.bf16.msra.mxu0 %v5339
    %6070 = vmatprep.subr.bf16.mxu0 %v5346
    %6071 = vmatpush1.bf16.msra.mxu0 %v5345
    %6072 = vmatprep.subr.bf16.mxu0 %v5352
    %6073 = vmatpush1.bf16.msra.mxu0 %v5351
    %6074 = vmatprep.subr.bf16.mxu0 %v5358
    %6075 = vmatpush1.bf16.msra.mxu0 %v5357
    %6076 = vmatprep.subr.bf16.mxu0 %v5364
    %6077 = vmatpush1.bf16.msra.mxu0 %v5363
    %6078 = vmatprep.subr.bf16.mxu0 %v5370
    %6079 = vmatpush1.bf16.msra.mxu0 %v5369
    %6080 = vmatprep.subr.bf16.mxu0 %v5376
    %6081 = vmatpush1.bf16.msra.mxu0 %v5375
    %6082 = vmatprep.mubr.bf16.mxu0 %v3426
    %6083 = vmatmul.mubr.bf16.gmra.mrb[0].mxu0 %v3425
    %v6084 = vpop.f32.mrb[0].mxu0
    %v6085 = vadd.f32 %v6044, %v6084
    %v6086 = vpop.f32.mrb[0].mxu0
    %v6087 = vadd.f32 %v6046, %v6086
    %v6088 = vpop.f32.mrb[0].mxu0
    %v6089 = vpop.f32.mrb[0].mxu0
    %6090 = vdwg.mxu0
    %6091 = vmatprep.subr.bf16.mxu0 %v5000
    %6092 = vmatpush1.bf16.msra.mxu0 %v4999
    %6093 = vmatprep.subr.bf16.mxu0 %v5006
    %6094 = vmatpush1.bf16.msra.mxu0 %v5005
    %6095 = vmatprep.subr.bf16.mxu0 %v5012
    %6096 = vmatpush1.bf16.msra.mxu0 %v5011
    %6097 = vmatprep.subr.bf16.mxu0 %v5018
    %6098 = vmatpush1.bf16.msra.mxu0 %v5017
    %6099 = vmatprep.subr.bf16.mxu0 %v5024
    %6100 = vmatpush1.bf16.msra.mxu0 %v5023
    %6101 = vmatprep.subr.bf16.mxu0 %v5030
    %6102 = vmatpush1.bf16.msra.mxu0 %v5029
    %6103 = vmatprep.subr.bf16.mxu0 %v5036
    %6104 = vmatpush1.bf16.msra.mxu0 %v5035
    %6105 = vmatprep.subr.bf16.mxu0 %v5042
    %6106 = vmatpush1.bf16.msra.mxu0 %v5041
    %6107 = vmatprep.subr.bf16.mxu0 %v5048
    %6108 = vmatpush1.bf16.msra.mxu0 %v5047
    %6109 = vmatprep.subr.bf16.mxu0 %v5054
    %6110 = vmatpush1.bf16.msra.mxu0 %v5053
    %6111 = vmatprep.subr.bf16.mxu0 %v5060
    %6112 = vmatpush1.bf16.msra.mxu0 %v5059
    %6113 = vmatprep.subr.bf16.mxu0 %v5066
    %6114 = vmatpush1.bf16.msra.mxu0 %v5065
    %6115 = vmatprep.subr.bf16.mxu0 %v5072
    %6116 = vmatpush1.bf16.msra.mxu0 %v5071
    %6117 = vmatprep.subr.bf16.mxu0 %v5078
    %6118 = vmatpush1.bf16.msra.mxu0 %v5077
    %6119 = vmatprep.subr.bf16.mxu0 %v5084
    %6120 = vmatpush1.bf16.msra.mxu0 %v5083
    %6121 = vmatprep.subr.bf16.mxu0 %v5090
    %6122 = vmatpush1.bf16.msra.mxu0 %v5089
    %6123 = vmatprep.mubr.bf16.mxu0 %v3420
    %6124 = vmatmul.mubr.bf16.gmra.mrb[0].mxu0 %v3419
    %v6125 = vpop.f32.mrb[0].mxu0
    %v6126 = vadd.f32 %v3832, %v6125
    %v6127 = vpop.f32.mrb[0].mxu0
    %v6128 = vadd.f32 %v3836, %v6127
    %v6129 = vpop.f32.mrb[0].mxu0
    %v6130 = vpop.f32.mrb[0].mxu0
    %6131 = vdwg.mxu0
    %6132 = vmatprep.subr.bf16.mxu0 %v5096
    %6133 = vmatpush1.bf16.msra.mxu0 %v5095
    %6134 = vmatprep.subr.bf16.mxu0 %v5102
    %6135 = vmatpush1.bf16.msra.mxu0 %v5101
    %6136 = vmatprep.subr.bf16.mxu0 %v5108
    %6137 = vmatpush1.bf16.msra.mxu0 %v5107
    %6138 = vmatprep.subr.bf16.mxu0 %v5114
    %6139 = vmatpush1.bf16.msra.mxu0 %v5113
    %6140 = vmatprep.subr.bf16.mxu0 %v5120
    %6141 = vmatpush1.bf16.msra.mxu0 %v5119
    %6142 = vmatprep.subr.bf16.mxu0 %v5126
    %6143 = vmatpush1.bf16.msra.mxu0 %v5125
    %6144 = vmatprep.subr.bf16.mxu0 %v5132
    %6145 = vmatpush1.bf16.msra.mxu0 %v5131
    %6146 = vmatprep.subr.bf16.mxu0 %v5138
    %6147 = vmatpush1.bf16.msra.mxu0 %v5137
    %6148 = vmatprep.subr.bf16.mxu0 %v5144
    %6149 = vmatpush1.bf16.msra.mxu0 %v5143
    %6150 = vmatprep.subr.bf16.mxu0 %v5150
    %6151 = vmatpush1.bf16.msra.mxu0 %v5149
    %6152 = vmatprep.subr.bf16.mxu0 %v5156
    %6153 = vmatpush1.bf16.msra.mxu0 %v5155
    %6154 = vmatprep.subr.bf16.mxu0 %v5162
    %6155 = vmatpush1.bf16.msra.mxu0 %v5161
    %6156 = vmatprep.subr.bf16.mxu0 %v5168
    %6157 = vmatpush1.bf16.msra.mxu0 %v5167
    %6158 = vmatprep.subr.bf16.mxu0 %v5174
    %6159 = vmatpush1.bf16.msra.mxu0 %v5173
    %6160 = vmatprep.subr.bf16.mxu0 %v5180
    %6161 = vmatpush1.bf16.msra.mxu0 %v5179
    %6162 = vmatprep.subr.bf16.mxu0 %v5186
    %6163 = vmatpush1.bf16.msra.mxu0 %v5185
    %6164 = vmatprep.mubr.bf16.mxu0 %v3422
    %6165 = vmatmul.mubr.bf16.gmra.mrb[0].mxu0 %v3421
    %v6166 = vpop.f32.mrb[0].mxu0
    %v6167 = vadd.f32 %v6126, %v6166
    %v6168 = vpop.f32.mrb[0].mxu0
    %v6169 = vadd.f32 %v6128, %v6168
    %v6170 = vpop.f32.mrb[0].mxu0
    %v6171 = vpop.f32.mrb[0].mxu0
    %6172 = vdwg.mxu0
    %6173 = vmatprep.subr.bf16.mxu0 %v5192
    %6174 = vmatpush1.bf16.msra.mxu0 %v5191
    %6175 = vmatprep.subr.bf16.mxu0 %v5198
    %6176 = vmatpush1.bf16.msra.mxu0 %v5197
    %6177 = vmatprep.subr.bf16.mxu0 %v5204
    %6178 = vmatpush1.bf16.msra.mxu0 %v5203
    %6179 = vmatprep.subr.bf16.mxu0 %v5210
    %6180 = vmatpush1.bf16.msra.mxu0 %v5209
    %6181 = vmatprep.subr.bf16.mxu0 %v5216
    %6182 = vmatpush1.bf16.msra.mxu0 %v5215
    %6183 = vmatprep.subr.bf16.mxu0 %v5222
    %6184 = vmatpush1.bf16.msra.mxu0 %v5221
    %6185 = vmatprep.subr.bf16.mxu0 %v5228
    %6186 = vmatpush1.bf16.msra.mxu0 %v5227
    %6187 = vmatprep.subr.bf16.mxu0 %v5234
    %6188 = vmatpush1.bf16.msra.mxu0 %v5233
    %6189 = vmatprep.subr.bf16.mxu0 %v5240
    %6190 = vmatpush1.bf16.msra.mxu0 %v5239
    %6191 = vmatprep.subr.bf16.mxu0 %v5246
    %6192 = vmatpush1.bf16.msra.mxu0 %v5245
    %6193 = vmatprep.subr.bf16.mxu0 %v5252
    %6194 = vmatpush1.bf16.msra.mxu0 %v5251
    %6195 = vmatprep.subr.bf16.mxu0 %v5258
    %6196 = vmatpush1.bf16.msra.mxu0 %v5257
    %6197 = vmatprep.subr.bf16.mxu0 %v5264
    %6198 = vmatpush1.bf16.msra.mxu0 %v5263
    %6199 = vmatprep.subr.bf16.mxu0 %v5270
    %6200 = vmatpush1.bf16.msra.mxu0 %v5269
    %6201 = vmatprep.subr.bf16.mxu0 %v5276
    %6202 = vmatpush1.bf16.msra.mxu0 %v5275
    %6203 = vmatprep.subr.bf16.mxu0 %v5282
    %6204 = vmatpush1.bf16.msra.mxu0 %v5281
    %6205 = vmatprep.mubr.bf16.mxu0 %v3424
    %6206 = vmatmul.mubr.bf16.gmra.mrb[0].mxu0 %v3423
    %v6207 = vpop.f32.mrb[0].mxu0
    %v6208 = vadd.f32 %v6167, %v6207
    %v6209 = vpop.f32.mrb[0].mxu0
    %v6210 = vadd.f32 %v6169, %v6209
    %v6211 = vpop.f32.mrb[0].mxu0
    %v6212 = vpop.f32.mrb[0].mxu0
    %6213 = vdwg.mxu0
    %6214 = vmatprep.subr.bf16.mxu0 %v5288
    %6215 = vmatpush1.bf16.msra.mxu0 %v5287
    %6216 = vmatprep.subr.bf16.mxu0 %v5294
    %6217 = vmatpush1.bf16.msra.mxu0 %v5293
    %6218 = vmatprep.subr.bf16.mxu0 %v5300
    %6219 = vmatpush1.bf16.msra.mxu0 %v5299
    %6220 = vmatprep.subr.bf16.mxu0 %v5306
    %6221 = vmatpush1.bf16.msra.mxu0 %v5305
    %6222 = vmatprep.subr.bf16.mxu0 %v5312
    %6223 = vmatpush1.bf16.msra.mxu0 %v5311
    %6224 = vmatprep.subr.bf16.mxu0 %v5318
    %6225 = vmatpush1.bf16.msra.mxu0 %v5317
    %6226 = vmatprep.subr.bf16.mxu0 %v5324
    %6227 = vmatpush1.bf16.msra.mxu0 %v5323
    %6228 = vmatprep.subr.bf16.mxu0 %v5330
    %6229 = vmatpush1.bf16.msra.mxu0 %v5329
    %6230 = vmatprep.subr.bf16.mxu0 %v5336
    %6231 = vmatpush1.bf16.msra.mxu0 %v5335
    %6232 = vmatprep.subr.bf16.mxu0 %v5342
    %6233 = vmatpush1.bf16.msra.mxu0 %v5341
    %6234 = vmatprep.subr.bf16.mxu0 %v5348
    %6235 = vmatpush1.bf16.msra.mxu0 %v5347
    %6236 = vmatprep.subr.bf16.mxu0 %v5354
    %6237 = vmatpush1.bf16.msra.mxu0 %v5353
    %6238 = vmatprep.subr.bf16.mxu0 %v5360
    %6239 = vmatpush1.bf16.msra.mxu0 %v5359
    %6240 = vmatprep.subr.bf16.mxu0 %v5366
    %6241 = vmatpush1.bf16.msra.mxu0 %v5365
    %6242 = vmatprep.subr.bf16.mxu0 %v5372
    %6243 = vmatpush1.bf16.msra.mxu0 %v5371
    %6244 = vmatprep.subr.bf16.mxu0 %v5378
    %6245 = vmatpush1.bf16.msra.mxu0 %v5377
    %6246 = vmatprep.mubr.bf16.mxu0 %v3426
    %6247 = vmatmul.mubr.bf16.gmra.mrb[0].mxu0 %v3425
    %v6248 = vpop.f32.mrb[0].mxu0
    %v6249 = vadd.f32 %v6208, %v6248
    %v6250 = vpop.f32.mrb[0].mxu0
    %v6251 = vadd.f32 %v6210, %v6250
    %v6252 = vpop.f32.mrb[0].mxu0
    %v6253 = vpop.f32.mrb[0].mxu0
    %6254 = vdwg.mxu0
    %v6255 = vtanh.pop %v5921
    %v6256 = vtanh.pop %v5923
    %v6257 = vtanh.pop %v6085
    %v6258 = vtanh.pop %v6087
    %v6259 = vtanh.pop %v6249
    %v6260 = vtanh.pop %v6251
    %6261 = vst [vmem:[#allocation29] sm:$0xff] %v6255
    %6262 = vst [vmem:[#allocation29 + $0x8] sm:$0xff] %v6256
    %6263 = vst [vmem:[#allocation29 + $0x10] sm:$0xff] %v6257
    %6264 = vst [vmem:[#allocation29 + $0x18] sm:$0xff] %v6258
    %6265 = vst [vmem:[#allocation29 + $0x20] sm:$0xff] %v6259
    %6266 = vst [vmem:[#allocation29 + $0x28] sm:$0xff] %v6260
    // Predicated region
    $region138: #{tpu_custom_call.1} parent=1 // pred_check
      _
    $region139: #{tpu_custom_call.1} parent=1 // pred_check_branch
      %6268 = sbr.rel (0) target = $region141
    $region140: #{tpu_custom_call.1} parent=1 // pred_region
      %s6270 = ssub.s32 768, 768
      %6271 = vsyncadd [#allocation4], %s6270
      %s6273 = sshll.u32 [#allocation29], 4
      %s6274 = int_to_ptr.vmem [resolvable:$true] %s6273
      %6276 = dma.vmem_to_hbm [thread:$0]  %s6274, 768, %s17, [#allocation4]
    $region141: #{tpu_custom_call.1} parent=1 // pred_fallthru
      _
    // Predicated region
    $region142: #{tpu_custom_call.1} parent=1 // pred_check
      _
    $region143: #{tpu_custom_call.1} parent=1 // pred_check_branch
      %6278 = sbr.rel (0) target = $region145
    $region144: #{tpu_custom_call.1} parent=1 // pred_region
      %6279 = dma.done [#allocation4], 768
    $region145: #{tpu_custom_call.1} parent=1 // pred_fallthru
      _
    %6280 = vsyncpa [#allocation3], 1
    %6281 = vsyncpa [#allocation6], 1
    %6282 = vsyncpa [#allocation9], 1
    %6283 = vsyncpa [#allocation12], 1
    %6284 = vsyncpa [#allocation15], 1
    %6285 = vsyncpa [#allocation18], 1
    %6286 = vsyncpa [#allocation21], 1
    %6287 = vsyncpa [#allocation24], 1
    %6288 = vsyncpa [#allocation27], 1
    %6289 = vsyncpa [#allocation4], 1

</llo_original>
